<compile_context>
chip_gen: v7x
topology: tpu7x:2x2x1
jax: 0.10.0
libtpu: 0.0.40
codegen_flags: <defaults>
</compile_context>

<pallas_src>
import functools
import math

import jax
import jax.numpy as jnp
from jax.experimental import pallas as pl
from jax.experimental.pallas import tpu as pltpu

KERNEL_SET = (2, 3, 6, 7)


# ----------------------------- Pallas kernels ------------------------------

def _graph_kernel(e1_ref, w1_ref, b1_ref, e2_ref, w2_ref, b2_ref, adj_ref, *, alpha):
    f32 = jnp.float32
    nv1 = jnp.tanh(alpha * (jnp.dot(e1_ref[...], w1_ref[...],
                                    preferred_element_type=f32) + b1_ref[...]))
    nv2 = jnp.tanh(alpha * (jnp.dot(e2_ref[...], w2_ref[...],
                                    preferred_element_type=f32) + b2_ref[...]))
    m = jnp.dot(nv1, nv2.T, preferred_element_type=f32)
    a = m - m.T                                   # nv1@nv2^T - nv2@nv1^T
    adj_ref[...] = jnp.maximum(jnp.tanh(alpha * a), 0.0)


def _encoder_kernel(x_ref, wemb_ref, bembm_ref, wst_ref, bst_ref,
                    wfg_ref, bfg_ref, q_ref, qb_ref, lnw_ref, lnb_ref,
                    *rest, L, rf, Nn, Cr, Cc, eps):
    # rest = (g_out_0 .. g_out_{L-1}, xcf_out, xc_scratch, col_scratch)
    g_refs = rest[:L]
    xcf_ref = rest[L]
    xc_s = rest[L + 1]
    col_s = rest[L + 2]
    f32 = jnp.float32
    NC = Nn * Cr        # residual lanes (node-major)
    NG = Nn * Cc        # conv lanes (node-major)

    xb = x_ref[0]                                                     # [rf, Nn*Din] (zero-padded)
    # bembm is the embedding bias already zeroed on the left-padded steps.
    emb = jnp.dot(xb, wemb_ref[...], preferred_element_type=f32) + bembm_ref[...]
    xc_s[...] = jnp.dot(emb, wst_ref[...], preferred_element_type=f32) + bst_ref[...]

    t_in = rf
    xc = None
    for i in range(L):
        t_out = t_in - 6
        # im2col over the 7-tap temporal window, all nodes at once (lane-aligned copies)
        for j in range(7):
            col_s[:t_out, j * NC:(j + 1) * NC] = xc_s[j:j + t_out, :]
        col = col_s[:t_out, :]                                        # [t_out, 7*NC]
        # filter | gate in one lane-dense matmul (node-block-diagonal packed weight)
        fg = jnp.dot(col, wfg_ref[i], preferred_element_type=f32) + bfg_ref[i]
        filt = jnp.tanh(fg[:, :NG])
        gate = 1.0 / (1.0 + jnp.exp(-fg[:, NG:]))
        g = filt * gate                                               # [t_out, NG]
        g_refs[i][0] = g                                              # needed later for skip convs
        # both-direction mixprop (all hops) + output MLP == one matmul with precomputed Q
        m = jnp.dot(g, q_ref[i], preferred_element_type=f32) + qb_ref[i]
        xc = m + xc_s[t_in - t_out:t_in, :]                           # residual (last t_out steps)
        # LayerNorm over all (C, N, T) elements of this batch sample
        cnt = float(t_out * NC)
        s1 = jnp.sum(xc, axis=1, keepdims=True)
        mu = jnp.sum(s1, axis=0, keepdims=True) * (1.0 / cnt)
        d = xc - mu
        v1 = jnp.sum(d * d, axis=1, keepdims=True)
        var = jnp.sum(v1, axis=0, keepdims=True) * (1.0 / cnt)
        xn = d * jax.lax.rsqrt(var + eps)
        xc = xn * lnw_ref[i][:t_out, :] + lnb_ref[i][:t_out, :]
        xc_s[:t_out, :] = xc
        t_in = t_out
    xcf_ref[0] = xc                                                   # [1, NC]


def _decode_loss_kernel(zin_ref, wsk_ref, bsk_ref, wfd_ref, bfd_ref, tgt_ref, xt_ref,
                        sl_ref, fl_ref, *, B, Nn, T):
    f32 = jnp.float32
    # summary (all skip convolutions folded into one matmul over the concatenated K axis)
    z = jnp.dot(zin_ref[...], wsk_ref[...], preferred_element_type=f32) + bsk_ref[...]
    # structure decode (inner product) + BCE-with-logits mean
    tgt = tgt_ref[...]
    acc = jnp.zeros((1, 1), f32)
    for b in range(B):
        zb = z[b * Nn:(b + 1) * Nn, :]
        r = jnp.dot(zb, zb.T, preferred_element_type=f32)
        bce = jnp.maximum(r, 0.0) - r * tgt + jnp.log(1.0 + jnp.exp(-jnp.abs(r)))
        acc = acc + jnp.sum(jnp.sum(bce, axis=1, keepdims=True), axis=0, keepdims=True)
    sl_ref[...] = acc * (1.0 / float(B * Nn * Nn))
    # feature decode (1x1 conv skip_channels -> horizon) + L1 mean
    fpred = jnp.dot(z, wfd_ref[...], preferred_element_type=f32) + bfd_ref[...]
    diff = jnp.abs(fpred - xt_ref[...])
    fsum = jnp.sum(jnp.sum(diff, axis=1, keepdims=True), axis=0, keepdims=True)
    fl_ref[...] = fsum * (1.0 / float(B * Nn * T))


# ----------------------------- weight packing (glue) ------------------------------

def _incep_packed(ws, bs, Cr, Cc, Ck, Nn, eyeN):
    """Pack a dilated_inception module into a node-block-diagonal matmul weight.
       Returns W [7*Nn*Cr, Nn*Cc] and bias row [Nn*Cc] for the im2col layout used in-kernel."""
    wc = jnp.zeros((7 * Cr, Cc), jnp.float32)
    for kidx, (kern, w) in enumerate(zip(KERNEL_SET, ws)):
        for j in range(kern):
            tap = (7 - kern) + j
            wc = wc.at[tap * Cr:(tap + 1) * Cr, kidx * Ck:(kidx + 1) * Ck].set(w[:, :, 0, j].T)
    wc = wc.reshape(7, Cr, Cc)
    big = jnp.einsum('nm,jic->jnimc', eyeN, wc).reshape(7 * Nn * Cr, Nn * Cc)
    brow = jnp.tile(jnp.concatenate([b for b in bs]), Nn)
    return big, brow


def _mixprop_q(madj, g1_w, g1_b, g2_w, g2_b, gdep, alpha, Nn, Cc, Cr, eyeN):
    """Collapse both mixprop directions (all hops) + their output MLPs into one
       [Nn*Cc, Nn*Cr] matrix acting on the node-major lane layout, plus a bias row."""
    def pstack(adj):
        an = adj + eyeN
        an = an / jnp.sum(an, axis=1, keepdims=True)
        ps = [eyeN]
        for _ in range(gdep):
            ps.append(alpha * eyeN + (1.0 - alpha) * (an @ ps[-1]))
        return jnp.stack(ps)                                   # [gdep+1, Nn, Nn]
    p1 = pstack(madj)
    p2 = pstack(madj.T)
    w1 = g1_w[:, :, 0, 0].T.reshape(gdep + 1, Cc, Cr)
    w2 = g2_w[:, :, 0, 0].T.reshape(gdep + 1, Cc, Cr)
    q = (jnp.einsum('ivw,ico->wcvo', p1, w1) +
         jnp.einsum('ivw,ico->wcvo', p2, w2)).reshape(Nn * Cc, Nn * Cr)
    qb = jnp.tile(g1_b + g2_b, Nn)[None, :]
    return q, qb


# ----------------------------- MTGNN forward ------------------------------

def mtgnn_forward(params, x, cfg):
    # x: [B, T, N, Din]  (same convention as the PyTorch forward input)
    B, T, Nn, Din = x.shape
    Cr = cfg["residual_channels"]
    Cc = cfg["conv_channels"]
    Cs = cfg["skip_channels"]
    L = cfg["layers"]
    rf = cfg["receptive_field"]
    gdep = cfg["gcn_depth"]
    palpha = float(cfg["propalpha"])
    alpha = float(cfg["tanhalpha"])
    hz = cfg["horizon"]
    Ck = Cc // len(KERNEL_SET)
    NC = Nn * Cr
    NG = Nn * Cc
    assert T <= rf and rf == 6 * L + 1   # TODO(synk): seq_length > receptive_field branch not implemented
    assert hz == T                       # required for the elementwise L1 feature loss (as in the reference)
    x = x.astype(jnp.float32)
    eyeN = jnp.eye(Nn, dtype=jnp.float32)

    # ---- graph constructor: fused kernel + top-k mask in JAX ----
    adj = pl.pallas_call(
        functools.partial(_graph_kernel, alpha=alpha),
        out_shape=jax.ShapeDtypeStruct((Nn, Nn), jnp.float32),
    )(params["gc_emb1"], params["gc_lin1_w"].T, params["gc_lin1_b"][None, :],
      params["gc_emb2"], params["gc_lin2_w"].T, params["gc_lin2_b"][None, :])
    k = cfg["subgraph_size"]
    _, idxs = jax.lax.top_k(adj, k)
    mask = jnp.zeros((Nn, Nn), jnp.float32).at[jnp.arange(Nn)[:, None], idxs].set(1.0)
    madj = adj * mask                        # adp (s_mask == 1 since mask_s == 0)

    # ---- pack weights for the fused encoder (glue) ----
    wemb_m = params["emb_w"].T                                            # [Din, Cr]
    wemb_big = jnp.kron(eyeN, wemb_m)                                     # [Nn*Din, NC]
    # embedding bias, zeroed on the left-padded time steps (replaces a separate mask input)
    tmask = jnp.concatenate([jnp.zeros((rf - T, 1), jnp.float32),
                             jnp.ones((T, 1), jnp.float32)], axis=0)      # [rf, 1]
    bembm = tmask * jnp.tile(params["emb_b"], Nn)[None, :]                # [rf, NC]
    wst_big = jnp.kron(eyeN, params["start_w"][:, :, 0, 0].T)             # [NC, NC]
    bst_row = jnp.tile(params["start_b"], Nn)[None, :]

    t_outs = [rf - 6 * (i + 1) for i in range(L)]
    tmax = t_outs[0]
    wfg_list, bfg_list, q_list, qb_list, lnw_list, lnb_list = [], [], [], [], [], []
    for i in range(L):
        fw, fb = _incep_packed(params["filter_w"][i], params["filter_b"][i], Cr, Cc, Ck, Nn, eyeN)
        gw, gb = _incep_packed(params["gate_w"][i], params["gate_b"][i], Cr, Cc, Ck, Nn, eyeN)
        wfg_list.append(jnp.concatenate([fw, gw], axis=1))                # [7*NC, 2*NG]
        bfg_list.append(jnp.concatenate([fb, gb])[None, :])
        q, qb = _mixprop_q(madj, params["g1_w"][i], params["g1_b"][i],
                           params["g2_w"][i], params["g2_b"][i],
                           gdep, palpha, Nn, Cc, Cr, eyeN)
        q_list.append(q)
        qb_list.append(qb)
        lw = jnp.transpose(params["ln_w"][i], (2, 1, 0)).reshape(t_outs[i], NC)
        lb = jnp.transpose(params["ln_b"][i], (2, 1, 0)).reshape(t_outs[i], NC)
        lnw_list.append(jnp.pad(lw, ((0, tmax - t_outs[i]), (0, 0))))
        lnb_list.append(jnp.pad(lb, ((0, tmax - t_outs[i]), (0, 0))))
    wfg_s = jnp.stack(wfg_list)
    bfg_s = jnp.stack(bfg_list)
    q_s = jnp.stack(q_list)
    qb_s = jnp.stack(qb_list)
    lnw_s = jnp.stack(lnw_list)
    lnb_s = jnp.stack(lnb_list)

    # encoder input: [B, rf, Nn*Din] (left zero-padded time)
    x_enc = jnp.pad(x.reshape(B, T, Nn * Din), ((0, 0), (rf - T, 0), (0, 0)))

    weights = (wemb_big, bembm, wst_big, bst_row, wfg_s, bfg_s, q_s, qb_s, lnw_s, lnb_s)

    def _w_spec(a):
        if a.ndim == 2:
            return pl.BlockSpec(a.shape, lambda b: (0, 0))
        return pl.BlockSpec(a.shape, lambda b: (0, 0, 0))

    in_specs = ([pl.BlockSpec((1, rf, Nn * Din), lambda b: (b, 0, 0))] +
                [_w_spec(a) for a in weights])
    out_specs = [pl.BlockSpec((1, t, NG), lambda b: (b, 0, 0)) for t in t_outs]
    out_specs.append(pl.BlockSpec((1, 1, NC), lambda b: (b, 0, 0)))
    out_shape = [jax.ShapeDtypeStruct((B, t, NG), jnp.float32) for t in t_outs]
    out_shape.append(jax.ShapeDtypeStruct((B, 1, NC), jnp.float32))

    enc = pl.pallas_call(
        functools.partial(_encoder_kernel, L=L, rf=rf, Nn=Nn, Cr=Cr, Cc=Cc, eps=1e-5),
        grid=(B,),
        in_specs=in_specs,
        out_specs=out_specs,
        out_shape=out_shape,
        scratch_shapes=[pltpu.VMEM((rf, NC), jnp.float32),
                        pltpu.VMEM((tmax, 7 * NC), jnp.float32)],
        compiler_params=pltpu.CompilerParams(dimension_semantics=("parallel",)),
    )(x_enc, *weights)
    g_list = enc[:L]
    xcf = enc[L]                                                          # [B, 1, NC]

    # ---- fold every skip conv into a single matmul (concatenate along K in glue) ----
    parts_in, parts_w = [], []
    # skip0 composed with the embedding, applied directly to the (padded) raw input
    xp = jnp.pad(x, ((0, 0), (rf - T, 0), (0, 0), (0, 0)))                # [B, rf, Nn, Din]
    parts_in.append(jnp.transpose(xp, (0, 2, 1, 3)).reshape(B * Nn, rf * Din))
    w0q = jnp.transpose(params["skip0_w"][:, :, 0, :], (2, 1, 0))         # [rf, Cr, Cs]
    parts_w.append(jnp.einsum('tic,di->tdc', w0q, wemb_m).reshape(rf * Din, Cs))
    bias_skip = params["skip0_b"] + jnp.einsum('tic,i->c', w0q[rf - T:], params["emb_b"])
    # per-layer skip convs on the gated activations
    for i in range(L):
        gi = g_list[i].reshape(B, t_outs[i], Nn, Cc)
        parts_in.append(jnp.transpose(gi, (0, 2, 1, 3)).reshape(B * Nn, t_outs[i] * Cc))
        parts_w.append(jnp.transpose(params["skip_w"][i][:, :, 0, :], (2, 1, 0)).reshape(t_outs[i] * Cc, Cs))
        bias_skip = bias_skip + params["skip_b"][i]
    # skipE on the final residual state
    parts_in.append(xcf.reshape(B * Nn, Cr))
    parts_w.append(params["skipE_w"][:, :, 0, 0].T)
    bias_skip = bias_skip + params["skipE_b"]

    zin = jnp.concatenate(parts_in, axis=1)
    wsk = jnp.concatenate(parts_w, axis=0)
    bsk = bias_skip[None, :]
    wfd = params["fdec_w"][:, :, 0, 0].T                                  # [Cs, hz]
    bfd = params["fdec_b"][None, :]
    tgt_s = (madj > 0).astype(jnp.float32)
    xt = jnp.transpose(x[..., 0], (0, 2, 1)).reshape(B * Nn, T)

    s_loss, f_loss = pl.pallas_call(
        functools.partial(_decode_loss_kernel, B=B, Nn=Nn, T=T),
        out_shape=(jax.ShapeDtypeStruct((1, 1), jnp.float32),
                   jax.ShapeDtypeStruct((1, 1), jnp.float32)),
    )(zin, wsk, bsk, wfd, bfd, tgt_s, xt)
    s_loss = s_loss[0, 0]
    f_loss = f_loss[0, 0]
    loss = 1.0 * s_loss + 1.0 * f_loss
    return loss, {"s_loss": s_loss, "f_loss": f_loss, "loss": loss}


# ----------------------------- parameter init ------------------------------

def _normal(key, shape, scale=0.1):
    return scale * jax.random.normal(key, shape, jnp.float32)


def init_params(key, cfg):
    keys = iter(jax.random.split(key, 512))
    nk = lambda: next(keys)
    N = cfg["num_nodes"]; Din = cfg["in_dim"]; Cr = cfg["residual_channels"]
    Cc = cfg["conv_channels"]; Cs = cfg["skip_channels"]; nd = cfg["node_dim"]
    rf = cfg["receptive_field"]; L = cfg["layers"]; gdep = cfg["gcn_depth"]; hz = cfg["horizon"]
    Ck = Cc // len(KERNEL_SET)
    p = {}
    p["emb_w"] = _normal(nk(), (Cr, Din)); p["emb_b"] = _normal(nk(), (Cr,), 0.05)
    p["mask_token"] = _normal(nk(), (Cr,))                 # unused when mask_f == 0
    p["gc_emb1"] = _normal(nk(), (N, nd)); p["gc_emb2"] = _normal(nk(), (N, nd))
    p["gc_lin1_w"] = _normal(nk(), (nd, nd)); p["gc_lin1_b"] = _normal(nk(), (nd,), 0.05)
    p["gc_lin2_w"] = _normal(nk(), (nd, nd)); p["gc_lin2_b"] = _normal(nk(), (nd,), 0.05)
    p["start_w"] = _normal(nk(), (Cr, Cr, 1, 1)); p["start_b"] = _normal(nk(), (Cr,), 0.05)
    p["skip0_w"] = _normal(nk(), (Cs, Cr, 1, rf)); p["skip0_b"] = _normal(nk(), (Cs,), 0.05)
    for name in ("filter_w", "filter_b", "gate_w", "gate_b", "skip_w", "skip_b",
                 "g1_w", "g1_b", "g2_w", "g2_b", "ln_w", "ln_b"):
        p[name] = []
    for j in range(1, L + 1):
        Lt = rf - (1 + j * 6) + 1
        p["filter_w"].append([_normal(nk(), (Ck, Cr, 1, k)) for k in KERNEL_SET])
        p["filter_b"].append([_normal(nk(), (Ck,), 0.05) for _ in KERNEL_SET])
        p["gate_w"].append([_normal(nk(), (Ck, Cr, 1, k)) for k in KERNEL_SET])
        p["gate_b"].append([_normal(nk(), (Ck,), 0.05) for _ in KERNEL_SET])
        p["skip_w"].append(_normal(nk(), (Cs, Cc, 1, Lt)))
        p["skip_b"].append(_normal(nk(), (Cs,), 0.05))
        p["g1_w"].append(_normal(nk(), (Cr, (gdep + 1) * Cc, 1, 1)))
        p["g1_b"].append(_normal(nk(), (Cr,), 0.05))
        p["g2_w"].append(_normal(nk(), (Cr, (gdep + 1) * Cc, 1, 1)))
        p["g2_b"].append(_normal(nk(), (Cr,), 0.05))
        p["ln_w"].append(jnp.ones((Cr, N, Lt), jnp.float32))    # LayerNorm reset_parameters
        p["ln_b"].append(jnp.zeros((Cr, N, Lt), jnp.float32))
    p["skipE_w"] = _normal(nk(), (Cs, Cr, 1, 1)); p["skipE_b"] = _normal(nk(), (Cs,), 0.05)
    p["fdec_w"] = _normal(nk(), (hz, Cs, 1, 1)); p["fdec_b"] = _normal(nk(), (hz,), 0.05)
    return p


# ----------------------------- main ------------------------------

if __name__ == "__main__":
    cfg = dict(
        num_nodes=8, subgraph_size=4, node_dim=16,
        residual_channels=16, conv_channels=16, skip_channels=32,
        seq_length=12, in_dim=2, horizon=12, layers=3,
        gcn_depth=2, propalpha=0.05, tanhalpha=3.0,
    )
    cfg["receptive_field"] = cfg["layers"] * 6 + 1   # dilation_exponential == 1, kernel 7

    key = jax.random.PRNGKey(0)
    kp, kx = jax.random.split(key)
    params = init_params(kp, cfg)
    x = jax.random.normal(kx, (2, cfg["seq_length"], cfg["num_nodes"], cfg["in_dim"]), jnp.float32)

    fwd = jax.jit(lambda p, xx: mtgnn_forward(p, xx, cfg))
    loss, info = fwd(params, x)
    loss = jax.block_until_ready(loss)
    assert math.isfinite(float(loss))
    print("KERNEL_OK")
</pallas_src>

<mosaic_0001>
module attributes {stable_mosaic.version = 11 : i64} {
  func.func @_graph_kernel(%arg0: memref<8x16xf32, #tpu.memory_space<vmem>>, %arg1: memref<16x16xf32, #tpu.memory_space<vmem>>, %arg2: memref<1x16xf32, #tpu.memory_space<vmem>>, %arg3: memref<8x16xf32, #tpu.memory_space<vmem>>, %arg4: memref<16x16xf32, #tpu.memory_space<vmem>>, %arg5: memref<1x16xf32, #tpu.memory_space<vmem>>, %arg6: memref<8x8xf32, #tpu.memory_space<vmem>>) attributes {dimension_semantics = [], scalar_prefetch = 0 : i64, scratch_operands = 0 : i64, tpu.core_type = #tpu.core_type<tc>} {
    %c0 = arith.constant 0 : index
    %c0_0 = arith.constant 0 : index
    %0 = vector.load %arg0[%c0, %c0_0] : memref<8x16xf32, #tpu.memory_space<vmem>>, vector<8x16xf32>
    %c0_1 = arith.constant 0 : index
    %c0_2 = arith.constant 0 : index
    %1 = vector.load %arg1[%c0_1, %c0_2] : memref<16x16xf32, #tpu.memory_space<vmem>>, vector<16x16xf32>
    %cst = arith.constant dense<0.000000e+00> : vector<8x16xf32>
    %2 = tpu.matmul %0, %1, %cst {dimension_numbers = #tpu.dot_dimension_numbers<[1], [0], [0], [1], [0, 0, 1, 1], [], []>} : vector<8x16xf32>, vector<16x16xf32>, vector<8x16xf32> -> vector<8x16xf32>
    %c0_3 = arith.constant 0 : index
    %c0_4 = arith.constant 0 : index
    %3 = vector.load %arg2[%c0_3, %c0_4] : memref<1x16xf32, #tpu.memory_space<vmem>>, vector<1x16xf32>
    %4 = vector.broadcast %3 : vector<1x16xf32> to vector<8x16xf32>
    %5 = arith.addf %2, %4 : vector<8x16xf32>
    %cst_5 = arith.constant 3.000000e+00 : f32
    %6 = vector.broadcast %cst_5 : f32 to vector<8x16xf32>
    %7 = arith.mulf %6, %5 : vector<8x16xf32>
    %8 = math.tanh %7 : vector<8x16xf32>
    %c0_6 = arith.constant 0 : index
    %c0_7 = arith.constant 0 : index
    %9 = vector.load %arg3[%c0_6, %c0_7] : memref<8x16xf32, #tpu.memory_space<vmem>>, vector<8x16xf32>
    %c0_8 = arith.constant 0 : index
    %c0_9 = arith.constant 0 : index
    %10 = vector.load %arg4[%c0_8, %c0_9] : memref<16x16xf32, #tpu.memory_space<vmem>>, vector<16x16xf32>
    %cst_10 = arith.constant dense<0.000000e+00> : vector<8x16xf32>
    %11 = tpu.matmul %9, %10, %cst_10 {dimension_numbers = #tpu.dot_dimension_numbers<[1], [0], [0], [1], [0, 0, 1, 1], [], []>} : vector<8x16xf32>, vector<16x16xf32>, vector<8x16xf32> -> vector<8x16xf32>
    %c0_11 = arith.constant 0 : index
    %c0_12 = arith.constant 0 : index
    %12 = vector.load %arg5[%c0_11, %c0_12] : memref<1x16xf32, #tpu.memory_space<vmem>>, vector<1x16xf32>
    %13 = vector.broadcast %12 : vector<1x16xf32> to vector<8x16xf32>
    %14 = arith.addf %11, %13 : vector<8x16xf32>
    %cst_13 = arith.constant 3.000000e+00 : f32
    %15 = vector.broadcast %cst_13 : f32 to vector<8x16xf32>
    %16 = arith.mulf %15, %14 : vector<8x16xf32>
    %17 = math.tanh %16 : vector<8x16xf32>
    %18 = tpu.transpose %17, [1, 0] : vector<8x16xf32> -> vector<16x8xf32>
    %cst_14 = arith.constant dense<0.000000e+00> : vector<8x8xf32>
    %19 = tpu.matmul %8, %18, %cst_14 {dimension_numbers = #tpu.dot_dimension_numbers<[1], [0], [0], [1], [0, 0, 1, 1], [], []>} : vector<8x16xf32>, vector<16x8xf32>, vector<8x8xf32> -> vector<8x8xf32>
    %20 = tpu.transpose %19, [1, 0] : vector<8x8xf32> -> vector<8x8xf32>
    %21 = arith.subf %19, %20 : vector<8x8xf32>
    %cst_15 = arith.constant 3.000000e+00 : f32
    %22 = vector.broadcast %cst_15 : f32 to vector<8x8xf32>
    %23 = arith.mulf %22, %21 : vector<8x8xf32>
    %24 = math.tanh %23 : vector<8x8xf32>
    %cst_16 = arith.constant 0.000000e+00 : f32
    %25 = vector.broadcast %cst_16 : f32 to vector<8x8xf32>
    %26 = arith.maximumf %24, %25 : vector<8x8xf32>
    %c0_17 = arith.constant 0 : index
    %c0_18 = arith.constant 0 : index
    %27 = vector.load %arg6[%c0_17, %c0_18] : memref<8x8xf32, #tpu.memory_space<vmem>>, vector<8x8xf32>
    tpu.vector_store %arg6[%c0_17, %c0_18], %26 {strides = array<i32>} : memref<8x8xf32, #tpu.memory_space<vmem>>, vector<8x8xf32>,
    return
  }
}

module attributes {stable_mosaic.version = 11 : i64} {
  func.func @_encoder_kernel(%arg0: i32, %arg1: memref<1x19x16xf32, #tpu.memory_space<vmem>>, %arg2: memref<16x128xf32, #tpu.memory_space<vmem>>, %arg3: memref<19x128xf32, #tpu.memory_space<vmem>>, %arg4: memref<128x128xf32, #tpu.memory_space<vmem>>, %arg5: memref<1x128xf32, #tpu.memory_space<vmem>>, %arg6: memref<3x896x256xf32, #tpu.memory_space<vmem>>, %arg7: memref<3x1x256xf32, #tpu.memory_space<vmem>>, %arg8: memref<3x128x128xf32, #tpu.memory_space<vmem>>, %arg9: memref<3x1x128xf32, #tpu.memory_space<vmem>>, %arg10: memref<3x13x128xf32, #tpu.memory_space<vmem>>, %arg11: memref<3x13x128xf32, #tpu.memory_space<vmem>>, %arg12: memref<1x13x128xf32, #tpu.memory_space<vmem>>, %arg13: memref<1x7x128xf32, #tpu.memory_space<vmem>>, %arg14: memref<1x1x128xf32, #tpu.memory_space<vmem>>, %arg15: memref<1x1x128xf32, #tpu.memory_space<vmem>>, %arg16: memref<19x128xf32, #tpu.memory_space<vmem>>, %arg17: memref<13x896xf32, #tpu.memory_space<vmem>>) attributes {dimension_semantics = [#tpu.dimension_semantics<parallel>], iteration_bounds = array<i64: 2>, scalar_prefetch = 0 : i64, scratch_operands = 2 : i64, tpu.core_type = #tpu.core_type<tc>, window_params = [{transform_indices = @transform_0, window_bounds = array<i64: 1, 19, 16>}, {pipeline_mode = #tpu.pipeline_mode<synchronous>, transform_indices = @transform_1, window_bounds = array<i64: 16, 128>}, {pipeline_mode = #tpu.pipeline_mode<synchronous>, transform_indices = @transform_2, window_bounds = array<i64: 19, 128>}, {pipeline_mode = #tpu.pipeline_mode<synchronous>, transform_indices = @transform_3, window_bounds = array<i64: 128, 128>}, {pipeline_mode = #tpu.pipeline_mode<synchronous>, transform_indices = @transform_4, window_bounds = array<i64: 1, 128>}, {pipeline_mode = #tpu.pipeline_mode<synchronous>, transform_indices = @transform_5, window_bounds = array<i64: 3, 896, 256>}, {pipeline_mode = #tpu.pipeline_mode<synchronous>, transform_indices = @transform_6, window_bounds = array<i64: 3, 1, 256>}, {pipeline_mode = #tpu.pipeline_mode<synchronous>, transform_indices = @transform_7, window_bounds = array<i64: 3, 128, 128>}, {pipeline_mode = #tpu.pipeline_mode<synchronous>, transform_indices = @transform_8, window_bounds = array<i64: 3, 1, 128>}, {pipeline_mode = #tpu.pipeline_mode<synchronous>, transform_indices = @transform_9, window_bounds = array<i64: 3, 13, 128>}, {pipeline_mode = #tpu.pipeline_mode<synchronous>, transform_indices = @transform_10, window_bounds = array<i64: 3, 13, 128>}, {transform_indices = @transform_11, window_bounds = array<i64: 1, 13, 128>}, {transform_indices = @transform_12, window_bounds = array<i64: 1, 7, 128>}, {transform_indices = @transform_13, window_bounds = array<i64: 1, 1, 128>}, {transform_indices = @transform_14, window_bounds = array<i64: 1, 1, 128>}]} {
    %c0 = arith.constant 0 : index
    %c0_0 = arith.constant 0 : index
    %c0_1 = arith.constant 0 : index
    %0 = vector.load %arg1[%c0, %c0_0, %c0_1] : memref<1x19x16xf32, #tpu.memory_space<vmem>>, vector<1x19x16xf32>
    %1 = vector.shape_cast %0 : vector<1x19x16xf32> to vector<19x16xf32>
    %c0_2 = arith.constant 0 : index
    %c0_3 = arith.constant 0 : index
    %2 = vector.load %arg2[%c0_2, %c0_3] : memref<16x128xf32, #tpu.memory_space<vmem>>, vector<16x128xf32>
    %cst = arith.constant dense<0.000000e+00> : vector<19x128xf32>
    %3 = tpu.matmul %1, %2, %cst {dimension_numbers = #tpu.dot_dimension_numbers<[1], [0], [0], [1], [0, 0, 1, 1], [], []>} : vector<19x16xf32>, vector<16x128xf32>, vector<19x128xf32> -> vector<19x128xf32>
    %c0_4 = arith.constant 0 : index
    %c0_5 = arith.constant 0 : index
    %4 = vector.load %arg3[%c0_4, %c0_5] : memref<19x128xf32, #tpu.memory_space<vmem>>, vector<19x128xf32>
    %5 = arith.addf %3, %4 : vector<19x128xf32>
    %c0_6 = arith.constant 0 : index
    %c0_7 = arith.constant 0 : index
    %6 = vector.load %arg4[%c0_6, %c0_7] : memref<128x128xf32, #tpu.memory_space<vmem>>, vector<128x128xf32>
    %cst_8 = arith.constant dense<0.000000e+00> : vector<19x128xf32>
    %7 = tpu.matmul %5, %6, %cst_8 {dimension_numbers = #tpu.dot_dimension_numbers<[1], [0], [0], [1], [0, 0, 1, 1], [], []>} : vector<19x128xf32>, vector<128x128xf32>, vector<19x128xf32> -> vector<19x128xf32>
    %c0_9 = arith.constant 0 : index
    %c0_10 = arith.constant 0 : index
    %8 = vector.load %arg5[%c0_9, %c0_10] : memref<1x128xf32, #tpu.memory_space<vmem>>, vector<1x128xf32>
    %9 = vector.broadcast %8 : vector<1x128xf32> to vector<19x128xf32>
    %10 = arith.addf %7, %9 : vector<19x128xf32>
    %c0_11 = arith.constant 0 : index
    %c0_12 = arith.constant 0 : index
    %11 = vector.load %arg16[%c0_11, %c0_12] : memref<19x128xf32, #tpu.memory_space<vmem>>, vector<19x128xf32>
    tpu.vector_store %arg16[%c0_11, %c0_12], %10 {strides = array<i32>} : memref<19x128xf32, #tpu.memory_space<vmem>>, vector<19x128xf32>,
    %c0_13 = arith.constant 0 : index
    %c0_14 = arith.constant 0 : index
    %12 = vector.load %arg16[%c0_13, %c0_14] : memref<19x128xf32, #tpu.memory_space<vmem>>, vector<13x128xf32>
    %c0_15 = arith.constant 0 : index
    %c0_16 = arith.constant 0 : index
    %13 = vector.load %arg17[%c0_15, %c0_16] : memref<13x896xf32, #tpu.memory_space<vmem>>, vector<13x128xf32>
    tpu.vector_store %arg17[%c0_15, %c0_16], %12 {strides = array<i32>} : memref<13x896xf32, #tpu.memory_space<vmem>>, vector<13x128xf32>,
    %c1 = arith.constant 1 : index
    %c0_17 = arith.constant 0 : index
    %14 = vector.load %arg16[%c1, %c0_17] : memref<19x128xf32, #tpu.memory_space<vmem>>, vector<13x128xf32>
    %c0_18 = arith.constant 0 : index
    %c128 = arith.constant 128 : index
    %15 = vector.load %arg17[%c0_18, %c128] : memref<13x896xf32, #tpu.memory_space<vmem>>, vector<13x128xf32>
    tpu.vector_store %arg17[%c0_18, %c128], %14 {strides = array<i32>} : memref<13x896xf32, #tpu.memory_space<vmem>>, vector<13x128xf32>,
    %c2 = arith.constant 2 : index
    %c0_19 = arith.constant 0 : index
    %16 = vector.load %arg16[%c2, %c0_19] : memref<19x128xf32, #tpu.memory_space<vmem>>, vector<13x128xf32>
    %c0_20 = arith.constant 0 : index
    %c256 = arith.constant 256 : index
    %17 = vector.load %arg17[%c0_20, %c256] : memref<13x896xf32, #tpu.memory_space<vmem>>, vector<13x128xf32>
    tpu.vector_store %arg17[%c0_20, %c256], %16 {strides = array<i32>} : memref<13x896xf32, #tpu.memory_space<vmem>>, vector<13x128xf32>,
    %c3 = arith.constant 3 : index
    %c0_21 = arith.constant 0 : index
    %18 = vector.load %arg16[%c3, %c0_21] : memref<19x128xf32, #tpu.memory_space<vmem>>, vector<13x128xf32>
    %c0_22 = arith.constant 0 : index
    %c384 = arith.constant 384 : index
    %19 = vector.load %arg17[%c0_22, %c384] : memref<13x896xf32, #tpu.memory_space<vmem>>, vector<13x128xf32>
    tpu.vector_store %arg17[%c0_22, %c384], %18 {strides = array<i32>} : memref<13x896xf32, #tpu.memory_space<vmem>>, vector<13x128xf32>,
    %c4 = arith.constant 4 : index
    %c0_23 = arith.constant 0 : index
    %20 = vector.load %arg16[%c4, %c0_23] : memref<19x128xf32, #tpu.memory_space<vmem>>, vector<13x128xf32>
    %c0_24 = arith.constant 0 : index
    %c512 = arith.constant 512 : index
    %21 = vector.load %arg17[%c0_24, %c512] : memref<13x896xf32, #tpu.memory_space<vmem>>, vector<13x128xf32>
    tpu.vector_store %arg17[%c0_24, %c512], %20 {strides = array<i32>} : memref<13x896xf32, #tpu.memory_space<vmem>>, vector<13x128xf32>,
    %c5 = arith.constant 5 : index
    %c0_25 = arith.constant 0 : index
    %22 = vector.load %arg16[%c5, %c0_25] : memref<19x128xf32, #tpu.memory_space<vmem>>, vector<13x128xf32>
    %c0_26 = arith.constant 0 : index
    %c640 = arith.constant 640 : index
    %23 = vector.load %arg17[%c0_26, %c640] : memref<13x896xf32, #tpu.memory_space<vmem>>, vector<13x128xf32>
    tpu.vector_store %arg17[%c0_26, %c640], %22 {strides = array<i32>} : memref<13x896xf32, #tpu.memory_space<vmem>>, vector<13x128xf32>,
    %c6 = arith.constant 6 : index
    %c0_27 = arith.constant 0 : index
    %24 = vector.load %arg16[%c6, %c0_27] : memref<19x128xf32, #tpu.memory_space<vmem>>, vector<13x128xf32>
    %c0_28 = arith.constant 0 : index
    %c768 = arith.constant 768 : index
    %25 = vector.load %arg17[%c0_28, %c768] : memref<13x896xf32, #tpu.memory_space<vmem>>, vector<13x128xf32>
    tpu.vector_store %arg17[%c0_28, %c768], %24 {strides = array<i32>} : memref<13x896xf32, #tpu.memory_space<vmem>>, vector<13x128xf32>,
    %c0_29 = arith.constant 0 : index
    %c0_30 = arith.constant 0 : index
    %26 = vector.load %arg17[%c0_29, %c0_30] : memref<13x896xf32, #tpu.memory_space<vmem>>, vector<13x896xf32>
    %c0_31 = arith.constant 0 : index
    %c0_32 = arith.constant 0 : index
    %c0_33 = arith.constant 0 : index
    %27 = vector.load %arg6[%c0_31, %c0_32, %c0_33] : memref<3x896x256xf32, #tpu.memory_space<vmem>>, vector<1x896x256xf32>
    %28 = vector.shape_cast %27 : vector<1x896x256xf32> to vector<896x256xf32>
    %cst_34 = arith.constant dense<0.000000e+00> : vector<13x256xf32>
    %29 = tpu.matmul %26, %28, %cst_34 {dimension_numbers = #tpu.dot_dimension_numbers<[1], [0], [0], [1], [0, 0, 1, 1], [], []>} : vector<13x896xf32>, vector<896x256xf32>, vector<13x256xf32> -> vector<13x256xf32>
    %c0_35 = arith.constant 0 : index
    %c0_36 = arith.constant 0 : index
    %c0_37 = arith.constant 0 : index
    %30 = vector.load %arg7[%c0_35, %c0_36, %c0_37] : memref<3x1x256xf32, #tpu.memory_space<vmem>>, vector<1x1x256xf32>
    %31 = vector.shape_cast %30 : vector<1x1x256xf32> to vector<1x256xf32>
    %32 = vector.broadcast %31 : vector<1x256xf32> to vector<13x256xf32>
    %33 = arith.addf %29, %32 : vector<13x256xf32>
    %34 = vector.extract_strided_slice %33 {offsets = [0, 0], sizes = [13, 128], strides = [1, 1]} : vector<13x256xf32> to vector<13x128xf32>
    %35 = math.tanh %34 : vector<13x128xf32>
    %36 = vector.extract_strided_slice %33 {offsets = [0, 128], sizes = [13, 128], strides = [1, 1]} : vector<13x256xf32> to vector<13x128xf32>
    %cst_38 = arith.constant 0.000000e+00 : f32
    %37 = vector.broadcast %cst_38 : f32 to vector<13x128xf32>
    %38 = arith.subf %37, %36 : vector<13x128xf32>
    %39 = math.exp %38 : vector<13x128xf32>
    %cst_39 = arith.constant 1.000000e+00 : f32
    %40 = vector.broadcast %cst_39 : f32 to vector<13x128xf32>
    %41 = arith.addf %40, %39 : vector<13x128xf32>
    %cst_40 = arith.constant 1.000000e+00 : f32
    %42 = vector.broadcast %cst_40 : f32 to vector<13x128xf32>
    %43 = arith.divf %42, %41 : vector<13x128xf32>
    %44 = arith.mulf %35, %43 : vector<13x128xf32>
    %c0_41 = arith.constant 0 : index
    %c0_42 = arith.constant 0 : index
    %c0_43 = arith.constant 0 : index
    %45 = vector.load %arg12[%c0_41, %c0_42, %c0_43] : memref<1x13x128xf32, #tpu.memory_space<vmem>>, vector<1x13x128xf32>
    %46 = vector.shape_cast %45 : vector<1x13x128xf32> to vector<13x128xf32>
    %47 = vector.shape_cast %44 : vector<13x128xf32> to vector<1x13x128xf32>
    tpu.vector_store %arg12[%c0_41, %c0_42, %c0_43], %47 {strides = array<i32>} : memref<1x13x128xf32, #tpu.memory_space<vmem>>, vector<1x13x128xf32>,
    %c0_44 = arith.constant 0 : index
    %c0_45 = arith.constant 0 : index
    %c0_46 = arith.constant 0 : index
    %48 = vector.load %arg8[%c0_44, %c0_45, %c0_46] : memref<3x128x128xf32, #tpu.memory_space<vmem>>, vector<1x128x128xf32>
    %49 = vector.shape_cast %48 : vector<1x128x128xf32> to vector<128x128xf32>
    %cst_47 = arith.constant dense<0.000000e+00> : vector<13x128xf32>
    %50 = tpu.matmul %44, %49, %cst_47 {dimension_numbers = #tpu.dot_dimension_numbers<[1], [0], [0], [1], [0, 0, 1, 1], [], []>} : vector<13x128xf32>, vector<128x128xf32>, vector<13x128xf32> -> vector<13x128xf32>
    %c0_48 = arith.constant 0 : index
    %c0_49 = arith.constant 0 : index
    %c0_50 = arith.constant 0 : index
    %51 = vector.load %arg9[%c0_48, %c0_49, %c0_50] : memref<3x1x128xf32, #tpu.memory_space<vmem>>, vector<1x1x128xf32>
    %52 = vector.shape_cast %51 : vector<1x1x128xf32> to vector<1x128xf32>
    %53 = vector.broadcast %52 : vector<1x128xf32> to vector<13x128xf32>
    %54 = arith.addf %50, %53 : vector<13x128xf32>
    %c6_51 = arith.constant 6 : index
    %c0_52 = arith.constant 0 : index
    %55 = vector.load %arg16[%c6_51, %c0_52] : memref<19x128xf32, #tpu.memory_space<vmem>>, vector<13x128xf32>
    %56 = arith.addf %54, %55 : vector<13x128xf32>
    %cst_53 = arith.constant dense<0.000000e+00> : vector<13xf32>
    %57 = vector.multi_reduction <add>, %56, %cst_53 [1] : vector<13x128xf32> to vector<13xf32>
    %58 = vector.shape_cast %57 : vector<13xf32> to vector<13x1xf32>
    %cst_54 = arith.constant dense<0.000000e+00> : vector<1xf32>
    %59 = vector.multi_reduction <add>, %58, %cst_54 [0] : vector<13x1xf32> to vector<1xf32>
    %60 = vector.shape_cast %59 : vector<1xf32> to vector<1x1xf32>
    %cst_55 = arith.constant 6.00961561E-4 : f32
    %61 = vector.broadcast %cst_55 : f32 to vector<1x1xf32>
    %62 = arith.mulf %60, %61 : vector<1x1xf32>
    %63 = vector.broadcast %62 : vector<1x1xf32> to vector<13x128xf32>
    %64 = arith.subf %56, %63 : vector<13x128xf32>
    %65 = arith.mulf %64, %64 : vector<13x128xf32>
    %cst_56 = arith.constant dense<0.000000e+00> : vector<13xf32>
    %66 = vector.multi_reduction <add>, %65, %cst_56 [1] : vector<13x128xf32> to vector<13xf32>
    %67 = vector.shape_cast %66 : vector<13xf32> to vector<13x1xf32>
    %cst_57 = arith.constant dense<0.000000e+00> : vector<1xf32>
    %68 = vector.multi_reduction <add>, %67, %cst_57 [0] : vector<13x1xf32> to vector<1xf32>
    %69 = vector.shape_cast %68 : vector<1xf32> to vector<1x1xf32>
    %cst_58 = arith.constant 6.00961561E-4 : f32
    %70 = vector.broadcast %cst_58 : f32 to vector<1x1xf32>
    %71 = arith.mulf %69, %70 : vector<1x1xf32>
    %cst_59 = arith.constant 9.99999974E-6 : f32
    %72 = vector.broadcast %cst_59 : f32 to vector<1x1xf32>
    %73 = arith.addf %71, %72 : vector<1x1xf32>
    %74 = math.rsqrt %73 : vector<1x1xf32>
    %75 = vector.broadcast %74 : vector<1x1xf32> to vector<13x128xf32>
    %76 = arith.mulf %64, %75 : vector<13x128xf32>
    %c0_60 = arith.constant 0 : index
    %c0_61 = arith.constant 0 : index
    %c0_62 = arith.constant 0 : index
    %77 = vector.load %arg10[%c0_60, %c0_61, %c0_62] : memref<3x13x128xf32, #tpu.memory_space<vmem>>, vector<1x13x128xf32>
    %78 = vector.shape_cast %77 : vector<1x13x128xf32> to vector<13x128xf32>
    %79 = arith.mulf %76, %78 : vector<13x128xf32>
    %c0_63 = arith.constant 0 : index
    %c0_64 = arith.constant 0 : index
    %c0_65 = arith.constant 0 : index
    %80 = vector.load %arg11[%c0_63, %c0_64, %c0_65] : memref<3x13x128xf32, #tpu.memory_space<vmem>>, vector<1x13x128xf32>
    %81 = vector.shape_cast %80 : vector<1x13x128xf32> to vector<13x128xf32>
    %82 = arith.addf %79, %81 : vector<13x128xf32>
    %c0_66 = arith.constant 0 : index
    %c0_67 = arith.constant 0 : index
    %83 = vector.load %arg16[%c0_66, %c0_67] : memref<19x128xf32, #tpu.memory_space<vmem>>, vector<13x128xf32>
    tpu.vector_store %arg16[%c0_66, %c0_67], %82 {strides = array<i32>} : memref<19x128xf32, #tpu.memory_space<vmem>>, vector<13x128xf32>,
    %c0_68 = arith.constant 0 : index
    %c0_69 = arith.constant 0 : index
    %84 = vector.load %arg16[%c0_68, %c0_69] : memref<19x128xf32, #tpu.memory_space<vmem>>, vector<7x128xf32>
    %c0_70 = arith.constant 0 : index
    %c0_71 = arith.constant 0 : index
    %85 = vector.load %arg17[%c0_70, %c0_71] : memref<13x896xf32, #tpu.memory_space<vmem>>, vector<7x128xf32>
    tpu.vector_store %arg17[%c0_70, %c0_71], %84 {strides = array<i32>} : memref<13x896xf32, #tpu.memory_space<vmem>>, vector<7x128xf32>,
    %c1_72 = arith.constant 1 : index
    %c0_73 = arith.constant 0 : index
    %86 = vector.load %arg16[%c1_72, %c0_73] : memref<19x128xf32, #tpu.memory_space<vmem>>, vector<7x128xf32>
    %c0_74 = arith.constant 0 : index
    %c128_75 = arith.constant 128 : index
    %87 = vector.load %arg17[%c0_74, %c128_75] : memref<13x896xf32, #tpu.memory_space<vmem>>, vector<7x128xf32>
    tpu.vector_store %arg17[%c0_74, %c128_75], %86 {strides = array<i32>} : memref<13x896xf32, #tpu.memory_space<vmem>>, vector<7x128xf32>,
    %c2_76 = arith.constant 2 : index
    %c0_77 = arith.constant 0 : index
    %88 = vector.load %arg16[%c2_76, %c0_77] : memref<19x128xf32, #tpu.memory_space<vmem>>, vector<7x128xf32>
    %c0_78 = arith.constant 0 : index
    %c256_79 = arith.constant 256 : index
    %89 = vector.load %arg17[%c0_78, %c256_79] : memref<13x896xf32, #tpu.memory_space<vmem>>, vector<7x128xf32>
    tpu.vector_store %arg17[%c0_78, %c256_79], %88 {strides = array<i32>} : memref<13x896xf32, #tpu.memory_space<vmem>>, vector<7x128xf32>,
    %c3_80 = arith.constant 3 : index
    %c0_81 = arith.constant 0 : index
    %90 = vector.load %arg16[%c3_80, %c0_81] : memref<19x128xf32, #tpu.memory_space<vmem>>, vector<7x128xf32>
    %c0_82 = arith.constant 0 : index
    %c384_83 = arith.constant 384 : index
    %91 = vector.load %arg17[%c0_82, %c384_83] : memref<13x896xf32, #tpu.memory_space<vmem>>, vector<7x128xf32>
    tpu.vector_store %arg17[%c0_82, %c384_83], %90 {strides = array<i32>} : memref<13x896xf32, #tpu.memory_space<vmem>>, vector<7x128xf32>,
    %c4_84 = arith.constant 4 : index
    %c0_85 = arith.constant 0 : index
    %92 = vector.load %arg16[%c4_84, %c0_85] : memref<19x128xf32, #tpu.memory_space<vmem>>, vector<7x128xf32>
    %c0_86 = arith.constant 0 : index
    %c512_87 = arith.constant 512 : index
    %93 = vector.load %arg17[%c0_86, %c512_87] : memref<13x896xf32, #tpu.memory_space<vmem>>, vector<7x128xf32>
    tpu.vector_store %arg17[%c0_86, %c512_87], %92 {strides = array<i32>} : memref<13x896xf32, #tpu.memory_space<vmem>>, vector<7x128xf32>,
    %c5_88 = arith.constant 5 : index
    %c0_89 = arith.constant 0 : index
    %94 = vector.load %arg16[%c5_88, %c0_89] : memref<19x128xf32, #tpu.memory_space<vmem>>, vector<7x128xf32>
    %c0_90 = arith.constant 0 : index
    %c640_91 = arith.constant 640 : index
    %95 = vector.load %arg17[%c0_90, %c640_91] : memref<13x896xf32, #tpu.memory_space<vmem>>, vector<7x128xf32>
    tpu.vector_store %arg17[%c0_90, %c640_91], %94 {strides = array<i32>} : memref<13x896xf32, #tpu.memory_space<vmem>>, vector<7x128xf32>,
    %c6_92 = arith.constant 6 : index
    %c0_93 = arith.constant 0 : index
    %96 = vector.load %arg16[%c6_92, %c0_93] : memref<19x128xf32, #tpu.memory_space<vmem>>, vector<7x128xf32>
    %c0_94 = arith.constant 0 : index
    %c768_95 = arith.constant 768 : index
    %97 = vector.load %arg17[%c0_94, %c768_95] : memref<13x896xf32, #tpu.memory_space<vmem>>, vector<7x128xf32>
    tpu.vector_store %arg17[%c0_94, %c768_95], %96 {strides = array<i32>} : memref<13x896xf32, #tpu.memory_space<vmem>>, vector<7x128xf32>,
    %c0_96 = arith.constant 0 : index
    %c0_97 = arith.constant 0 : index
    %98 = vector.load %arg17[%c0_96, %c0_97] : memref<13x896xf32, #tpu.memory_space<vmem>>, vector<7x896xf32>
    %c1_98 = arith.constant 1 : index
    %c0_99 = arith.constant 0 : index
    %c0_100 = arith.constant 0 : index
    %99 = vector.load %arg6[%c1_98, %c0_99, %c0_100] : memref<3x896x256xf32, #tpu.memory_space<vmem>>, vector<1x896x256xf32>
    %100 = vector.shape_cast %99 : vector<1x896x256xf32> to vector<896x256xf32>
    %cst_101 = arith.constant dense<0.000000e+00> : vector<7x256xf32>
    %101 = tpu.matmul %98, %100, %cst_101 {dimension_numbers = #tpu.dot_dimension_numbers<[1], [0], [0], [1], [0, 0, 1, 1], [], []>} : vector<7x896xf32>, vector<896x256xf32>, vector<7x256xf32> -> vector<7x256xf32>
    %c1_102 = arith.constant 1 : index
    %c0_103 = arith.constant 0 : index
    %c0_104 = arith.constant 0 : index
    %102 = vector.load %arg7[%c1_102, %c0_103, %c0_104] : memref<3x1x256xf32, #tpu.memory_space<vmem>>, vector<1x1x256xf32>
    %103 = vector.shape_cast %102 : vector<1x1x256xf32> to vector<1x256xf32>
    %104 = vector.broadcast %103 : vector<1x256xf32> to vector<7x256xf32>
    %105 = arith.addf %101, %104 : vector<7x256xf32>
    %106 = vector.extract_strided_slice %105 {offsets = [0, 0], sizes = [7, 128], strides = [1, 1]} : vector<7x256xf32> to vector<7x128xf32>
    %107 = math.tanh %106 : vector<7x128xf32>
    %108 = vector.extract_strided_slice %105 {offsets = [0, 128], sizes = [7, 128], strides = [1, 1]} : vector<7x256xf32> to vector<7x128xf32>
    %cst_105 = arith.constant 0.000000e+00 : f32
    %109 = vector.broadcast %cst_105 : f32 to vector<7x128xf32>
    %110 = arith.subf %109, %108 : vector<7x128xf32>
    %111 = math.exp %110 : vector<7x128xf32>
    %cst_106 = arith.constant 1.000000e+00 : f32
    %112 = vector.broadcast %cst_106 : f32 to vector<7x128xf32>
    %113 = arith.addf %112, %111 : vector<7x128xf32>
    %cst_107 = arith.constant 1.000000e+00 : f32
    %114 = vector.broadcast %cst_107 : f32 to vector<7x128xf32>
    %115 = arith.divf %114, %113 : vector<7x128xf32>
    %116 = arith.mulf %107, %115 : vector<7x128xf32>
    %c0_108 = arith.constant 0 : index
    %c0_109 = arith.constant 0 : index
    %c0_110 = arith.constant 0 : index
    %117 = vector.load %arg13[%c0_108, %c0_109, %c0_110] : memref<1x7x128xf32, #tpu.memory_space<vmem>>, vector<1x7x128xf32>
    %118 = vector.shape_cast %117 : vector<1x7x128xf32> to vector<7x128xf32>
    %119 = vector.shape_cast %116 : vector<7x128xf32> to vector<1x7x128xf32>
    tpu.vector_store %arg13[%c0_108, %c0_109, %c0_110], %119 {strides = array<i32>} : memref<1x7x128xf32, #tpu.memory_space<vmem>>, vector<1x7x128xf32>,
    %c1_111 = arith.constant 1 : index
    %c0_112 = arith.constant 0 : index
    %c0_113 = arith.constant 0 : index
    %120 = vector.load %arg8[%c1_111, %c0_112, %c0_113] : memref<3x128x128xf32, #tpu.memory_space<vmem>>, vector<1x128x128xf32>
    %121 = vector.shape_cast %120 : vector<1x128x128xf32> to vector<128x128xf32>
    %cst_114 = arith.constant dense<0.000000e+00> : vector<7x128xf32>
    %122 = tpu.matmul %116, %121, %cst_114 {dimension_numbers = #tpu.dot_dimension_numbers<[1], [0], [0], [1], [0, 0, 1, 1], [], []>} : vector<7x128xf32>, vector<128x128xf32>, vector<7x128xf32> -> vector<7x128xf32>
    %c1_115 = arith.constant 1 : index
    %c0_116 = arith.constant 0 : index
    %c0_117 = arith.constant 0 : index
    %123 = vector.load %arg9[%c1_115, %c0_116, %c0_117] : memref<3x1x128xf32, #tpu.memory_space<vmem>>, vector<1x1x128xf32>
    %124 = vector.shape_cast %123 : vector<1x1x128xf32> to vector<1x128xf32>
    %125 = vector.broadcast %124 : vector<1x128xf32> to vector<7x128xf32>
    %126 = arith.addf %122, %125 : vector<7x128xf32>
    %c6_118 = arith.constant 6 : index
    %c0_119 = arith.constant 0 : index
    %127 = vector.load %arg16[%c6_118, %c0_119] : memref<19x128xf32, #tpu.memory_space<vmem>>, vector<7x128xf32>
    %128 = arith.addf %126, %127 : vector<7x128xf32>
    %cst_120 = arith.constant dense<0.000000e+00> : vector<7xf32>
    %129 = vector.multi_reduction <add>, %128, %cst_120 [1] : vector<7x128xf32> to vector<7xf32>
    %130 = vector.shape_cast %129 : vector<7xf32> to vector<7x1xf32>
    %cst_121 = arith.constant dense<0.000000e+00> : vector<1xf32>
    %131 = vector.multi_reduction <add>, %130, %cst_121 [0] : vector<7x1xf32> to vector<1xf32>
    %132 = vector.shape_cast %131 : vector<1xf32> to vector<1x1xf32>
    %cst_122 = arith.constant 0.00111607148 : f32
    %133 = vector.broadcast %cst_122 : f32 to vector<1x1xf32>
    %134 = arith.mulf %132, %133 : vector<1x1xf32>
    %135 = vector.broadcast %134 : vector<1x1xf32> to vector<7x128xf32>
    %136 = arith.subf %128, %135 : vector<7x128xf32>
    %137 = arith.mulf %136, %136 : vector<7x128xf32>
    %cst_123 = arith.constant dense<0.000000e+00> : vector<7xf32>
    %138 = vector.multi_reduction <add>, %137, %cst_123 [1] : vector<7x128xf32> to vector<7xf32>
    %139 = vector.shape_cast %138 : vector<7xf32> to vector<7x1xf32>
    %cst_124 = arith.constant dense<0.000000e+00> : vector<1xf32>
    %140 = vector.multi_reduction <add>, %139, %cst_124 [0] : vector<7x1xf32> to vector<1xf32>
    %141 = vector.shape_cast %140 : vector<1xf32> to vector<1x1xf32>
    %cst_125 = arith.constant 0.00111607148 : f32
    %142 = vector.broadcast %cst_125 : f32 to vector<1x1xf32>
    %143 = arith.mulf %141, %142 : vector<1x1xf32>
    %cst_126 = arith.constant 9.99999974E-6 : f32
    %144 = vector.broadcast %cst_126 : f32 to vector<1x1xf32>
    %145 = arith.addf %143, %144 : vector<1x1xf32>
    %146 = math.rsqrt %145 : vector<1x1xf32>
    %147 = vector.broadcast %146 : vector<1x1xf32> to vector<7x128xf32>
    %148 = arith.mulf %136, %147 : vector<7x128xf32>
    %c1_127 = arith.constant 1 : index
    %c0_128 = arith.constant 0 : index
    %c0_129 = arith.constant 0 : index
    %149 = vector.load %arg10[%c1_127, %c0_128, %c0_129] : memref<3x13x128xf32, #tpu.memory_space<vmem>>, vector<1x13x128xf32>
    %150 = vector.shape_cast %149 : vector<1x13x128xf32> to vector<13x128xf32>
    %151 = vector.extract_strided_slice %150 {offsets = [0, 0], sizes = [7, 128], strides = [1, 1]} : vector<13x128xf32> to vector<7x128xf32>
    %152 = arith.mulf %148, %151 : vector<7x128xf32>
    %c1_130 = arith.constant 1 : index
    %c0_131 = arith.constant 0 : index
    %c0_132 = arith.constant 0 : index
    %153 = vector.load %arg11[%c1_130, %c0_131, %c0_132] : memref<3x13x128xf32, #tpu.memory_space<vmem>>, vector<1x13x128xf32>
    %154 = vector.shape_cast %153 : vector<1x13x128xf32> to vector<13x128xf32>
    %155 = vector.extract_strided_slice %154 {offsets = [0, 0], sizes = [7, 128], strides = [1, 1]} : vector<13x128xf32> to vector<7x128xf32>
    %156 = arith.addf %152, %155 : vector<7x128xf32>
    %c0_133 = arith.constant 0 : index
    %c0_134 = arith.constant 0 : index
    %157 = vector.load %arg16[%c0_133, %c0_134] : memref<19x128xf32, #tpu.memory_space<vmem>>, vector<7x128xf32>
    tpu.vector_store %arg16[%c0_133, %c0_134], %156 {strides = array<i32>} : memref<19x128xf32, #tpu.memory_space<vmem>>, vector<7x128xf32>,
    %c0_135 = arith.constant 0 : index
    %c0_136 = arith.constant 0 : index
    %158 = vector.load %arg16[%c0_135, %c0_136] : memref<19x128xf32, #tpu.memory_space<vmem>>, vector<1x128xf32>
    %c0_137 = arith.constant 0 : index
    %c0_138 = arith.constant 0 : index
    %159 = vector.load %arg17[%c0_137, %c0_138] : memref<13x896xf32, #tpu.memory_space<vmem>>, vector<1x128xf32>
    tpu.vector_store %arg17[%c0_137, %c0_138], %158 {strides = array<i32>} : memref<13x896xf32, #tpu.memory_space<vmem>>, vector<1x128xf32>,
    %c1_139 = arith.constant 1 : index
    %c0_140 = arith.constant 0 : index
    %160 = vector.load %arg16[%c1_139, %c0_140] : memref<19x128xf32, #tpu.memory_space<vmem>>, vector<1x128xf32>
    %c0_141 = arith.constant 0 : index
    %c128_142 = arith.constant 128 : index
    %161 = vector.load %arg17[%c0_141, %c128_142] : memref<13x896xf32, #tpu.memory_space<vmem>>, vector<1x128xf32>
    tpu.vector_store %arg17[%c0_141, %c128_142], %160 {strides = array<i32>} : memref<13x896xf32, #tpu.memory_space<vmem>>, vector<1x128xf32>,
    %c2_143 = arith.constant 2 : index
    %c0_144 = arith.constant 0 : index
    %162 = vector.load %arg16[%c2_143, %c0_144] : memref<19x128xf32, #tpu.memory_space<vmem>>, vector<1x128xf32>
    %c0_145 = arith.constant 0 : index
    %c256_146 = arith.constant 256 : index
    %163 = vector.load %arg17[%c0_145, %c256_146] : memref<13x896xf32, #tpu.memory_space<vmem>>, vector<1x128xf32>
    tpu.vector_store %arg17[%c0_145, %c256_146], %162 {strides = array<i32>} : memref<13x896xf32, #tpu.memory_space<vmem>>, vector<1x128xf32>,
    %c3_147 = arith.constant 3 : index
    %c0_148 = arith.constant 0 : index
    %164 = vector.load %arg16[%c3_147, %c0_148] : memref<19x128xf32, #tpu.memory_space<vmem>>, vector<1x128xf32>
    %c0_149 = arith.constant 0 : index
    %c384_150 = arith.constant 384 : index
    %165 = vector.load %arg17[%c0_149, %c384_150] : memref<13x896xf32, #tpu.memory_space<vmem>>, vector<1x128xf32>
    tpu.vector_store %arg17[%c0_149, %c384_150], %164 {strides = array<i32>} : memref<13x896xf32, #tpu.memory_space<vmem>>, vector<1x128xf32>,
    %c4_151 = arith.constant 4 : index
    %c0_152 = arith.constant 0 : index
    %166 = vector.load %arg16[%c4_151, %c0_152] : memref<19x128xf32, #tpu.memory_space<vmem>>, vector<1x128xf32>
    %c0_153 = arith.constant 0 : index
    %c512_154 = arith.constant 512 : index
    %167 = vector.load %arg17[%c0_153, %c512_154] : memref<13x896xf32, #tpu.memory_space<vmem>>, vector<1x128xf32>
    tpu.vector_store %arg17[%c0_153, %c512_154], %166 {strides = array<i32>} : memref<13x896xf32, #tpu.memory_space<vmem>>, vector<1x128xf32>,
    %c5_155 = arith.constant 5 : index
    %c0_156 = arith.constant 0 : index
    %168 = vector.load %arg16[%c5_155, %c0_156] : memref<19x128xf32, #tpu.memory_space<vmem>>, vector<1x128xf32>
    %c0_157 = arith.constant 0 : index
    %c640_158 = arith.constant 640 : index
    %169 = vector.load %arg17[%c0_157, %c640_158] : memref<13x896xf32, #tpu.memory_space<vmem>>, vector<1x128xf32>
    tpu.vector_store %arg17[%c0_157, %c640_158], %168 {strides = array<i32>} : memref<13x896xf32, #tpu.memory_space<vmem>>, vector<1x128xf32>,
    %c6_159 = arith.constant 6 : index
    %c0_160 = arith.constant 0 : index
    %170 = vector.load %arg16[%c6_159, %c0_160] : memref<19x128xf32, #tpu.memory_space<vmem>>, vector<1x128xf32>
    %c0_161 = arith.constant 0 : index
    %c768_162 = arith.constant 768 : index
    %171 = vector.load %arg17[%c0_161, %c768_162] : memref<13x896xf32, #tpu.memory_space<vmem>>, vector<1x128xf32>
    tpu.vector_store %arg17[%c0_161, %c768_162], %170 {strides = array<i32>} : memref<13x896xf32, #tpu.memory_space<vmem>>, vector<1x128xf32>,
    %c0_163 = arith.constant 0 : index
    %c0_164 = arith.constant 0 : index
    %172 = vector.load %arg17[%c0_163, %c0_164] : memref<13x896xf32, #tpu.memory_space<vmem>>, vector<1x896xf32>
    %c2_165 = arith.constant 2 : index
    %c0_166 = arith.constant 0 : index
    %c0_167 = arith.constant 0 : index
    %173 = vector.load %arg6[%c2_165, %c0_166, %c0_167] : memref<3x896x256xf32, #tpu.memory_space<vmem>>, vector<1x896x256xf32>
    %174 = vector.shape_cast %173 : vector<1x896x256xf32> to vector<896x256xf32>
    %cst_168 = arith.constant dense<0.000000e+00> : vector<1x256xf32>
    %175 = tpu.matmul %172, %174, %cst_168 {dimension_numbers = #tpu.dot_dimension_numbers<[1], [0], [0], [1], [0, 0, 1, 1], [], []>} : vector<1x896xf32>, vector<896x256xf32>, vector<1x256xf32> -> vector<1x256xf32>
    %c2_169 = arith.constant 2 : index
    %c0_170 = arith.constant 0 : index
    %c0_171 = arith.constant 0 : index
    %176 = vector.load %arg7[%c2_169, %c0_170, %c0_171] : memref<3x1x256xf32, #tpu.memory_space<vmem>>, vector<1x1x256xf32>
    %177 = vector.shape_cast %176 : vector<1x1x256xf32> to vector<1x256xf32>
    %178 = arith.addf %175, %177 : vector<1x256xf32>
    %179 = vector.extract_strided_slice %178 {offsets = [0, 0], sizes = [1, 128], strides = [1, 1]} : vector<1x256xf32> to vector<1x128xf32>
    %180 = math.tanh %179 : vector<1x128xf32>
    %181 = vector.extract_strided_slice %178 {offsets = [0, 128], sizes = [1, 128], strides = [1, 1]} : vector<1x256xf32> to vector<1x128xf32>
    %cst_172 = arith.constant 0.000000e+00 : f32
    %182 = vector.broadcast %cst_172 : f32 to vector<1x128xf32>
    %183 = arith.subf %182, %181 : vector<1x128xf32>
    %184 = math.exp %183 : vector<1x128xf32>
    %cst_173 = arith.constant 1.000000e+00 : f32
    %185 = vector.broadcast %cst_173 : f32 to vector<1x128xf32>
    %186 = arith.addf %185, %184 : vector<1x128xf32>
    %cst_174 = arith.constant 1.000000e+00 : f32
    %187 = vector.broadcast %cst_174 : f32 to vector<1x128xf32>
    %188 = arith.divf %187, %186 : vector<1x128xf32>
    %189 = arith.mulf %180, %188 : vector<1x128xf32>
    %c0_175 = arith.constant 0 : index
    %c0_176 = arith.constant 0 : index
    %c0_177 = arith.constant 0 : index
    %190 = vector.load %arg14[%c0_175, %c0_176, %c0_177] : memref<1x1x128xf32, #tpu.memory_space<vmem>>, vector<1x1x128xf32>
    %191 = vector.shape_cast %190 : vector<1x1x128xf32> to vector<1x128xf32>
    %192 = vector.shape_cast %189 : vector<1x128xf32> to vector<1x1x128xf32>
    tpu.vector_store %arg14[%c0_175, %c0_176, %c0_177], %192 {strides = array<i32>} : memref<1x1x128xf32, #tpu.memory_space<vmem>>, vector<1x1x128xf32>,
    %c2_178 = arith.constant 2 : index
    %c0_179 = arith.constant 0 : index
    %c0_180 = arith.constant 0 : index
    %193 = vector.load %arg8[%c2_178, %c0_179, %c0_180] : memref<3x128x128xf32, #tpu.memory_space<vmem>>, vector<1x128x128xf32>
    %194 = vector.shape_cast %193 : vector<1x128x128xf32> to vector<128x128xf32>
    %cst_181 = arith.constant dense<0.000000e+00> : vector<1x128xf32>
    %195 = tpu.matmul %189, %194, %cst_181 {dimension_numbers = #tpu.dot_dimension_numbers<[1], [0], [0], [1], [0, 0, 1, 1], [], []>} : vector<1x128xf32>, vector<128x128xf32>, vector<1x128xf32> -> vector<1x128xf32>
    %c2_182 = arith.constant 2 : index
    %c0_183 = arith.constant 0 : index
    %c0_184 = arith.constant 0 : index
    %196 = vector.load %arg9[%c2_182, %c0_183, %c0_184] : memref<3x1x128xf32, #tpu.memory_space<vmem>>, vector<1x1x128xf32>
    %197 = vector.shape_cast %196 : vector<1x1x128xf32> to vector<1x128xf32>
    %198 = arith.addf %195, %197 : vector<1x128xf32>
    %c6_185 = arith.constant 6 : index
    %c0_186 = arith.constant 0 : index
    %199 = vector.load %arg16[%c6_185, %c0_186] : memref<19x128xf32, #tpu.memory_space<vmem>>, vector<1x128xf32>
    %200 = arith.addf %198, %199 : vector<1x128xf32>
    %cst_187 = arith.constant dense<0.000000e+00> : vector<1xf32>
    %201 = vector.multi_reduction <add>, %200, %cst_187 [1] : vector<1x128xf32> to vector<1xf32>
    %202 = vector.shape_cast %201 : vector<1xf32> to vector<1x1xf32>
    %cst_188 = arith.constant dense<0.000000e+00> : vector<1xf32>
    %203 = vector.multi_reduction <add>, %202, %cst_188 [0] : vector<1x1xf32> to vector<1xf32>
    %204 = vector.shape_cast %203 : vector<1xf32> to vector<1x1xf32>
    %cst_189 = arith.constant 7.812500e-03 : f32
    %205 = vector.broadcast %cst_189 : f32 to vector<1x1xf32>
    %206 = arith.mulf %204, %205 : vector<1x1xf32>
    %207 = vector.broadcast %206 : vector<1x1xf32> to vector<1x128xf32>
    %208 = arith.subf %200, %207 : vector<1x128xf32>
    %209 = arith.mulf %208, %208 : vector<1x128xf32>
    %cst_190 = arith.constant dense<0.000000e+00> : vector<1xf32>
    %210 = vector.multi_reduction <add>, %209, %cst_190 [1] : vector<1x128xf32> to vector<1xf32>
    %211 = vector.shape_cast %210 : vector<1xf32> to vector<1x1xf32>
    %cst_191 = arith.constant dense<0.000000e+00> : vector<1xf32>
    %212 = vector.multi_reduction <add>, %211, %cst_191 [0] : vector<1x1xf32> to vector<1xf32>
    %213 = vector.shape_cast %212 : vector<1xf32> to vector<1x1xf32>
    %cst_192 = arith.constant 7.812500e-03 : f32
    %214 = vector.broadcast %cst_192 : f32 to vector<1x1xf32>
    %215 = arith.mulf %213, %214 : vector<1x1xf32>
    %cst_193 = arith.constant 9.99999974E-6 : f32
    %216 = vector.broadcast %cst_193 : f32 to vector<1x1xf32>
    %217 = arith.addf %215, %216 : vector<1x1xf32>
    %218 = math.rsqrt %217 : vector<1x1xf32>
    %219 = vector.broadcast %218 : vector<1x1xf32> to vector<1x128xf32>
    %220 = arith.mulf %208, %219 : vector<1x128xf32>
    %c2_194 = arith.constant 2 : index
    %c0_195 = arith.constant 0 : index
    %c0_196 = arith.constant 0 : index
    %221 = vector.load %arg10[%c2_194, %c0_195, %c0_196] : memref<3x13x128xf32, #tpu.memory_space<vmem>>, vector<1x13x128xf32>
    %222 = vector.shape_cast %221 : vector<1x13x128xf32> to vector<13x128xf32>
    %223 = vector.extract_strided_slice %222 {offsets = [0, 0], sizes = [1, 128], strides = [1, 1]} : vector<13x128xf32> to vector<1x128xf32>
    %224 = arith.mulf %220, %223 : vector<1x128xf32>
    %c2_197 = arith.constant 2 : index
    %c0_198 = arith.constant 0 : index
    %c0_199 = arith.constant 0 : index
    %225 = vector.load %arg11[%c2_197, %c0_198, %c0_199] : memref<3x13x128xf32, #tpu.memory_space<vmem>>, vector<1x13x128xf32>
    %226 = vector.shape_cast %225 : vector<1x13x128xf32> to vector<13x128xf32>
    %227 = vector.extract_strided_slice %226 {offsets = [0, 0], sizes = [1, 128], strides = [1, 1]} : vector<13x128xf32> to vector<1x128xf32>
    %228 = arith.addf %224, %227 : vector<1x128xf32>
    %c0_200 = arith.constant 0 : index
    %c0_201 = arith.constant 0 : index
    %229 = vector.load %arg16[%c0_200, %c0_201] : memref<19x128xf32, #tpu.memory_space<vmem>>, vector<1x128xf32>
    tpu.vector_store %arg16[%c0_200, %c0_201], %228 {strides = array<i32>} : memref<19x128xf32, #tpu.memory_space<vmem>>, vector<1x128xf32>,
    %c0_202 = arith.constant 0 : index
    %c0_203 = arith.constant 0 : index
    %c0_204 = arith.constant 0 : index
    %230 = vector.load %arg15[%c0_202, %c0_203, %c0_204] : memref<1x1x128xf32, #tpu.memory_space<vmem>>, vector<1x1x128xf32>
    %231 = vector.shape_cast %230 : vector<1x1x128xf32> to vector<1x128xf32>
    %232 = vector.shape_cast %228 : vector<1x128xf32> to vector<1x1x128xf32>
    tpu.vector_store %arg15[%c0_202, %c0_203, %c0_204], %232 {strides = array<i32>} : memref<1x1x128xf32, #tpu.memory_space<vmem>>, vector<1x1x128xf32>,
    return
  }
  func.func @transform_0(%arg0: i32) -> (i32, i32, i32) {
    %c0_i32 = arith.constant 0 : i32
    %c0_i32_0 = arith.constant 0 : i32
    %c0_i32_1 = arith.constant 0 : i32
    return %arg0, %c0_i32, %c0_i32_0 : i32, i32, i32
  }
  func.func @transform_1(%arg0: i32) -> (i32, i32) {
    %c0_i32 = arith.constant 0 : i32
    %c0_i32_0 = arith.constant 0 : i32
    %c0_i32_1 = arith.constant 0 : i32
    return %c0_i32, %c0_i32_0 : i32, i32
  }
  func.func @transform_2(%arg0: i32) -> (i32, i32) {
    %c0_i32 = arith.constant 0 : i32
    %c0_i32_0 = arith.constant 0 : i32
    %c0_i32_1 = arith.constant 0 : i32
    return %c0_i32, %c0_i32_0 : i32, i32
  }
  func.func @transform_3(%arg0: i32) -> (i32, i32) {
    %c0_i32 = arith.constant 0 : i32
    %c0_i32_0 = arith.constant 0 : i32
    %c0_i32_1 = arith.constant 0 : i32
    return %c0_i32, %c0_i32_0 : i32, i32
  }
  func.func @transform_4(%arg0: i32) -> (i32, i32) {
    %c0_i32 = arith.constant 0 : i32
    %c0_i32_0 = arith.constant 0 : i32
    %c0_i32_1 = arith.constant 0 : i32
    return %c0_i32, %c0_i32_0 : i32, i32
  }
  func.func @transform_5(%arg0: i32) -> (i32, i32, i32) {
    %c0_i32 = arith.constant 0 : i32
    %c0_i32_0 = arith.constant 0 : i32
    %c0_i32_1 = arith.constant 0 : i32
    %c0_i32_2 = arith.constant 0 : i32
    return %c0_i32, %c0_i32_0, %c0_i32_1 : i32, i32, i32
  }
  func.func @transform_6(%arg0: i32) -> (i32, i32, i32) {
    %c0_i32 = arith.constant 0 : i32
    %c0_i32_0 = arith.constant 0 : i32
    %c0_i32_1 = arith.constant 0 : i32
    %c0_i32_2 = arith.constant 0 : i32
    return %c0_i32, %c0_i32_0, %c0_i32_1 : i32, i32, i32
  }
  func.func @transform_7(%arg0: i32) -> (i32, i32, i32) {
    %c0_i32 = arith.constant 0 : i32
    %c0_i32_0 = arith.constant 0 : i32
    %c0_i32_1 = arith.constant 0 : i32
    %c0_i32_2 = arith.constant 0 : i32
    return %c0_i32, %c0_i32_0, %c0_i32_1 : i32, i32, i32
  }
  func.func @transform_8(%arg0: i32) -> (i32, i32, i32) {
    %c0_i32 = arith.constant 0 : i32
    %c0_i32_0 = arith.constant 0 : i32
    %c0_i32_1 = arith.constant 0 : i32
    %c0_i32_2 = arith.constant 0 : i32
    return %c0_i32, %c0_i32_0, %c0_i32_1 : i32, i32, i32
  }
  func.func @transform_9(%arg0: i32) -> (i32, i32, i32) {
    %c0_i32 = arith.constant 0 : i32
    %c0_i32_0 = arith.constant 0 : i32
    %c0_i32_1 = arith.constant 0 : i32
    %c0_i32_2 = arith.constant 0 : i32
    return %c0_i32, %c0_i32_0, %c0_i32_1 : i32, i32, i32
  }
  func.func @transform_10(%arg0: i32) -> (i32, i32, i32) {
    %c0_i32 = arith.constant 0 : i32
    %c0_i32_0 = arith.constant 0 : i32
    %c0_i32_1 = arith.constant 0 : i32
    %c0_i32_2 = arith.constant 0 : i32
    return %c0_i32, %c0_i32_0, %c0_i32_1 : i32, i32, i32
  }
  func.func @transform_11(%arg0: i32) -> (i32, i32, i32) {
    %c0_i32 = arith.constant 0 : i32
    %c0_i32_0 = arith.constant 0 : i32
    %c0_i32_1 = arith.constant 0 : i32
    return %arg0, %c0_i32, %c0_i32_0 : i32, i32, i32
  }
  func.func @transform_12(%arg0: i32) -> (i32, i32, i32) {
    %c0_i32 = arith.constant 0 : i32
    %c0_i32_0 = arith.constant 0 : i32
    %c0_i32_1 = arith.constant 0 : i32
    return %arg0, %c0_i32, %c0_i32_0 : i32, i32, i32
  }
  func.func @transform_13(%arg0: i32) -> (i32, i32, i32) {
    %c0_i32 = arith.constant 0 : i32
    %c0_i32_0 = arith.constant 0 : i32
    %c0_i32_1 = arith.constant 0 : i32
    return %arg0, %c0_i32, %c0_i32_0 : i32, i32, i32
  }
  func.func @transform_14(%arg0: i32) -> (i32, i32, i32) {
    %c0_i32 = arith.constant 0 : i32
    %c0_i32_0 = arith.constant 0 : i32
    %c0_i32_1 = arith.constant 0 : i32
    return %arg0, %c0_i32, %c0_i32_0 : i32, i32, i32
  }
}

module attributes {stable_mosaic.version = 11 : i64} {
  func.func @_decode_loss_kernel(%arg0: memref<16x390xf32, #tpu.memory_space<vmem>>, %arg1: memref<390x32xf32, #tpu.memory_space<vmem>>, %arg2: memref<1x32xf32, #tpu.memory_space<vmem>>, %arg3: memref<32x12xf32, #tpu.memory_space<vmem>>, %arg4: memref<1x12xf32, #tpu.memory_space<vmem>>, %arg5: memref<8x8xf32, #tpu.memory_space<vmem>>, %arg6: memref<16x12xf32, #tpu.memory_space<vmem>>, %arg7: memref<1x1xf32, #tpu.memory_space<vmem>>, %arg8: memref<1x1xf32, #tpu.memory_space<vmem>>) attributes {dimension_semantics = [], scalar_prefetch = 0 : i64, scratch_operands = 0 : i64, tpu.core_type = #tpu.core_type<tc>} {
    %c0 = arith.constant 0 : index
    %c0_0 = arith.constant 0 : index
    %0 = vector.load %arg0[%c0, %c0_0] : memref<16x390xf32, #tpu.memory_space<vmem>>, vector<16x390xf32>
    %c0_1 = arith.constant 0 : index
    %c0_2 = arith.constant 0 : index
    %1 = vector.load %arg1[%c0_1, %c0_2] : memref<390x32xf32, #tpu.memory_space<vmem>>, vector<390x32xf32>
    %cst = arith.constant dense<0.000000e+00> : vector<16x32xf32>
    %2 = tpu.matmul %0, %1, %cst {dimension_numbers = #tpu.dot_dimension_numbers<[1], [0], [0], [1], [0, 0, 1, 1], [], []>} : vector<16x390xf32>, vector<390x32xf32>, vector<16x32xf32> -> vector<16x32xf32>
    %c0_3 = arith.constant 0 : index
    %c0_4 = arith.constant 0 : index
    %3 = vector.load %arg2[%c0_3, %c0_4] : memref<1x32xf32, #tpu.memory_space<vmem>>, vector<1x32xf32>
    %4 = vector.broadcast %3 : vector<1x32xf32> to vector<16x32xf32>
    %5 = arith.addf %2, %4 : vector<16x32xf32>
    %c0_5 = arith.constant 0 : index
    %c0_6 = arith.constant 0 : index
    %6 = vector.load %arg5[%c0_5, %c0_6] : memref<8x8xf32, #tpu.memory_space<vmem>>, vector<8x8xf32>
    %cst_7 = arith.constant 0.000000e+00 : f32
    %7 = vector.broadcast %cst_7 : f32 to vector<1x1xf32>
    %8 = vector.extract_strided_slice %5 {offsets = [0, 0], sizes = [8, 32], strides = [1, 1]} : vector<16x32xf32> to vector<8x32xf32>
    %9 = tpu.transpose %8, [1, 0] : vector<8x32xf32> -> vector<32x8xf32>
    %cst_8 = arith.constant dense<0.000000e+00> : vector<8x8xf32>
    %10 = tpu.matmul %8, %9, %cst_8 {dimension_numbers = #tpu.dot_dimension_numbers<[1], [0], [0], [1], [0, 0, 1, 1], [], []>} : vector<8x32xf32>, vector<32x8xf32>, vector<8x8xf32> -> vector<8x8xf32>
    %cst_9 = arith.constant 0.000000e+00 : f32
    %11 = vector.broadcast %cst_9 : f32 to vector<8x8xf32>
    %12 = arith.maximumf %10, %11 : vector<8x8xf32>
    %13 = arith.mulf %10, %6 : vector<8x8xf32>
    %14 = arith.subf %12, %13 : vector<8x8xf32>
    %15 = math.absf %10 : vector<8x8xf32>
    %cst_10 = arith.constant 0.000000e+00 : f32
    %16 = vector.broadcast %cst_10 : f32 to vector<8x8xf32>
    %17 = arith.subf %16, %15 : vector<8x8xf32>
    %18 = math.exp %17 : vector<8x8xf32>
    %cst_11 = arith.constant 1.000000e+00 : f32
    %19 = vector.broadcast %cst_11 : f32 to vector<8x8xf32>
    %20 = arith.addf %19, %18 : vector<8x8xf32>
    %21 = math.log %20 : vector<8x8xf32>
    %22 = arith.addf %14, %21 : vector<8x8xf32>
    %cst_12 = arith.constant dense<0.000000e+00> : vector<8xf32>
    %23 = vector.multi_reduction <add>, %22, %cst_12 [1] : vector<8x8xf32> to vector<8xf32>
    %24 = vector.shape_cast %23 : vector<8xf32> to vector<8x1xf32>
    %cst_13 = arith.constant dense<0.000000e+00> : vector<1xf32>
    %25 = vector.multi_reduction <add>, %24, %cst_13 [0] : vector<8x1xf32> to vector<1xf32>
    %26 = vector.shape_cast %25 : vector<1xf32> to vector<1x1xf32>
    %27 = arith.addf %7, %26 : vector<1x1xf32>
    %28 = vector.extract_strided_slice %5 {offsets = [8, 0], sizes = [8, 32], strides = [1, 1]} : vector<16x32xf32> to vector<8x32xf32>
    %29 = tpu.transpose %28, [1, 0] : vector<8x32xf32> -> vector<32x8xf32>
    %cst_14 = arith.constant dense<0.000000e+00> : vector<8x8xf32>
    %30 = tpu.matmul %28, %29, %cst_14 {dimension_numbers = #tpu.dot_dimension_numbers<[1], [0], [0], [1], [0, 0, 1, 1], [], []>} : vector<8x32xf32>, vector<32x8xf32>, vector<8x8xf32> -> vector<8x8xf32>
    %cst_15 = arith.constant 0.000000e+00 : f32
    %31 = vector.broadcast %cst_15 : f32 to vector<8x8xf32>
    %32 = arith.maximumf %30, %31 : vector<8x8xf32>
    %33 = arith.mulf %30, %6 : vector<8x8xf32>
    %34 = arith.subf %32, %33 : vector<8x8xf32>
    %35 = math.absf %30 : vector<8x8xf32>
    %cst_16 = arith.constant 0.000000e+00 : f32
    %36 = vector.broadcast %cst_16 : f32 to vector<8x8xf32>
    %37 = arith.subf %36, %35 : vector<8x8xf32>
    %38 = math.exp %37 : vector<8x8xf32>
    %cst_17 = arith.constant 1.000000e+00 : f32
    %39 = vector.broadcast %cst_17 : f32 to vector<8x8xf32>
    %40 = arith.addf %39, %38 : vector<8x8xf32>
    %41 = math.log %40 : vector<8x8xf32>
    %42 = arith.addf %34, %41 : vector<8x8xf32>
    %cst_18 = arith.constant dense<0.000000e+00> : vector<8xf32>
    %43 = vector.multi_reduction <add>, %42, %cst_18 [1] : vector<8x8xf32> to vector<8xf32>
    %44 = vector.shape_cast %43 : vector<8xf32> to vector<8x1xf32>
    %cst_19 = arith.constant dense<0.000000e+00> : vector<1xf32>
    %45 = vector.multi_reduction <add>, %44, %cst_19 [0] : vector<8x1xf32> to vector<1xf32>
    %46 = vector.shape_cast %45 : vector<1xf32> to vector<1x1xf32>
    %47 = arith.addf %27, %46 : vector<1x1xf32>
    %cst_20 = arith.constant 7.812500e-03 : f32
    %48 = vector.broadcast %cst_20 : f32 to vector<1x1xf32>
    %49 = arith.mulf %47, %48 : vector<1x1xf32>
    %c0_21 = arith.constant 0 : index
    %c0_22 = arith.constant 0 : index
    %50 = vector.load %arg7[%c0_21, %c0_22] : memref<1x1xf32, #tpu.memory_space<vmem>>, vector<1x1xf32>
    tpu.vector_store %arg7[%c0_21, %c0_22], %49 {strides = array<i32>} : memref<1x1xf32, #tpu.memory_space<vmem>>, vector<1x1xf32>,
    %c0_23 = arith.constant 0 : index
    %c0_24 = arith.constant 0 : index
    %51 = vector.load %arg3[%c0_23, %c0_24] : memref<32x12xf32, #tpu.memory_space<vmem>>, vector<32x12xf32>
    %cst_25 = arith.constant dense<0.000000e+00> : vector<16x12xf32>
    %52 = tpu.matmul %5, %51, %cst_25 {dimension_numbers = #tpu.dot_dimension_numbers<[1], [0], [0], [1], [0, 0, 1, 1], [], []>} : vector<16x32xf32>, vector<32x12xf32>, vector<16x12xf32> -> vector<16x12xf32>
    %c0_26 = arith.constant 0 : index
    %c0_27 = arith.constant 0 : index
    %53 = vector.load %arg4[%c0_26, %c0_27] : memref<1x12xf32, #tpu.memory_space<vmem>>, vector<1x12xf32>
    %54 = vector.broadcast %53 : vector<1x12xf32> to vector<16x12xf32>
    %55 = arith.addf %52, %54 : vector<16x12xf32>
    %c0_28 = arith.constant 0 : index
    %c0_29 = arith.constant 0 : index
    %56 = vector.load %arg6[%c0_28, %c0_29] : memref<16x12xf32, #tpu.memory_space<vmem>>, vector<16x12xf32>
    %57 = arith.subf %55, %56 : vector<16x12xf32>
    %58 = math.absf %57 : vector<16x12xf32>
    %cst_30 = arith.constant dense<0.000000e+00> : vector<16xf32>
    %59 = vector.multi_reduction <add>, %58, %cst_30 [1] : vector<16x12xf32> to vector<16xf32>
    %60 = vector.shape_cast %59 : vector<16xf32> to vector<16x1xf32>
    %cst_31 = arith.constant dense<0.000000e+00> : vector<1xf32>
    %61 = vector.multi_reduction <add>, %60, %cst_31 [0] : vector<16x1xf32> to vector<1xf32>
    %62 = vector.shape_cast %61 : vector<1xf32> to vector<1x1xf32>
    %cst_32 = arith.constant 0.00520833349 : f32
    %63 = vector.broadcast %cst_32 : f32 to vector<1x1xf32>
    %64 = arith.mulf %62, %63 : vector<1x1xf32>
    %c0_33 = arith.constant 0 : index
    %c0_34 = arith.constant 0 : index
    %65 = vector.load %arg8[%c0_33, %c0_34] : memref<1x1xf32, #tpu.memory_space<vmem>>, vector<1x1xf32>
    tpu.vector_store %arg8[%c0_33, %c0_34], %64 {strides = array<i32>} : memref<1x1xf32, #tpu.memory_space<vmem>>, vector<1x1xf32>,
    return
  }
}

</mosaic_0001>

<llo_original>
// kernel: _lambda_.3
$region0: #{_lambda_.3}
  #allocation0 [shape = 'u32[]', space=smem, size = 0x4, offset = 0x4, fixed_abs, tag = 'smem constant byte address 0x4 - core index']
  #allocation1 [shape = 'u32[144,128]{1,0:T(1,128)}', space=vmem, size = 0x12000, scoped, tag = 'internal scratch']
  %s0 = inlined_call_operand.vmem [shape: f32[8,16], index: 0, kind: input, shape index: {}]
  %s1 = inlined_call_operand.vmem [shape: f32[16,16], index: 1, kind: input, shape index: {}]
  %s2 = inlined_call_operand.vmem [shape: f32[1,16], index: 2, kind: input, shape index: {}]
  %s3 = inlined_call_operand.vmem [shape: f32[8,16], index: 3, kind: input, shape index: {}]
  %s4 = inlined_call_operand.vmem [shape: f32[16,16], index: 4, kind: input, shape index: {}]
  %s5 = inlined_call_operand.vmem [shape: f32[1,16], index: 5, kind: input, shape index: {}]
  %s6 = inlined_call_operand.vmem [shape: f32[8,8], index: 6, kind: output, shape index: {}]
  %s7 = sld [smem:[#allocation0]]
  $region34: #{_lambda_.3} parent=0
    _
  %s9 = ssub.s32 1, %s7
  %s10 = scalar_select 0, %s9, %s7
  // Predicated region
  $region2: #{_lambda_.3} parent=0 // pred_check
    _
  $region3: #{_lambda_.3} parent=0 // pred_check_branch
    %12 = sbr.rel (0) target = $region5
  $region4: #{_lambda_.3} parent=0 // pred_region
    _
  $region5: #{_lambda_.3} parent=0 // pred_fallthru
    _
  // Predicated region
  $region6: #{_lambda_.3} parent=0 // pred_check
    _
  $region7: #{_lambda_.3} parent=0 // pred_check_branch
    %14 = sbr.rel (0) target = $region9
  $region8: #{_lambda_.3} parent=0 // pred_region
    _
  $region9: #{_lambda_.3} parent=0 // pred_fallthru
    _
  // Predicated region
  $region10: #{_lambda_.3} parent=0 // pred_check
    _
  $region11: #{_lambda_.3} parent=0 // pred_check_branch
    %16 = sbr.rel (0) target = $region13
  $region12: #{_lambda_.3} parent=0 // pred_region
    _
  $region13: #{_lambda_.3} parent=0 // pred_fallthru
    _
  // Predicated region
  $region14: #{_lambda_.3} parent=0 // pred_check
    _
  $region15: #{_lambda_.3} parent=0 // pred_check_branch
    %18 = sbr.rel (0) target = $region17
  $region16: #{_lambda_.3} parent=0 // pred_region
    _
  $region17: #{_lambda_.3} parent=0 // pred_fallthru
    _
  // Predicated region
  $region18: #{_lambda_.3} parent=0 // pred_check
    _
  $region19: #{_lambda_.3} parent=0 // pred_check_branch
    %20 = sbr.rel (0) target = $region21
  $region20: #{_lambda_.3} parent=0 // pred_region
    _
  $region21: #{_lambda_.3} parent=0 // pred_fallthru
    _
  // Predicated region
  $region22: #{_lambda_.3} parent=0 // pred_check
    _
  $region23: #{_lambda_.3} parent=0 // pred_check_branch
    %22 = sbr.rel (0) target = $region25
  $region24: #{_lambda_.3} parent=0 // pred_region
    _
  $region25: #{_lambda_.3} parent=0 // pred_fallthru
    _
  %v23 = vld [vmem:[%s0] sm:$0xff]
  %v24 = vld [vmem:[%s1] sm:$0xff]
  %v25 = vld [vmem:[%s1 + $0x8] sm:$0xff]
  %v26 = vld [vmem:[%s2] sm:$0x1]
  %v28 = vlaneseq
  %v29 = vshrl.u32 %v28, 7
  %v30 = vsub.s32 0, %v29
  %v31 = vrot.slane %v26, %v30
  %vm33 = vcmask 130048
  %v35 = vsel %vm33, %v23, 0
  %37 = vmatprep.subr.mxu0 0.0
  %38 = vmatpush1.msra.mxu0 %v24
  %39 = vmatprep.subr.mxu0 0.0
  %40 = vmatpush1.msra.mxu0 %v25
  %41 = vmatprep.subr.mxu0 0.0
  %42 = vmatpush1.msra.mxu0 0.0
  %43 = vmatprep.subr.mxu0 0.0
  %44 = vmatpush1.msra.mxu0 0.0
  %45 = vmatprep.subr.mxu0 0.0
  %46 = vmatpush1.msra.mxu0 0.0
  %47 = vmatprep.subr.mxu0 0.0
  %48 = vmatpush1.msra.mxu0 0.0
  %49 = vmatprep.subr.mxu0 0.0
  %50 = vmatpush1.msra.mxu0 0.0
  %51 = vmatprep.subr.mxu0 0.0
  %52 = vmatpush1.msra.mxu0 0.0
  %53 = vmatprep.subr.mxu0 0.0
  %54 = vmatpush1.msra.mxu0 0.0
  %55 = vmatprep.subr.mxu0 0.0
  %56 = vmatpush1.msra.mxu0 0.0
  %57 = vmatprep.subr.mxu0 0.0
  %58 = vmatpush1.msra.mxu0 0.0
  %59 = vmatprep.subr.mxu0 0.0
  %60 = vmatpush1.msra.mxu0 0.0
  %61 = vmatprep.subr.mxu0 0.0
  %62 = vmatpush1.msra.mxu0 0.0
  %63 = vmatprep.subr.mxu0 0.0
  %64 = vmatpush1.msra.mxu0 0.0
  %65 = vmatprep.subr.mxu0 0.0
  %66 = vmatpush1.msra.mxu0 0.0
  %67 = vmatprep.subr.mxu0 0.0
  %68 = vmatpush1.msra.mxu0 0.0
  %69 = vmatprep.subr.mxu0 0.0
  %70 = vmatpush1.msra.mxu0 0.0
  %71 = vmatprep.subr.mxu0 0.0
  %72 = vmatpush1.msra.mxu0 0.0
  %73 = vmatprep.subr.mxu0 0.0
  %74 = vmatpush1.msra.mxu0 0.0
  %75 = vmatprep.subr.mxu0 0.0
  %76 = vmatpush1.msra.mxu0 0.0
  %77 = vmatprep.subr.mxu0 0.0
  %78 = vmatpush1.msra.mxu0 0.0
  %79 = vmatprep.subr.mxu0 0.0
  %80 = vmatpush1.msra.mxu0 0.0
  %81 = vmatprep.subr.mxu0 0.0
  %82 = vmatpush1.msra.mxu0 0.0
  %83 = vmatprep.subr.mxu0 0.0
  %84 = vmatpush1.msra.mxu0 0.0
  %85 = vmatprep.subr.mxu0 0.0
  %86 = vmatpush1.msra.mxu0 0.0
  %87 = vmatprep.subr.mxu0 0.0
  %88 = vmatpush1.msra.mxu0 0.0
  %89 = vmatprep.subr.mxu0 0.0
  %90 = vmatpush1.msra.mxu0 0.0
  %91 = vmatprep.subr.mxu0 0.0
  %92 = vmatpush1.msra.mxu0 0.0
  %93 = vmatprep.subr.mxu0 0.0
  %94 = vmatpush1.msra.mxu0 0.0
  %95 = vmatprep.subr.mxu0 0.0
  %96 = vmatpush1.msra.mxu0 0.0
  %97 = vmatprep.subr.mxu0 0.0
  %98 = vmatpush1.msra.mxu0 0.0
  %99 = vmatprep.subr.mxu0 0.0
  %100 = vmatpush1.msra.mxu0 0.0
  %101 = vmatprep.mubr.f32.mxu0 0.0
  %102 = vmatmul.mubr.f32.gmra.mrb[0].mxu0 %v35
  %v103 = vpop.f32.mrb[0].mxu0
  %v104 = vadd.f32 %v31, %v103
  %v105 = vpop.f32.mrb[0].mxu0
  %106 = vdwg.mxu0
  %v107 = vmul.f32 %v104, 3.0
  %v108 = vtanh.pop %v107
  %v109 = vld [vmem:[%s3] sm:$0xff]
  %v110 = vld [vmem:[%s4] sm:$0xff]
  %v111 = vld [vmem:[%s4 + $0x8] sm:$0xff]
  %v112 = vld [vmem:[%s5] sm:$0x1]
  %v114 = vlaneseq
  %v115 = vshrl.u32 %v114, 7
  %v116 = vsub.s32 0, %v115
  %v117 = vrot.slane %v112, %v116
  %v120 = vsel %vm33, %v109, 0
  %122 = vmatprep.subr.mxu0 0.0
  %123 = vmatpush1.msra.mxu0 %v110
  %124 = vmatprep.subr.mxu0 0.0
  %125 = vmatpush1.msra.mxu0 %v111
  %126 = vmatprep.subr.mxu0 0.0
  %127 = vmatpush1.msra.mxu0 0.0
  %128 = vmatprep.subr.mxu0 0.0
  %129 = vmatpush1.msra.mxu0 0.0
  %130 = vmatprep.subr.mxu0 0.0
  %131 = vmatpush1.msra.mxu0 0.0
  %132 = vmatprep.subr.mxu0 0.0
  %133 = vmatpush1.msra.mxu0 0.0
  %134 = vmatprep.subr.mxu0 0.0
  %135 = vmatpush1.msra.mxu0 0.0
  %136 = vmatprep.subr.mxu0 0.0
  %137 = vmatpush1.msra.mxu0 0.0
  %138 = vmatprep.subr.mxu0 0.0
  %139 = vmatpush1.msra.mxu0 0.0
  %140 = vmatprep.subr.mxu0 0.0
  %141 = vmatpush1.msra.mxu0 0.0
  %142 = vmatprep.subr.mxu0 0.0
  %143 = vmatpush1.msra.mxu0 0.0
  %144 = vmatprep.subr.mxu0 0.0
  %145 = vmatpush1.msra.mxu0 0.0
  %146 = vmatprep.subr.mxu0 0.0
  %147 = vmatpush1.msra.mxu0 0.0
  %148 = vmatprep.subr.mxu0 0.0
  %149 = vmatpush1.msra.mxu0 0.0
  %150 = vmatprep.subr.mxu0 0.0
  %151 = vmatpush1.msra.mxu0 0.0
  %152 = vmatprep.subr.mxu0 0.0
  %153 = vmatpush1.msra.mxu0 0.0
  %154 = vmatprep.subr.mxu0 0.0
  %155 = vmatpush1.msra.mxu0 0.0
  %156 = vmatprep.subr.mxu0 0.0
  %157 = vmatpush1.msra.mxu0 0.0
  %158 = vmatprep.subr.mxu0 0.0
  %159 = vmatpush1.msra.mxu0 0.0
  %160 = vmatprep.subr.mxu0 0.0
  %161 = vmatpush1.msra.mxu0 0.0
  %162 = vmatprep.subr.mxu0 0.0
  %163 = vmatpush1.msra.mxu0 0.0
  %164 = vmatprep.subr.mxu0 0.0
  %165 = vmatpush1.msra.mxu0 0.0
  %166 = vmatprep.subr.mxu0 0.0
  %167 = vmatpush1.msra.mxu0 0.0
  %168 = vmatprep.subr.mxu0 0.0
  %169 = vmatpush1.msra.mxu0 0.0
  %170 = vmatprep.subr.mxu0 0.0
  %171 = vmatpush1.msra.mxu0 0.0
  %172 = vmatprep.subr.mxu0 0.0
  %173 = vmatpush1.msra.mxu0 0.0
  %174 = vmatprep.subr.mxu0 0.0
  %175 = vmatpush1.msra.mxu0 0.0
  %176 = vmatprep.subr.mxu0 0.0
  %177 = vmatpush1.msra.mxu0 0.0
  %178 = vmatprep.subr.mxu0 0.0
  %179 = vmatpush1.msra.mxu0 0.0
  %180 = vmatprep.subr.mxu0 0.0
  %181 = vmatpush1.msra.mxu0 0.0
  %182 = vmatprep.subr.mxu0 0.0
  %183 = vmatpush1.msra.mxu0 0.0
  %184 = vmatprep.subr.mxu0 0.0
  %185 = vmatpush1.msra.mxu0 0.0
  %186 = vmatprep.mubr.f32.mxu0 0.0
  %187 = vmatmul.mubr.f32.gmra.mrb[0].mxu0 %v120
  %v188 = vpop.f32.mrb[0].mxu0
  %v189 = vadd.f32 %v117, %v188
  %v190 = vpop.f32.mrb[0].mxu0
  %191 = vdwg.mxu0
  %v192 = vmul.f32 %v189, 3.0
  %v193 = vtanh.pop %v192
  %v195 = vsel %vm33, %v108, 0
  %v198 = vsel %vm33, %v193, 0
  %200 = vmatprep.subr.mxu0 0.0
  %201 = vmatpush1.xpose.msra.mxu0 %v198
  %202 = vmatprep.subr.mxu0 0.0
  %203 = vmatpush1.xpose.msra.mxu0 0.0
  %204 = vmatprep.subr.mxu0 0.0
  %205 = vmatpush1.xpose.msra.mxu0 0.0
  %206 = vmatprep.subr.mxu0 0.0
  %207 = vmatpush1.xpose.msra.mxu0 0.0
  %208 = vmatprep.subr.mxu0 0.0
  %209 = vmatpush1.xpose.msra.mxu0 0.0
  %210 = vmatprep.subr.mxu0 0.0
  %211 = vmatpush1.xpose.msra.mxu0 0.0
  %212 = vmatprep.subr.mxu0 0.0
  %213 = vmatpush1.xpose.msra.mxu0 0.0
  %214 = vmatprep.subr.mxu0 0.0
  %215 = vmatpush1.xpose.msra.mxu0 0.0
  %216 = vmatprep.subr.mxu0 0.0
  %217 = vmatpush1.xpose.msra.mxu0 0.0
  %218 = vmatprep.subr.mxu0 0.0
  %219 = vmatpush1.xpose.msra.mxu0 0.0
  %220 = vmatprep.subr.mxu0 0.0
  %221 = vmatpush1.xpose.msra.mxu0 0.0
  %222 = vmatprep.subr.mxu0 0.0
  %223 = vmatpush1.xpose.msra.mxu0 0.0
  %224 = vmatprep.subr.mxu0 0.0
  %225 = vmatpush1.xpose.msra.mxu0 0.0
  %226 = vmatprep.subr.mxu0 0.0
  %227 = vmatpush1.xpose.msra.mxu0 0.0
  %228 = vmatprep.subr.mxu0 0.0
  %229 = vmatpush1.xpose.msra.mxu0 0.0
  %230 = vmatprep.subr.mxu0 0.0
  %231 = vmatpush1.xpose.msra.mxu0 0.0
  %232 = vmatprep.subr.mxu0 0.0
  %233 = vmatpush1.xpose.msra.mxu0 0.0
  %234 = vmatprep.subr.mxu0 0.0
  %235 = vmatpush1.xpose.msra.mxu0 0.0
  %236 = vmatprep.subr.mxu0 0.0
  %237 = vmatpush1.xpose.msra.mxu0 0.0
  %238 = vmatprep.subr.mxu0 0.0
  %239 = vmatpush1.xpose.msra.mxu0 0.0
  %240 = vmatprep.subr.mxu0 0.0
  %241 = vmatpush1.xpose.msra.mxu0 0.0
  %242 = vmatprep.subr.mxu0 0.0
  %243 = vmatpush1.xpose.msra.mxu0 0.0
  %244 = vmatprep.subr.mxu0 0.0
  %245 = vmatpush1.xpose.msra.mxu0 0.0
  %246 = vmatprep.subr.mxu0 0.0
  %247 = vmatpush1.xpose.msra.mxu0 0.0
  %248 = vmatprep.subr.mxu0 0.0
  %249 = vmatpush1.xpose.msra.mxu0 0.0
  %250 = vmatprep.subr.mxu0 0.0
  %251 = vmatpush1.xpose.msra.mxu0 0.0
  %252 = vmatprep.subr.mxu0 0.0
  %253 = vmatpush1.xpose.msra.mxu0 0.0
  %254 = vmatprep.subr.mxu0 0.0
  %255 = vmatpush1.xpose.msra.mxu0 0.0
  %256 = vmatprep.subr.mxu0 0.0
  %257 = vmatpush1.xpose.msra.mxu0 0.0
  %258 = vmatprep.subr.mxu0 0.0
  %259 = vmatpush1.xpose.msra.mxu0 0.0
  %260 = vmatprep.subr.mxu0 0.0
  %261 = vmatpush1.xpose.msra.mxu0 0.0
  %262 = vmatprep.subr.mxu0 0.0
  %263 = vmatpush1.xpose.msra.mxu0 0.0
  %264 = vmatprep.mubr.f32.mxu0 0.0
  %265 = vmatmul.mubr.f32.gmra.mrb[0].mxu0 %v195
  %v266 = vpop.f32.mrb[0].mxu0
  %v267 = vadd.f32 0.0, %v266
  %v268 = vpop.f32.mrb[0].mxu0
  %269 = vdwg.mxu0
  %270 = vxpose.xlu0.b32.start [1/16] %v267, 128
  %271 = vxpose.xlu0.b32.cont [2/16] 0.0, 128
  %272 = vxpose.xlu0.b32.cont [3/16] 0.0, 128
  %273 = vxpose.xlu0.b32.cont [4/16] 0.0, 128
  %274 = vxpose.xlu0.b32.cont [5/16] 0.0, 128
  %275 = vxpose.xlu0.b32.cont [6/16] 0.0, 128
  %276 = vxpose.xlu0.b32.cont [7/16] 0.0, 128
  %277 = vxpose.xlu0.b32.cont [8/16] 0.0, 128
  %278 = vxpose.xlu0.b32.cont [9/16] 0.0, 128
  %279 = vxpose.xlu0.b32.cont [10/16] 0.0, 128
  %280 = vxpose.xlu0.b32.cont [11/16] 0.0, 128
  %281 = vxpose.xlu0.b32.cont [12/16] 0.0, 128
  %282 = vxpose.xlu0.b32.cont [13/16] 0.0, 128
  %283 = vxpose.xlu0.b32.cont [14/16] 0.0, 128
  %284 = vxpose.xlu0.b32.cont [15/16] 0.0, 128
  %285 = vxpose.xlu0.b32.end [16/16] 0.0, 128
  %v286 = vpop.trf.xlu0
  %v287 = vpop.trf.xlu0
  %v288 = vpop.trf.xlu0
  %v289 = vpop.trf.xlu0
  %v290 = vpop.trf.xlu0
  %v291 = vpop.trf.xlu0
  %v292 = vpop.trf.xlu0
  %v293 = vpop.trf.xlu0
  %v294 = vpop.trf.xlu0
  %v295 = vpop.trf.xlu0
  %v296 = vpop.trf.xlu0
  %v297 = vpop.trf.xlu0
  %v298 = vpop.trf.xlu0
  %v299 = vpop.trf.xlu0
  %v300 = vpop.trf.xlu0
  %v301 = vpop.trf.xlu0
  %v302 = vsub.f32 %v267, %v286
  %v303 = vmul.f32 %v302, 3.0
  %v304 = vtanh.pop %v303
  %v305 = vmax.f32 %v304, 0.0
  %vm306 = vcmask 64512
  %307 = vst.msk [vmem:[%s6] sm:$0xff] %vm306, %v305
  // Predicated region
  $region26: #{_lambda_.3} parent=0 // pred_check
    _
  $region27: #{_lambda_.3} parent=0 // pred_check_branch
    %309 = sbr.rel (0) target = $region29
  $region28: #{_lambda_.3} parent=0 // pred_region
    _
  $region29: #{_lambda_.3} parent=0 // pred_fallthru
    _
  // Predicated region
  $region30: #{_lambda_.3} parent=0 // pred_check
    _
  $region31: #{_lambda_.3} parent=0 // pred_check_branch
    %311 = sbr.rel (0) target = $region33
  $region32: #{_lambda_.3} parent=0 // pred_region
    _
  $region33: #{_lambda_.3} parent=0 // pred_fallthru
    _

// kernel: tile.68
$region0: #{tile.68}
  #allocation0 [shape = 's32[1]{0}', space=sflag, size = 0x4, scoped, tag = 'scoped memory for tile.68']
  %s0 = inlined_call_operand.vmem [shape: f32[16], index: 0, kind: input, shape index: {}]
  %s1 = inlined_call_operand.vmem [shape: f32[8,16], index: 1, kind: output, shape index: {}]
  // Predicated region
  $region2: #{tile.68} parent=0 // pred_check
    _
  $region3: #{tile.68} parent=0 // pred_check_branch
    %3 = sbr.rel (0) target = $region5
  $region4: #{tile.68} parent=0 // pred_region
    _
  $region5: #{tile.68} parent=0 // pred_fallthru
    _
  %v4 = vld [vmem:[%s0] ss:$0 sm:$0xff]
  %5 = vst [vmem:[%s1] sm:$0xff] %v4

// kernel: tile.69
$region0: #{tile.69}
  %s0 = inlined_call_operand.vmem [shape: f32[8,16], index: 0, kind: input, shape index: {}]
  %s1 = inlined_call_operand.vmem [shape: f32[128], index: 1, kind: output, shape index: {}]
  $region1: #{tile.69} parent=0
    #allocation0 [shape = 'u8[4096]{0}', space=vmem, size = 0x1000, scoped, tag = 'scoped mem for output reshape']
    %v2 = vld [vmem:[%s0] sm:$0x1]
    %vm3 = vcmask 130048
    %4 = vst.msk [vmem:[#allocation0] sm:$0x1] %vm3, %v2
    %s5 = scalar_lea.vmem %s0, 7
    %v6 = vld [vmem:[%s5] sm:$0x1]
    %7 = vrot.lane.b32.xlu0 %v6, 112
    %v8 = vpop.permute.xlu0 %7
    %vm9 = vcmask 1048448
    %10 = vst.msk [vmem:[#allocation0] sm:$0x1] %vm9, %v8
    %s11 = scalar_lea.vmem %s0, 6
    %v12 = vld [vmem:[%s11] sm:$0x1]
    %13 = vrot.lane.b32.xlu0 %v12, 96
    %v14 = vpop.permute.xlu0 %13
    %vm15 = vcmask 917248
    %16 = vst.msk [vmem:[#allocation0] sm:$0x1] %vm15, %v14
    %s17 = scalar_lea.vmem %s0, 5
    %v18 = vld [vmem:[%s17] sm:$0x1]
    %19 = vrot.lane.b32.xlu0 %v18, 80
    %v20 = vpop.permute.xlu0 %19
    %vm21 = vcmask 786048
    %22 = vst.msk [vmem:[#allocation0] sm:$0x1] %vm21, %v20
    %s23 = scalar_lea.vmem %s0, 4
    %v24 = vld [vmem:[%s23] sm:$0x1]
    %25 = vrot.lane.b32.xlu0 %v24, 64
    %v26 = vpop.permute.xlu0 %25
    %vm27 = vcmask 654848
    %28 = vst.msk [vmem:[#allocation0] sm:$0x1] %vm27, %v26
    %s29 = scalar_lea.vmem %s0, 3
    %v30 = vld [vmem:[%s29] sm:$0x1]
    %31 = vrot.lane.b32.xlu0 %v30, 48
    %v32 = vpop.permute.xlu0 %31
    %vm33 = vcmask 523648
    %34 = vst.msk [vmem:[#allocation0] sm:$0x1] %vm33, %v32
    %s35 = scalar_lea.vmem %s0, 2
    %v36 = vld [vmem:[%s35] sm:$0x1]
    %37 = vrot.lane.b32.xlu0 %v36, 32
    %v38 = vpop.permute.xlu0 %37
    %vm39 = vcmask 392448
    %40 = vst.msk [vmem:[#allocation0] sm:$0x1] %vm39, %v38
    %s41 = scalar_lea.vmem %s0, 1
    %v42 = vld [vmem:[%s41] sm:$0x1]
    %43 = vrot.lane.b32.xlu0 %v42, 16
    %v44 = vpop.permute.xlu0 %43
    %vm45 = vcmask 261248
    %46 = vst.msk [vmem:[#allocation0] sm:$0x1] %vm45, %v44
    %s48 = sshllo.u32 0, 1
    %v50 = vld [vmem:[#allocation0] sm:%s48]
    %s51 = sshllo.u32 0, 1
    %52 = vst [vmem:[%s1] sm:%s51] %v50

// kernel: tile.107
$region0: #{tile.107}
  %s0 = inlined_call_operand.vmem [shape: f32[8,16], index: 0, kind: input, shape index: {}]
  %s1 = inlined_call_operand.vmem [shape: f32[1,1,128], index: 1, kind: output, shape index: {}]
  $region1: #{tile.107} parent=0
    #allocation0 [shape = 'u8[4096]{0}', space=vmem, size = 0x1000, scoped, tag = 'scoped mem for output reshape']
    %v2 = vld [vmem:[%s0] sm:$0x1]
    %vm3 = vcmask 130048
    %4 = vst.msk [vmem:[#allocation0] sm:$0x1] %vm3, %v2
    %s5 = scalar_lea.vmem %s0, 7
    %v6 = vld [vmem:[%s5] sm:$0x1]
    %7 = vrot.lane.b32.xlu0 %v6, 112
    %v8 = vpop.permute.xlu0 %7
    %vm9 = vcmask 1048448
    %10 = vst.msk [vmem:[#allocation0] sm:$0x1] %vm9, %v8
    %s11 = scalar_lea.vmem %s0, 6
    %v12 = vld [vmem:[%s11] sm:$0x1]
    %13 = vrot.lane.b32.xlu0 %v12, 96
    %v14 = vpop.permute.xlu0 %13
    %vm15 = vcmask 917248
    %16 = vst.msk [vmem:[#allocation0] sm:$0x1] %vm15, %v14
    %s17 = scalar_lea.vmem %s0, 5
    %v18 = vld [vmem:[%s17] sm:$0x1]
    %19 = vrot.lane.b32.xlu0 %v18, 80
    %v20 = vpop.permute.xlu0 %19
    %vm21 = vcmask 786048
    %22 = vst.msk [vmem:[#allocation0] sm:$0x1] %vm21, %v20
    %s23 = scalar_lea.vmem %s0, 4
    %v24 = vld [vmem:[%s23] sm:$0x1]
    %25 = vrot.lane.b32.xlu0 %v24, 64
    %v26 = vpop.permute.xlu0 %25
    %vm27 = vcmask 654848
    %28 = vst.msk [vmem:[#allocation0] sm:$0x1] %vm27, %v26
    %s29 = scalar_lea.vmem %s0, 3
    %v30 = vld [vmem:[%s29] sm:$0x1]
    %31 = vrot.lane.b32.xlu0 %v30, 48
    %v32 = vpop.permute.xlu0 %31
    %vm33 = vcmask 523648
    %34 = vst.msk [vmem:[#allocation0] sm:$0x1] %vm33, %v32
    %s35 = scalar_lea.vmem %s0, 2
    %v36 = vld [vmem:[%s35] sm:$0x1]
    %37 = vrot.lane.b32.xlu0 %v36, 32
    %v38 = vpop.permute.xlu0 %37
    %vm39 = vcmask 392448
    %40 = vst.msk [vmem:[#allocation0] sm:$0x1] %vm39, %v38
    %s41 = scalar_lea.vmem %s0, 1
    %v42 = vld [vmem:[%s41] sm:$0x1]
    %43 = vrot.lane.b32.xlu0 %v42, 16
    %v44 = vpop.permute.xlu0 %43
    %vm45 = vcmask 261248
    %46 = vst.msk [vmem:[#allocation0] sm:$0x1] %vm45, %v44
    %s48 = sshllo.u32 0, 1
    %v50 = vld [vmem:[#allocation0] sm:%s48]
    %s51 = sshllo.u32 0, 1
    %52 = vst [vmem:[%s1] sm:%s51] %v50

// kernel: tile.63
$region0: #{tile.63}
  #allocation2 [shape = 's32[1]{0}', space=sflag, size = 0x4, scoped, tag = 'scoped memory for tile.63']
  %s0 = inlined_call_operand.hbm [shape: f32[16], index: 0, kind: input, shape index: {}]
  %s1 = inlined_call_operand.vmem [shape: f32[8,16], index: 1, kind: output, shape index: {}]
  $region1: #{tile.63} parent=0
    #allocation0 [shape = 'u8[512]{0}', space=vmem, size = 0x400, scoped, tag = 'operand span for operand 0']
    #allocation1 [shape = 's32[1]{0}', space=sflag, size = 0x4, scoped, tag = 'scoped memory for tile.63']
    %2 = vsyncpa [#allocation1], 0
    // Predicated region
    $region2: #{tile.63} parent=1 // pred_check
      _
    $region3: #{tile.63} parent=1 // pred_check_branch
      %4 = sbr.rel (0) target = $region5
    $region4: #{tile.63} parent=1 // pred_region
      %s6 = ssub.s32 16, 16
      %7 = vsyncadd [#allocation1], %s6
      %s9 = sshll.u32 [#allocation0], 4
      %s10 = int_to_ptr.vmem [resolvable:$true] %s9
      %12 = dma.hbm_to_vmem [thread:$0]  %s0, 16, %s10, [#allocation1]
    $region5: #{tile.63} parent=1 // pred_fallthru
      _
    // Predicated region
    $region6: #{tile.63} parent=1 // pred_check
      _
    $region7: #{tile.63} parent=1 // pred_check_branch
      %14 = sbr.rel (0) target = $region9
    $region8: #{tile.63} parent=1 // pred_region
      %15 = dma.done [#allocation1], 16
    $region9: #{tile.63} parent=1 // pred_fallthru
      _
    %v16 = vld [vmem:[#allocation0] ss:$0 sm:$0xff]
    %17 = vst [vmem:[%s1] sm:$0xff] %v16
    %18 = vsyncpa [#allocation1], 1

// kernel: _lambda_.5
$region0: #{_lambda_.5}
  #allocation0 [shape = 'u32[]', space=smem, size = 0x4, offset = 0x4, fixed_abs, tag = 'smem constant byte address 0x4 - core index']
  #allocation1 [shape = 'u32[144,128]{1,0:T(1,128)}', space=vmem, size = 0x12000, scoped, tag = 'internal scratch']
  %s0 = inlined_call_operand.vmem [shape: f32[16,390], index: 0, kind: input, shape index: {}]
  %s1 = inlined_call_operand.vmem [shape: f32[390,32], index: 1, kind: input, shape index: {}]
  %s2 = inlined_call_operand.vmem [shape: f32[1,32], index: 2, kind: input, shape index: {}]
  %s3 = inlined_call_operand.vmem [shape: f32[32,12], index: 3, kind: input, shape index: {}]
  %s4 = inlined_call_operand.vmem [shape: f32[1,12], index: 4, kind: input, shape index: {}]
  %s5 = inlined_call_operand.vmem [shape: f32[8,8], index: 5, kind: input, shape index: {}]
  %s6 = inlined_call_operand.vmem [shape: f32[16,12], index: 6, kind: input, shape index: {}]
  %s7 = inlined_call_operand.hbm [shape: f32[1,1], index: 7, kind: output, shape index: {0}]
  %s8 = inlined_call_operand.hbm [shape: f32[1,1], index: 8, kind: output, shape index: {1}]
  %9 = xla_tuple %s7, %s8
  %s10 = sld [smem:[#allocation0]]
  $region46: #{_lambda_.5} parent=0
    _
  %s12 = ssub.s32 1, %s10
  %s13 = scalar_select 0, %s12, %s10
  $region1: #{_lambda_.5} parent=0
    #allocation2 [shape = 'u8[512]{0}', space=vmem, size = 0x400, scoped, tag = 'output window, operand 0, single buffered']
    #allocation3 [shape = 's32[1]{0}', space=sflag, size = 0x4, scoped, tag = 'scoped memory for _lambda_.5']
    #allocation4 [shape = 'u8[512]{0}', space=vmem, size = 0x400, scoped, tag = 'output window, operand 1, single buffered']
    #allocation5 [shape = 's32[1]{0}', space=sflag, size = 0x4, scoped, tag = 'scoped memory for _lambda_.5']
    %14 = vsyncpa [#allocation3], 0
    %15 = vsyncpa [#allocation5], 0
    // Predicated region
    $region2: #{_lambda_.5} parent=1 // pred_check
      _
    $region3: #{_lambda_.5} parent=1 // pred_check_branch
      %17 = sbr.rel (0) target = $region5
    $region4: #{_lambda_.5} parent=1 // pred_region
      _
    $region5: #{_lambda_.5} parent=1 // pred_fallthru
      _
    // Predicated region
    $region6: #{_lambda_.5} parent=1 // pred_check
      _
    $region7: #{_lambda_.5} parent=1 // pred_check_branch
      %19 = sbr.rel (0) target = $region9
    $region8: #{_lambda_.5} parent=1 // pred_region
      _
    $region9: #{_lambda_.5} parent=1 // pred_fallthru
      _
    // Predicated region
    $region10: #{_lambda_.5} parent=1 // pred_check
      _
    $region11: #{_lambda_.5} parent=1 // pred_check_branch
      %21 = sbr.rel (0) target = $region13
    $region12: #{_lambda_.5} parent=1 // pred_region
      _
    $region13: #{_lambda_.5} parent=1 // pred_fallthru
      _
    // Predicated region
    $region14: #{_lambda_.5} parent=1 // pred_check
      _
    $region15: #{_lambda_.5} parent=1 // pred_check_branch
      %23 = sbr.rel (0) target = $region17
    $region16: #{_lambda_.5} parent=1 // pred_region
      _
    $region17: #{_lambda_.5} parent=1 // pred_fallthru
      _
    // Predicated region
    $region18: #{_lambda_.5} parent=1 // pred_check
      _
    $region19: #{_lambda_.5} parent=1 // pred_check_branch
      %25 = sbr.rel (0) target = $region21
    $region20: #{_lambda_.5} parent=1 // pred_region
      _
    $region21: #{_lambda_.5} parent=1 // pred_fallthru
      _
    // Predicated region
    $region22: #{_lambda_.5} parent=1 // pred_check
      _
    $region23: #{_lambda_.5} parent=1 // pred_check_branch
      %27 = sbr.rel (0) target = $region25
    $region24: #{_lambda_.5} parent=1 // pred_region
      _
    $region25: #{_lambda_.5} parent=1 // pred_fallthru
      _
    // Predicated region
    $region26: #{_lambda_.5} parent=1 // pred_check
      _
    $region27: #{_lambda_.5} parent=1 // pred_check_branch
      %29 = sbr.rel (0) target = $region29
    $region28: #{_lambda_.5} parent=1 // pred_region
      _
    $region29: #{_lambda_.5} parent=1 // pred_fallthru
      _
    %v30 = vld [vmem:[%s0] sm:$0xff]
    %v31 = vld [vmem:[%s0 + $0x8] sm:$0xff]
    %v32 = vld [vmem:[%s0 + $0x10] sm:$0xff]
    %v33 = vld [vmem:[%s0 + $0x18] sm:$0xff]
    %v34 = vld [vmem:[%s0 + $0x20] sm:$0xff]
    %v35 = vld [vmem:[%s0 + $0x28] sm:$0xff]
    %v36 = vld [vmem:[%s0 + $0x30] sm:$0xff]
    %v37 = vld [vmem:[%s0 + $0x38] sm:$0xff]
    %v38 = vld [vmem:[%s1] sm:$0xff]
    %v39 = vld [vmem:[%s1 + $0x8] sm:$0xff]
    %v40 = vld [vmem:[%s1 + $0x10] sm:$0xff]
    %v41 = vld [vmem:[%s1 + $0x18] sm:$0xff]
    %v42 = vld [vmem:[%s1 + $0x20] sm:$0xff]
    %v43 = vld [vmem:[%s1 + $0x28] sm:$0xff]
    %v44 = vld [vmem:[%s1 + $0x30] sm:$0xff]
    %v45 = vld [vmem:[%s1 + $0x38] sm:$0xff]
    %v46 = vld [vmem:[%s1 + $0x40] sm:$0xff]
    %v47 = vld [vmem:[%s1 + $0x48] sm:$0xff]
    %v48 = vld [vmem:[%s1 + $0x50] sm:$0xff]
    %v49 = vld [vmem:[%s1 + $0x58] sm:$0xff]
    %v50 = vld [vmem:[%s1 + $0x60] sm:$0xff]
    %v51 = vld [vmem:[%s1 + $0x68] sm:$0xff]
    %v52 = vld [vmem:[%s1 + $0x70] sm:$0xff]
    %v53 = vld [vmem:[%s1 + $0x78] sm:$0xff]
    %v54 = vld [vmem:[%s1 + $0x80] sm:$0xff]
    %v55 = vld [vmem:[%s1 + $0x88] sm:$0xff]
    %v56 = vld [vmem:[%s1 + $0x90] sm:$0xff]
    %v57 = vld [vmem:[%s1 + $0x98] sm:$0xff]
    %v58 = vld [vmem:[%s1 + $0xa0] sm:$0xff]
    %v59 = vld [vmem:[%s1 + $0xa8] sm:$0xff]
    %v60 = vld [vmem:[%s1 + $0xb0] sm:$0xff]
    %v61 = vld [vmem:[%s1 + $0xb8] sm:$0xff]
    %v62 = vld [vmem:[%s1 + $0xc0] sm:$0xff]
    %v63 = vld [vmem:[%s1 + $0xc8] sm:$0xff]
    %v64 = vld [vmem:[%s1 + $0xd0] sm:$0xff]
    %v65 = vld [vmem:[%s1 + $0xd8] sm:$0xff]
    %v66 = vld [vmem:[%s1 + $0xe0] sm:$0xff]
    %v67 = vld [vmem:[%s1 + $0xe8] sm:$0xff]
    %v68 = vld [vmem:[%s1 + $0xf0] sm:$0xff]
    %v69 = vld [vmem:[%s1 + $0xf8] sm:$0xff]
    %v70 = vld [vmem:[%s1 + $0x100] sm:$0xff]
    %v71 = vld [vmem:[%s1 + $0x108] sm:$0xff]
    %v72 = vld [vmem:[%s1 + $0x110] sm:$0xff]
    %v73 = vld [vmem:[%s1 + $0x118] sm:$0xff]
    %v74 = vld [vmem:[%s1 + $0x120] sm:$0xff]
    %v75 = vld [vmem:[%s1 + $0x128] sm:$0xff]
    %v76 = vld [vmem:[%s1 + $0x130] sm:$0xff]
    %v77 = vld [vmem:[%s1 + $0x138] sm:$0xff]
    %v78 = vld [vmem:[%s1 + $0x140] sm:$0xff]
    %v79 = vld [vmem:[%s1 + $0x148] sm:$0xff]
    %v80 = vld [vmem:[%s1 + $0x150] sm:$0xff]
    %v81 = vld [vmem:[%s1 + $0x158] sm:$0xff]
    %v82 = vld [vmem:[%s1 + $0x160] sm:$0xff]
    %v83 = vld [vmem:[%s1 + $0x168] sm:$0xff]
    %v84 = vld [vmem:[%s1 + $0x170] sm:$0xff]
    %v85 = vld [vmem:[%s1 + $0x178] sm:$0xff]
    %v86 = vld [vmem:[%s1 + $0x180] sm:$0x3f]
    %v87 = vld [vmem:[%s2] sm:$0x1]
    %v89 = vlaneseq
    %v90 = vshrl.u32 %v89, 7
    %v91 = vsub.s32 0, %v90
    %v92 = vrot.slane %v87, %v91
    %vm94 = vcmask 48128
    %v96 = vsel %vm94, %v33, 0
    %v99 = vsel %vm94, %v37, 0
    %vm101 = vcmask 1045504
    %v103 = vsel %vm101, %v86, 0
    %105 = vmatprep.subr.mxu0 0.0
    %106 = vmatpush1.msra.mxu0 %v38
    %107 = vmatprep.subr.mxu0 0.0
    %108 = vmatpush1.msra.mxu0 %v39
    %109 = vmatprep.subr.mxu0 0.0
    %110 = vmatpush1.msra.mxu0 %v40
    %111 = vmatprep.subr.mxu0 0.0
    %112 = vmatpush1.msra.mxu0 %v41
    %113 = vmatprep.subr.mxu0 0.0
    %114 = vmatpush1.msra.mxu0 %v42
    %115 = vmatprep.subr.mxu0 0.0
    %116 = vmatpush1.msra.mxu0 %v43
    %117 = vmatprep.subr.mxu0 0.0
    %118 = vmatpush1.msra.mxu0 %v44
    %119 = vmatprep.subr.mxu0 0.0
    %120 = vmatpush1.msra.mxu0 %v45
    %121 = vmatprep.subr.mxu0 0.0
    %122 = vmatpush1.msra.mxu0 %v46
    %123 = vmatprep.subr.mxu0 0.0
    %124 = vmatpush1.msra.mxu0 %v47
    %125 = vmatprep.subr.mxu0 0.0
    %126 = vmatpush1.msra.mxu0 %v48
    %127 = vmatprep.subr.mxu0 0.0
    %128 = vmatpush1.msra.mxu0 %v49
    %129 = vmatprep.subr.mxu0 0.0
    %130 = vmatpush1.msra.mxu0 %v50
    %131 = vmatprep.subr.mxu0 0.0
    %132 = vmatpush1.msra.mxu0 %v51
    %133 = vmatprep.subr.mxu0 0.0
    %134 = vmatpush1.msra.mxu0 %v52
    %135 = vmatprep.subr.mxu0 0.0
    %136 = vmatpush1.msra.mxu0 %v53
    %137 = vmatprep.subr.mxu0 0.0
    %138 = vmatpush1.msra.mxu0 %v54
    %139 = vmatprep.subr.mxu0 0.0
    %140 = vmatpush1.msra.mxu0 %v55
    %141 = vmatprep.subr.mxu0 0.0
    %142 = vmatpush1.msra.mxu0 %v56
    %143 = vmatprep.subr.mxu0 0.0
    %144 = vmatpush1.msra.mxu0 %v57
    %145 = vmatprep.subr.mxu0 0.0
    %146 = vmatpush1.msra.mxu0 %v58
    %147 = vmatprep.subr.mxu0 0.0
    %148 = vmatpush1.msra.mxu0 %v59
    %149 = vmatprep.subr.mxu0 0.0
    %150 = vmatpush1.msra.mxu0 %v60
    %151 = vmatprep.subr.mxu0 0.0
    %152 = vmatpush1.msra.mxu0 %v61
    %153 = vmatprep.subr.mxu0 0.0
    %154 = vmatpush1.msra.mxu0 %v62
    %155 = vmatprep.subr.mxu0 0.0
    %156 = vmatpush1.msra.mxu0 %v63
    %157 = vmatprep.subr.mxu0 0.0
    %158 = vmatpush1.msra.mxu0 %v64
    %159 = vmatprep.subr.mxu0 0.0
    %160 = vmatpush1.msra.mxu0 %v65
    %161 = vmatprep.subr.mxu0 0.0
    %162 = vmatpush1.msra.mxu0 %v66
    %163 = vmatprep.subr.mxu0 0.0
    %164 = vmatpush1.msra.mxu0 %v67
    %165 = vmatprep.subr.mxu0 0.0
    %166 = vmatpush1.msra.mxu0 %v68
    %167 = vmatprep.subr.mxu0 0.0
    %168 = vmatpush1.msra.mxu0 %v69
    %169 = vmatprep.mubr.f32.mxu0 %v31
    %170 = vmatmul.mubr.f32.gmra.mrb[0].mxu0 %v30
    %v171 = vpop.f32.mrb[0].mxu0
    %v172 = vadd.f32 %v92, %v171
    %v173 = vpop.f32.mrb[0].mxu0
    %174 = vmatprep.mubr.f32.mxu0 %v35
    %175 = vmatmul.mubr.f32.gmra.mrb[0].mxu0 %v34
    %v176 = vpop.f32.mrb[0].mxu0
    %v177 = vadd.f32 %v92, %v176
    %v178 = vpop.f32.mrb[0].mxu0
    %179 = vdwg.mxu0
    %180 = vmatprep.subr.mxu0 0.0
    %181 = vmatpush1.msra.mxu0 %v70
    %182 = vmatprep.subr.mxu0 0.0
    %183 = vmatpush1.msra.mxu0 %v71
    %184 = vmatprep.subr.mxu0 0.0
    %185 = vmatpush1.msra.mxu0 %v72
    %186 = vmatprep.subr.mxu0 0.0
    %187 = vmatpush1.msra.mxu0 %v73
    %188 = vmatprep.subr.mxu0 0.0
    %189 = vmatpush1.msra.mxu0 %v74
    %190 = vmatprep.subr.mxu0 0.0
    %191 = vmatpush1.msra.mxu0 %v75
    %192 = vmatprep.subr.mxu0 0.0
    %193 = vmatpush1.msra.mxu0 %v76
    %194 = vmatprep.subr.mxu0 0.0
    %195 = vmatpush1.msra.mxu0 %v77
    %196 = vmatprep.subr.mxu0 0.0
    %197 = vmatpush1.msra.mxu0 %v78
    %198 = vmatprep.subr.mxu0 0.0
    %199 = vmatpush1.msra.mxu0 %v79
    %200 = vmatprep.subr.mxu0 0.0
    %201 = vmatpush1.msra.mxu0 %v80
    %202 = vmatprep.subr.mxu0 0.0
    %203 = vmatpush1.msra.mxu0 %v81
    %204 = vmatprep.subr.mxu0 0.0
    %205 = vmatpush1.msra.mxu0 %v82
    %206 = vmatprep.subr.mxu0 0.0
    %207 = vmatpush1.msra.mxu0 %v83
    %208 = vmatprep.subr.mxu0 0.0
    %209 = vmatpush1.msra.mxu0 %v84
    %210 = vmatprep.subr.mxu0 0.0
    %211 = vmatpush1.msra.mxu0 %v85
    %212 = vmatprep.subr.mxu0 0.0
    %213 = vmatpush1.msra.mxu0 %v103
    %214 = vmatprep.subr.mxu0 0.0
    %215 = vmatpush1.msra.mxu0 0.0
    %216 = vmatprep.subr.mxu0 0.0
    %217 = vmatpush1.msra.mxu0 0.0
    %218 = vmatprep.subr.mxu0 0.0
    %219 = vmatpush1.msra.mxu0 0.0
    %220 = vmatprep.subr.mxu0 0.0
    %221 = vmatpush1.msra.mxu0 0.0
    %222 = vmatprep.subr.mxu0 0.0
    %223 = vmatpush1.msra.mxu0 0.0
    %224 = vmatprep.subr.mxu0 0.0
    %225 = vmatpush1.msra.mxu0 0.0
    %226 = vmatprep.subr.mxu0 0.0
    %227 = vmatpush1.msra.mxu0 0.0
    %228 = vmatprep.subr.mxu0 0.0
    %229 = vmatpush1.msra.mxu0 0.0
    %230 = vmatprep.subr.mxu0 0.0
    %231 = vmatpush1.msra.mxu0 0.0
    %232 = vmatprep.subr.mxu0 0.0
    %233 = vmatpush1.msra.mxu0 0.0
    %234 = vmatprep.subr.mxu0 0.0
    %235 = vmatpush1.msra.mxu0 0.0
    %236 = vmatprep.subr.mxu0 0.0
    %237 = vmatpush1.msra.mxu0 0.0
    %238 = vmatprep.subr.mxu0 0.0
    %239 = vmatpush1.msra.mxu0 0.0
    %240 = vmatprep.subr.mxu0 0.0
    %241 = vmatpush1.msra.mxu0 0.0
    %242 = vmatprep.subr.mxu0 0.0
    %243 = vmatpush1.msra.mxu0 0.0
    %244 = vmatprep.mubr.f32.mxu0 %v96
    %245 = vmatmul.mubr.f32.gmra.mrb[0].mxu0 %v32
    %v246 = vpop.f32.mrb[0].mxu0
    %v247 = vadd.f32 %v172, %v246
    %v248 = vpop.f32.mrb[0].mxu0
    %249 = vmatprep.mubr.f32.mxu0 %v99
    %250 = vmatmul.mubr.f32.gmra.mrb[0].mxu0 %v36
    %v251 = vpop.f32.mrb[0].mxu0
    %v252 = vadd.f32 %v177, %v251
    %v253 = vpop.f32.mrb[0].mxu0
    %254 = vdwg.mxu0
    %v255 = vld [vmem:[%s5] sm:$0xff]
    %vm256 = vcmask 261120
    %v258 = vsel %vm256, %v247, 0
    %260 = vmatprep.subr.mxu0 0.0
    %261 = vmatpush1.xpose.msra.mxu0 %v258
    %262 = vmatprep.subr.mxu0 0.0
    %263 = vmatpush1.xpose.msra.mxu0 0.0
    %264 = vmatprep.subr.mxu0 0.0
    %265 = vmatpush1.xpose.msra.mxu0 0.0
    %266 = vmatprep.subr.mxu0 0.0
    %267 = vmatpush1.xpose.msra.mxu0 0.0
    %268 = vmatprep.subr.mxu0 0.0
    %269 = vmatpush1.xpose.msra.mxu0 0.0
    %270 = vmatprep.subr.mxu0 0.0
    %271 = vmatpush1.xpose.msra.mxu0 0.0
    %272 = vmatprep.subr.mxu0 0.0
    %273 = vmatpush1.xpose.msra.mxu0 0.0
    %274 = vmatprep.subr.mxu0 0.0
    %275 = vmatpush1.xpose.msra.mxu0 0.0
    %276 = vmatprep.subr.mxu0 0.0
    %277 = vmatpush1.xpose.msra.mxu0 0.0
    %278 = vmatprep.subr.mxu0 0.0
    %279 = vmatpush1.xpose.msra.mxu0 0.0
    %280 = vmatprep.subr.mxu0 0.0
    %281 = vmatpush1.xpose.msra.mxu0 0.0
    %282 = vmatprep.subr.mxu0 0.0
    %283 = vmatpush1.xpose.msra.mxu0 0.0
    %284 = vmatprep.subr.mxu0 0.0
    %285 = vmatpush1.xpose.msra.mxu0 0.0
    %286 = vmatprep.subr.mxu0 0.0
    %287 = vmatpush1.xpose.msra.mxu0 0.0
    %288 = vmatprep.subr.mxu0 0.0
    %289 = vmatpush1.xpose.msra.mxu0 0.0
    %290 = vmatprep.subr.mxu0 0.0
    %291 = vmatpush1.xpose.msra.mxu0 0.0
    %292 = vmatprep.subr.mxu0 0.0
    %293 = vmatpush1.xpose.msra.mxu0 0.0
    %294 = vmatprep.subr.mxu0 0.0
    %295 = vmatpush1.xpose.msra.mxu0 0.0
    %296 = vmatprep.subr.mxu0 0.0
    %297 = vmatpush1.xpose.msra.mxu0 0.0
    %298 = vmatprep.subr.mxu0 0.0
    %299 = vmatpush1.xpose.msra.mxu0 0.0
    %300 = vmatprep.subr.mxu0 0.0
    %301 = vmatpush1.xpose.msra.mxu0 0.0
    %302 = vmatprep.subr.mxu0 0.0
    %303 = vmatpush1.xpose.msra.mxu0 0.0
    %304 = vmatprep.subr.mxu0 0.0
    %305 = vmatpush1.xpose.msra.mxu0 0.0
    %306 = vmatprep.subr.mxu0 0.0
    %307 = vmatpush1.xpose.msra.mxu0 0.0
    %308 = vmatprep.subr.mxu0 0.0
    %309 = vmatpush1.xpose.msra.mxu0 0.0
    %310 = vmatprep.subr.mxu0 0.0
    %311 = vmatpush1.xpose.msra.mxu0 0.0
    %312 = vmatprep.subr.mxu0 0.0
    %313 = vmatpush1.xpose.msra.mxu0 0.0
    %314 = vmatprep.subr.mxu0 0.0
    %315 = vmatpush1.xpose.msra.mxu0 0.0
    %316 = vmatprep.subr.mxu0 0.0
    %317 = vmatpush1.xpose.msra.mxu0 0.0
    %318 = vmatprep.subr.mxu0 0.0
    %319 = vmatpush1.xpose.msra.mxu0 0.0
    %320 = vmatprep.subr.mxu0 0.0
    %321 = vmatpush1.xpose.msra.mxu0 0.0
    %322 = vmatprep.subr.mxu0 0.0
    %323 = vmatpush1.xpose.msra.mxu0 0.0
    %324 = vmatprep.mubr.f32.mxu0 0.0
    %325 = vmatmul.mubr.f32.gmra.mrb[0].mxu0 %v258
    %v326 = vpop.f32.mrb[0].mxu0
    %v327 = vadd.f32 0.0, %v326
    %v328 = vpop.f32.mrb[0].mxu0
    %329 = vdwg.mxu0
    %v330 = vmax.f32 %v327, 0.0
    %v331 = vmul.f32 %v327, %v255
    %v332 = vsub.f32 %v330, %v331
    %v333 = vand.u32 2147483647, %v327
    %v334 = vsub.f32 0.0, %v333
    %v335 = vmul.f32 %v334, 1.442695
    %v336 = vpow.pop %v335
    %v337 = vadd.f32 %v336, 1.0
    %v338 = vlog2.pop %v337
    %v339 = vmul.f32 %v338, 0.6931472
    %v340 = vadd.f32 %v332, %v339
    %vm341 = vcmask 64512
    %v342 = vsel %vm341, %v340, 0.0
    %343 = vadd.xlane.f32.xlu0 %v342
    %v344 = vpop.xlane.xlu0 %343
    %v345 = vrot.slane %v344, 4
    %v346 = vadd.f32 %v344, %v345
    %v347 = vrot.slane %v346, 2
    %v348 = vadd.f32 %v346, %v347
    %v349 = vrot.slane %v348, 1
    %v350 = vadd.f32 %v348, %v349
    %v351 = vadd.f32 %v350, 0.0
    %v353 = vsel %vm256, %v252, 0
    %355 = vmatprep.subr.mxu0 0.0
    %356 = vmatpush1.xpose.msra.mxu0 %v353
    %357 = vmatprep.subr.mxu0 0.0
    %358 = vmatpush1.xpose.msra.mxu0 0.0
    %359 = vmatprep.subr.mxu0 0.0
    %360 = vmatpush1.xpose.msra.mxu0 0.0
    %361 = vmatprep.subr.mxu0 0.0
    %362 = vmatpush1.xpose.msra.mxu0 0.0
    %363 = vmatprep.subr.mxu0 0.0
    %364 = vmatpush1.xpose.msra.mxu0 0.0
    %365 = vmatprep.subr.mxu0 0.0
    %366 = vmatpush1.xpose.msra.mxu0 0.0
    %367 = vmatprep.subr.mxu0 0.0
    %368 = vmatpush1.xpose.msra.mxu0 0.0
    %369 = vmatprep.subr.mxu0 0.0
    %370 = vmatpush1.xpose.msra.mxu0 0.0
    %371 = vmatprep.subr.mxu0 0.0
    %372 = vmatpush1.xpose.msra.mxu0 0.0
    %373 = vmatprep.subr.mxu0 0.0
    %374 = vmatpush1.xpose.msra.mxu0 0.0
    %375 = vmatprep.subr.mxu0 0.0
    %376 = vmatpush1.xpose.msra.mxu0 0.0
    %377 = vmatprep.subr.mxu0 0.0
    %378 = vmatpush1.xpose.msra.mxu0 0.0
    %379 = vmatprep.subr.mxu0 0.0
    %380 = vmatpush1.xpose.msra.mxu0 0.0
    %381 = vmatprep.subr.mxu0 0.0
    %382 = vmatpush1.xpose.msra.mxu0 0.0
    %383 = vmatprep.subr.mxu0 0.0
    %384 = vmatpush1.xpose.msra.mxu0 0.0
    %385 = vmatprep.subr.mxu0 0.0
    %386 = vmatpush1.xpose.msra.mxu0 0.0
    %387 = vmatprep.subr.mxu0 0.0
    %388 = vmatpush1.xpose.msra.mxu0 0.0
    %389 = vmatprep.subr.mxu0 0.0
    %390 = vmatpush1.xpose.msra.mxu0 0.0
    %391 = vmatprep.subr.mxu0 0.0
    %392 = vmatpush1.xpose.msra.mxu0 0.0
    %393 = vmatprep.subr.mxu0 0.0
    %394 = vmatpush1.xpose.msra.mxu0 0.0
    %395 = vmatprep.subr.mxu0 0.0
    %396 = vmatpush1.xpose.msra.mxu0 0.0
    %397 = vmatprep.subr.mxu0 0.0
    %398 = vmatpush1.xpose.msra.mxu0 0.0
    %399 = vmatprep.subr.mxu0 0.0
    %400 = vmatpush1.xpose.msra.mxu0 0.0
    %401 = vmatprep.subr.mxu0 0.0
    %402 = vmatpush1.xpose.msra.mxu0 0.0
    %403 = vmatprep.subr.mxu0 0.0
    %404 = vmatpush1.xpose.msra.mxu0 0.0
    %405 = vmatprep.subr.mxu0 0.0
    %406 = vmatpush1.xpose.msra.mxu0 0.0
    %407 = vmatprep.subr.mxu0 0.0
    %408 = vmatpush1.xpose.msra.mxu0 0.0
    %409 = vmatprep.subr.mxu0 0.0
    %410 = vmatpush1.xpose.msra.mxu0 0.0
    %411 = vmatprep.subr.mxu0 0.0
    %412 = vmatpush1.xpose.msra.mxu0 0.0
    %413 = vmatprep.subr.mxu0 0.0
    %414 = vmatpush1.xpose.msra.mxu0 0.0
    %415 = vmatprep.subr.mxu0 0.0
    %416 = vmatpush1.xpose.msra.mxu0 0.0
    %417 = vmatprep.subr.mxu0 0.0
    %418 = vmatpush1.xpose.msra.mxu0 0.0
    %419 = vmatprep.mubr.f32.mxu0 0.0
    %420 = vmatmul.mubr.f32.gmra.mrb[0].mxu0 %v353
    %v421 = vpop.f32.mrb[0].mxu0
    %v422 = vadd.f32 0.0, %v421
    %v423 = vpop.f32.mrb[0].mxu0
    %424 = vdwg.mxu0
    %v425 = vmax.f32 %v422, 0.0
    %v426 = vmul.f32 %v422, %v255
    %v427 = vsub.f32 %v425, %v426
    %v428 = vand.u32 2147483647, %v422
    %v429 = vsub.f32 0.0, %v428
    %v430 = vmul.f32 %v429, 1.442695
    %v431 = vpow.pop %v430
    %v432 = vadd.f32 %v431, 1.0
    %v433 = vlog2.pop %v432
    %v434 = vmul.f32 %v433, 0.6931472
    %v435 = vadd.f32 %v427, %v434
    %v436 = vsel %vm341, %v435, 0.0
    %437 = vadd.xlane.f32.xlu0 %v436
    %v438 = vpop.xlane.xlu0 %437
    %v439 = vrot.slane %v438, 4
    %v440 = vadd.f32 %v438, %v439
    %v441 = vrot.slane %v440, 2
    %v442 = vadd.f32 %v440, %v441
    %v443 = vrot.slane %v442, 1
    %v444 = vadd.f32 %v442, %v443
    %v445 = vadd.f32 %v351, %v444
    %v446 = vmul.f32 %v445, 0.0078125
    %vm447 = vcmask 0
    %448 = vst.msk [vmem:[#allocation2] sm:$0x1] %vm447, %v446
    %v449 = vld [vmem:[%s3] sm:$0xff]
    %v450 = vld [vmem:[%s3 + $0x8] sm:$0xff]
    %v451 = vld [vmem:[%s3 + $0x10] sm:$0xff]
    %v452 = vld [vmem:[%s3 + $0x18] sm:$0xff]
    %v453 = vld [vmem:[%s4] sm:$0x1]
    %v455 = vlaneseq
    %v456 = vshrl.u32 %v455, 7
    %v457 = vsub.s32 0, %v456
    %v458 = vrot.slane %v453, %v457
    %460 = vmatprep.subr.mxu0 0.0
    %461 = vmatpush1.msra.mxu0 %v449
    %462 = vmatprep.subr.mxu0 0.0
    %463 = vmatpush1.msra.mxu0 %v450
    %464 = vmatprep.subr.mxu0 0.0
    %465 = vmatpush1.msra.mxu0 %v451
    %466 = vmatprep.subr.mxu0 0.0
    %467 = vmatpush1.msra.mxu0 %v452
    %468 = vmatprep.subr.mxu0 0.0
    %469 = vmatpush1.msra.mxu0 0.0
    %470 = vmatprep.subr.mxu0 0.0
    %471 = vmatpush1.msra.mxu0 0.0
    %472 = vmatprep.subr.mxu0 0.0
    %473 = vmatpush1.msra.mxu0 0.0
    %474 = vmatprep.subr.mxu0 0.0
    %475 = vmatpush1.msra.mxu0 0.0
    %476 = vmatprep.subr.mxu0 0.0
    %477 = vmatpush1.msra.mxu0 0.0
    %478 = vmatprep.subr.mxu0 0.0
    %479 = vmatpush1.msra.mxu0 0.0
    %480 = vmatprep.subr.mxu0 0.0
    %481 = vmatpush1.msra.mxu0 0.0
    %482 = vmatprep.subr.mxu0 0.0
    %483 = vmatpush1.msra.mxu0 0.0
    %484 = vmatprep.subr.mxu0 0.0
    %485 = vmatpush1.msra.mxu0 0.0
    %486 = vmatprep.subr.mxu0 0.0
    %487 = vmatpush1.msra.mxu0 0.0
    %488 = vmatprep.subr.mxu0 0.0
    %489 = vmatpush1.msra.mxu0 0.0
    %490 = vmatprep.subr.mxu0 0.0
    %491 = vmatpush1.msra.mxu0 0.0
    %492 = vmatprep.subr.mxu0 0.0
    %493 = vmatpush1.msra.mxu0 0.0
    %494 = vmatprep.subr.mxu0 0.0
    %495 = vmatpush1.msra.mxu0 0.0
    %496 = vmatprep.subr.mxu0 0.0
    %497 = vmatpush1.msra.mxu0 0.0
    %498 = vmatprep.subr.mxu0 0.0
    %499 = vmatpush1.msra.mxu0 0.0
    %500 = vmatprep.subr.mxu0 0.0
    %501 = vmatpush1.msra.mxu0 0.0
    %502 = vmatprep.subr.mxu0 0.0
    %503 = vmatpush1.msra.mxu0 0.0
    %504 = vmatprep.subr.mxu0 0.0
    %505 = vmatpush1.msra.mxu0 0.0
    %506 = vmatprep.subr.mxu0 0.0
    %507 = vmatpush1.msra.mxu0 0.0
    %508 = vmatprep.subr.mxu0 0.0
    %509 = vmatpush1.msra.mxu0 0.0
    %510 = vmatprep.subr.mxu0 0.0
    %511 = vmatpush1.msra.mxu0 0.0
    %512 = vmatprep.subr.mxu0 0.0
    %513 = vmatpush1.msra.mxu0 0.0
    %514 = vmatprep.subr.mxu0 0.0
    %515 = vmatpush1.msra.mxu0 0.0
    %516 = vmatprep.subr.mxu0 0.0
    %517 = vmatpush1.msra.mxu0 0.0
    %518 = vmatprep.subr.mxu0 0.0
    %519 = vmatpush1.msra.mxu0 0.0
    %520 = vmatprep.subr.mxu0 0.0
    %521 = vmatpush1.msra.mxu0 0.0
    %522 = vmatprep.subr.mxu0 0.0
    %523 = vmatpush1.msra.mxu0 0.0
    %524 = vmatprep.mubr.f32.mxu0 0.0
    %525 = vmatmul.mubr.f32.gmra.mrb[0].mxu0 %v258
    %v526 = vpop.f32.mrb[0].mxu0
    %v527 = vadd.f32 %v458, %v526
    %v528 = vpop.f32.mrb[0].mxu0
    %529 = vmatprep.mubr.f32.mxu0 0.0
    %530 = vmatmul.mubr.f32.gmra.mrb[0].mxu0 %v353
    %v531 = vpop.f32.mrb[0].mxu0
    %v532 = vadd.f32 %v458, %v531
    %v533 = vpop.f32.mrb[0].mxu0
    %534 = vdwg.mxu0
    %v535 = vld [vmem:[%s6] sm:$0xff]
    %v536 = vld [vmem:[%s6 + $0x8] sm:$0xff]
    %v537 = vsub.f32 %v527, %v535
    %v538 = vsub.f32 %v532, %v536
    %v539 = vand.u32 2147483647, %v537
    %v540 = vand.u32 2147483647, %v538
    %vm541 = vcmask 97280
    %v542 = vsel %vm541, %v539, 0.0
    %543 = vadd.xlane.f32.xlu0 %v542
    %v544 = vpop.xlane.xlu0 %543
    %v545 = vsel %vm541, %v540, 0.0
    %546 = vadd.xlane.f32.xlu0 %v545
    %v547 = vpop.xlane.xlu0 %546
    %v548 = vadd.f32 %v544, %v547
    %v549 = vrot.slane %v548, 4
    %v550 = vadd.f32 %v548, %v549
    %v551 = vrot.slane %v550, 2
    %v552 = vadd.f32 %v550, %v551
    %v553 = vrot.slane %v552, 1
    %v554 = vadd.f32 %v552, %v553
    %v555 = vmul.f32 %v554, 0.0052083335
    %556 = vst.msk [vmem:[#allocation4] sm:$0x1] %vm447, %v555
    // Predicated region
    $region30: #{_lambda_.5} parent=1 // pred_check
      _
    $region31: #{_lambda_.5} parent=1 // pred_check_branch
      %558 = sbr.rel (0) target = $region33
    $region32: #{_lambda_.5} parent=1 // pred_region
      %s560 = ssub.s32 16, 16
      %561 = vsyncadd [#allocation3], %s560
      %s563 = sshll.u32 [#allocation2], 4
      %s564 = int_to_ptr.vmem [resolvable:$true] %s563
      %566 = dma.vmem_to_hbm [thread:$0]  %s564, 16, %s7, [#allocation3]
    $region33: #{_lambda_.5} parent=1 // pred_fallthru
      _
    // Predicated region
    $region34: #{_lambda_.5} parent=1 // pred_check
      _
    $region35: #{_lambda_.5} parent=1 // pred_check_branch
      %568 = sbr.rel (0) target = $region37
    $region36: #{_lambda_.5} parent=1 // pred_region
      %s570 = ssub.s32 16, 16
      %571 = vsyncadd [#allocation5], %s570
      %s573 = sshll.u32 [#allocation4], 4
      %s574 = int_to_ptr.vmem [resolvable:$true] %s573
      %576 = dma.vmem_to_hbm [thread:$0]  %s574, 16, %s8, [#allocation5]
    $region37: #{_lambda_.5} parent=1 // pred_fallthru
      _
    // Predicated region
    $region38: #{_lambda_.5} parent=1 // pred_check
      _
    $region39: #{_lambda_.5} parent=1 // pred_check_branch
      %578 = sbr.rel (0) target = $region41
    $region40: #{_lambda_.5} parent=1 // pred_region
      %579 = dma.done [#allocation3], 16
    $region41: #{_lambda_.5} parent=1 // pred_fallthru
      _
    // Predicated region
    $region42: #{_lambda_.5} parent=1 // pred_check
      _
    $region43: #{_lambda_.5} parent=1 // pred_check_branch
      %581 = sbr.rel (0) target = $region45
    $region44: #{_lambda_.5} parent=1 // pred_region
      %582 = dma.done [#allocation5], 16
    $region45: #{_lambda_.5} parent=1 // pred_fallthru
      _
    %583 = vsyncpa [#allocation3], 1
    %584 = vsyncpa [#allocation5], 1

// kernel: _lambda_.4
$region0: #{_lambda_.4}
  #allocation0 [shape = 'u32[]', space=smem, size = 0x4, offset = 0x4, fixed_abs, tag = 'smem constant byte address 0x4 - core index']
  #allocation1 [shape = 'u32[144,128]{1,0:T(1,128)}', space=vmem, size = 0x12000, scoped, tag = 'internal scratch']
  #allocation2 [shape = 'f32[19,128]{1,0:T(8,128)}', space=vmem, size = 0x3000, scoped, tag = 'scratch operand']
  #allocation3 [shape = 'f32[13,896]{1,0:T(8,128)}', space=vmem, size = 0xe000, scoped, tag = 'scratch operand']
  %s0 = inlined_call_operand.vmem [shape: f32[2,19,16], index: 0, kind: input, shape index: {}]
  %s1 = inlined_call_operand.vmem [shape: f32[16,128], index: 1, kind: input, shape index: {}]
  %s2 = inlined_call_operand.vmem [shape: f32[19,128], index: 2, kind: input, shape index: {}]
  %s3 = inlined_call_operand.vmem [shape: f32[128,128], index: 3, kind: input, shape index: {}]
  %s4 = inlined_call_operand.vmem [shape: f32[1,128], index: 4, kind: input, shape index: {}]
  %s5 = inlined_call_operand.vmem [shape: f32[3,896,256], index: 5, kind: input, shape index: {}]
  %s6 = inlined_call_operand.vmem [shape: f32[3,1,256], index: 6, kind: input, shape index: {}]
  %s7 = inlined_call_operand.vmem [shape: f32[3,128,128], index: 7, kind: input, shape index: {}]
  %s8 = inlined_call_operand.vmem [shape: f32[3,1,128], index: 8, kind: input, shape index: {}]
  %s9 = inlined_call_operand.vmem [shape: f32[3,13,128], index: 9, kind: input, shape index: {}]
  %s10 = inlined_call_operand.vmem [shape: f32[3,13,128], index: 10, kind: input, shape index: {}]
  %s11 = inlined_call_operand.vmem [shape: f32[2,13,128], index: 11, kind: output, shape index: {0}]
  %s12 = inlined_call_operand.vmem [shape: f32[2,7,128], index: 12, kind: output, shape index: {1}]
  %s13 = inlined_call_operand.vmem [shape: f32[2,1,128], index: 13, kind: output, shape index: {2}]
  %s14 = inlined_call_operand.vmem [shape: f32[2,1,128], index: 14, kind: output, shape index: {3}]
  %15 = xla_tuple %s11, %s12, %s13, %s14
  %s16 = sld [smem:[#allocation0]]
  $region101: #{_lambda_.4} parent=0
    _
  %s18 = ssub.s32 1, %s16
  %s19 = scalar_select 0, %s18, %s16
  loop: start=0, step=1, limit=4
  $region2: #{_lambda_.4} parent=0 // loop_pre_header
    _
  $region3: #{_lambda_.4} parent=0 // loop_header
    %s21 = sphi 0, %s25
    %p22 = scmp.ge.s32.totalorder %s21, 4
    %s31 = sphi 0, %s33
    %s34 = sphi 0, %s31
    %s35 = sphi 0, %s34
    %s51 = sphi 0, %s35
    %s55 = sphi 0, %s55
    %s57 = sphi 0, %s55
    %s58 = sphi 0, %s57
    %s72 = sphi 0, %s58
    %s76 = sphi 0, %s76
    %s78 = sphi 0, %s76
    %s79 = sphi 0, %s78
    %s93 = sphi 0, %s79
    %s97 = sphi 0, %s97
    %s99 = sphi 0, %s97
    %s100 = sphi 0, %s99
    %s114 = sphi 0, %s100
    %s118 = sphi 0, %s118
    %s120 = sphi 0, %s118
    %s121 = sphi 0, %s120
    %s135 = sphi 0, %s121
    %s139 = sphi 0, %s139
    %s141 = sphi 0, %s139
    %s142 = sphi 0, %s141
    %s156 = sphi 0, %s142
    %s160 = sphi 0, %s160
    %s162 = sphi 0, %s160
    %s163 = sphi 0, %s162
    %s177 = sphi 0, %s163
    %s181 = sphi 0, %s181
    %s183 = sphi 0, %s181
    %s184 = sphi 0, %s183
    %s198 = sphi 0, %s184
    %s202 = sphi 0, %s202
    %s204 = sphi 0, %s202
    %s205 = sphi 0, %s204
    %s219 = sphi 0, %s205
    %s223 = sphi 0, %s223
    %s225 = sphi 0, %s223
    %s226 = sphi 0, %s225
    %s240 = sphi 0, %s226
    %s244 = sphi 0, %s244
    %s246 = sphi 0, %s244
    %s247 = sphi 0, %s246
    %s261 = sphi 0, %s247
    %s267 = sphi 0, %s269
    %s270 = sphi 0, %s267
    %s271 = sphi 0, %s270
    %s287 = sphi 0, %s271
    %s293 = sphi 0, %s295
    %s296 = sphi 0, %s293
    %s297 = sphi 0, %s296
    %s313 = sphi 0, %s297
    %s319 = sphi 0, %s321
    %s322 = sphi 0, %s319
    %s323 = sphi 0, %s322
    %s339 = sphi 0, %s323
    %s345 = sphi 0, %s347
    %s348 = sphi 0, %s345
    %s349 = sphi 0, %s348
    %s365 = sphi 0, %s349
  $region4: #{_lambda_.4} parent=0 // loop_header_branch
    %24 = sbr.rel (%p22) target = $region8
  $region5: #{_lambda_.4} parent=0 // loop_body
    %s26 = ssub.s32 %s21, 1
    %s27 = ssub.s32 %s21, 2
    %s28 = sadd.s32 %s21, 1
    %s29 = ssub.s32 %s21, %s28
    %p30 = scmp.eq.s32.totalorder %s29, 0
    %s32 = sadd.s32 %s31, 1
    %s33 = scalar_select %p30, %s31, %s32
    %p36 = pneg %p30
    %p37 = scmp.eq.s32.totalorder %s21, 1
    %p38 = por %p36, %p37
    %p39 = scmp.ne.s32.totalorder %s31, %s34
    %p40 = scmp.eq.s32.totalorder %s21, 0
    %p41 = por %p39, %p40
    %p42 = scmp.ne.s32.totalorder %s31, %s34
    %p43 = scmp.eq.s32.totalorder %s26, 1
    %p44 = por %p42, %p43
    %p45 = scmp.ne.s32.totalorder %s34, %s35
    %p46 = scmp.eq.s32.totalorder %s26, 0
    %p47 = por %p45, %p46
    %p48 = scmp.ne.s32.totalorder %s34, %s35
    %p49 = scmp.eq.s32.totalorder %s27, 1
    %p50 = por %p48, %p49
    %p52 = scmp.ne.s32.totalorder %s35, %s51
    %p53 = scmp.eq.s32.totalorder %s27, 0
    %p54 = por %p52, %p53
    %s56 = sadd.s32 %s55, 1
    %p59 = scmp.eq.s32.totalorder %s21, 1
    %p60 = scmp.ne.s32.totalorder %s55, %s57
    %p61 = scmp.eq.s32.totalorder %s21, 0
    %p62 = por %p60, %p61
    %p63 = scmp.ne.s32.totalorder %s55, %s57
    %p64 = scmp.eq.s32.totalorder %s26, 1
    %p65 = por %p63, %p64
    %p66 = scmp.ne.s32.totalorder %s57, %s58
    %p67 = scmp.eq.s32.totalorder %s26, 0
    %p68 = por %p66, %p67
    %p69 = scmp.ne.s32.totalorder %s57, %s58
    %p70 = scmp.eq.s32.totalorder %s27, 1
    %p71 = por %p69, %p70
    %p73 = scmp.ne.s32.totalorder %s58, %s72
    %p74 = scmp.eq.s32.totalorder %s27, 0
    %p75 = por %p73, %p74
    %s77 = sadd.s32 %s76, 1
    %p80 = scmp.eq.s32.totalorder %s21, 1
    %p81 = scmp.ne.s32.totalorder %s76, %s78
    %p82 = scmp.eq.s32.totalorder %s21, 0
    %p83 = por %p81, %p82
    %p84 = scmp.ne.s32.totalorder %s76, %s78
    %p85 = scmp.eq.s32.totalorder %s26, 1
    %p86 = por %p84, %p85
    %p87 = scmp.ne.s32.totalorder %s78, %s79
    %p88 = scmp.eq.s32.totalorder %s26, 0
    %p89 = por %p87, %p88
    %p90 = scmp.ne.s32.totalorder %s78, %s79
    %p91 = scmp.eq.s32.totalorder %s27, 1
    %p92 = por %p90, %p91
    %p94 = scmp.ne.s32.totalorder %s79, %s93
    %p95 = scmp.eq.s32.totalorder %s27, 0
    %p96 = por %p94, %p95
    %s98 = sadd.s32 %s97, 1
    %p101 = scmp.eq.s32.totalorder %s21, 1
    %p102 = scmp.ne.s32.totalorder %s97, %s99
    %p103 = scmp.eq.s32.totalorder %s21, 0
    %p104 = por %p102, %p103
    %p105 = scmp.ne.s32.totalorder %s97, %s99
    %p106 = scmp.eq.s32.totalorder %s26, 1
    %p107 = por %p105, %p106
    %p108 = scmp.ne.s32.totalorder %s99, %s100
    %p109 = scmp.eq.s32.totalorder %s26, 0
    %p110 = por %p108, %p109
    %p111 = scmp.ne.s32.totalorder %s99, %s100
    %p112 = scmp.eq.s32.totalorder %s27, 1
    %p113 = por %p111, %p112
    %p115 = scmp.ne.s32.totalorder %s100, %s114
    %p116 = scmp.eq.s32.totalorder %s27, 0
    %p117 = por %p115, %p116
    %s119 = sadd.s32 %s118, 1
    %p122 = scmp.eq.s32.totalorder %s21, 1
    %p123 = scmp.ne.s32.totalorder %s118, %s120
    %p124 = scmp.eq.s32.totalorder %s21, 0
    %p125 = por %p123, %p124
    %p126 = scmp.ne.s32.totalorder %s118, %s120
    %p127 = scmp.eq.s32.totalorder %s26, 1
    %p128 = por %p126, %p127
    %p129 = scmp.ne.s32.totalorder %s120, %s121
    %p130 = scmp.eq.s32.totalorder %s26, 0
    %p131 = por %p129, %p130
    %p132 = scmp.ne.s32.totalorder %s120, %s121
    %p133 = scmp.eq.s32.totalorder %s27, 1
    %p134 = por %p132, %p133
    %p136 = scmp.ne.s32.totalorder %s121, %s135
    %p137 = scmp.eq.s32.totalorder %s27, 0
    %p138 = por %p136, %p137
    %s140 = sadd.s32 %s139, 1
    %p143 = scmp.eq.s32.totalorder %s21, 1
    %p144 = scmp.ne.s32.totalorder %s139, %s141
    %p145 = scmp.eq.s32.totalorder %s21, 0
    %p146 = por %p144, %p145
    %p147 = scmp.ne.s32.totalorder %s139, %s141
    %p148 = scmp.eq.s32.totalorder %s26, 1
    %p149 = por %p147, %p148
    %p150 = scmp.ne.s32.totalorder %s141, %s142
    %p151 = scmp.eq.s32.totalorder %s26, 0
    %p152 = por %p150, %p151
    %p153 = scmp.ne.s32.totalorder %s141, %s142
    %p154 = scmp.eq.s32.totalorder %s27, 1
    %p155 = por %p153, %p154
    %p157 = scmp.ne.s32.totalorder %s142, %s156
    %p158 = scmp.eq.s32.totalorder %s27, 0
    %p159 = por %p157, %p158
    %s161 = sadd.s32 %s160, 1
    %p164 = scmp.eq.s32.totalorder %s21, 1
    %p165 = scmp.ne.s32.totalorder %s160, %s162
    %p166 = scmp.eq.s32.totalorder %s21, 0
    %p167 = por %p165, %p166
    %p168 = scmp.ne.s32.totalorder %s160, %s162
    %p169 = scmp.eq.s32.totalorder %s26, 1
    %p170 = por %p168, %p169
    %p171 = scmp.ne.s32.totalorder %s162, %s163
    %p172 = scmp.eq.s32.totalorder %s26, 0
    %p173 = por %p171, %p172
    %p174 = scmp.ne.s32.totalorder %s162, %s163
    %p175 = scmp.eq.s32.totalorder %s27, 1
    %p176 = por %p174, %p175
    %p178 = scmp.ne.s32.totalorder %s163, %s177
    %p179 = scmp.eq.s32.totalorder %s27, 0
    %p180 = por %p178, %p179
    %s182 = sadd.s32 %s181, 1
    %p185 = scmp.eq.s32.totalorder %s21, 1
    %p186 = scmp.ne.s32.totalorder %s181, %s183
    %p187 = scmp.eq.s32.totalorder %s21, 0
    %p188 = por %p186, %p187
    %p189 = scmp.ne.s32.totalorder %s181, %s183
    %p190 = scmp.eq.s32.totalorder %s26, 1
    %p191 = por %p189, %p190
    %p192 = scmp.ne.s32.totalorder %s183, %s184
    %p193 = scmp.eq.s32.totalorder %s26, 0
    %p194 = por %p192, %p193
    %p195 = scmp.ne.s32.totalorder %s183, %s184
    %p196 = scmp.eq.s32.totalorder %s27, 1
    %p197 = por %p195, %p196
    %p199 = scmp.ne.s32.totalorder %s184, %s198
    %p200 = scmp.eq.s32.totalorder %s27, 0
    %p201 = por %p199, %p200
    %s203 = sadd.s32 %s202, 1
    %p206 = scmp.eq.s32.totalorder %s21, 1
    %p207 = scmp.ne.s32.totalorder %s202, %s204
    %p208 = scmp.eq.s32.totalorder %s21, 0
    %p209 = por %p207, %p208
    %p210 = scmp.ne.s32.totalorder %s202, %s204
    %p211 = scmp.eq.s32.totalorder %s26, 1
    %p212 = por %p210, %p211
    %p213 = scmp.ne.s32.totalorder %s204, %s205
    %p214 = scmp.eq.s32.totalorder %s26, 0
    %p215 = por %p213, %p214
    %p216 = scmp.ne.s32.totalorder %s204, %s205
    %p217 = scmp.eq.s32.totalorder %s27, 1
    %p218 = por %p216, %p217
    %p220 = scmp.ne.s32.totalorder %s205, %s219
    %p221 = scmp.eq.s32.totalorder %s27, 0
    %p222 = por %p220, %p221
    %s224 = sadd.s32 %s223, 1
    %p227 = scmp.eq.s32.totalorder %s21, 1
    %p228 = scmp.ne.s32.totalorder %s223, %s225
    %p229 = scmp.eq.s32.totalorder %s21, 0
    %p230 = por %p228, %p229
    %p231 = scmp.ne.s32.totalorder %s223, %s225
    %p232 = scmp.eq.s32.totalorder %s26, 1
    %p233 = por %p231, %p232
    %p234 = scmp.ne.s32.totalorder %s225, %s226
    %p235 = scmp.eq.s32.totalorder %s26, 0
    %p236 = por %p234, %p235
    %p237 = scmp.ne.s32.totalorder %s225, %s226
    %p238 = scmp.eq.s32.totalorder %s27, 1
    %p239 = por %p237, %p238
    %p241 = scmp.ne.s32.totalorder %s226, %s240
    %p242 = scmp.eq.s32.totalorder %s27, 0
    %p243 = por %p241, %p242
    %s245 = sadd.s32 %s244, 1
    %p248 = scmp.eq.s32.totalorder %s21, 1
    %p249 = scmp.ne.s32.totalorder %s244, %s246
    %p250 = scmp.eq.s32.totalorder %s21, 0
    %p251 = por %p249, %p250
    %p252 = scmp.ne.s32.totalorder %s244, %s246
    %p253 = scmp.eq.s32.totalorder %s26, 1
    %p254 = por %p252, %p253
    %p255 = scmp.ne.s32.totalorder %s246, %s247
    %p256 = scmp.eq.s32.totalorder %s26, 0
    %p257 = por %p255, %p256
    %p258 = scmp.ne.s32.totalorder %s246, %s247
    %p259 = scmp.eq.s32.totalorder %s27, 1
    %p260 = por %p258, %p259
    %p262 = scmp.ne.s32.totalorder %s247, %s261
    %p263 = scmp.eq.s32.totalorder %s27, 0
    %p264 = por %p262, %p263
    %s265 = ssub.s32 %s21, %s28
    %p266 = scmp.eq.s32.totalorder %s265, 0
    %s268 = sadd.s32 %s267, 1
    %s269 = scalar_select %p266, %s267, %s268
    %p272 = pneg %p266
    %p273 = scmp.eq.s32.totalorder %s21, 1
    %p274 = por %p272, %p273
    %p275 = scmp.ne.s32.totalorder %s267, %s270
    %p276 = scmp.eq.s32.totalorder %s21, 0
    %p277 = por %p275, %p276
    %p278 = scmp.ne.s32.totalorder %s267, %s270
    %p279 = scmp.eq.s32.totalorder %s26, 1
    %p280 = por %p278, %p279
    %p281 = scmp.ne.s32.totalorder %s270, %s271
    %p282 = scmp.eq.s32.totalorder %s26, 0
    %p283 = por %p281, %p282
    %p284 = scmp.ne.s32.totalorder %s270, %s271
    %p285 = scmp.eq.s32.totalorder %s27, 1
    %p286 = por %p284, %p285
    %p288 = scmp.ne.s32.totalorder %s271, %s287
    %p289 = scmp.eq.s32.totalorder %s27, 0
    %p290 = por %p288, %p289
    %s291 = ssub.s32 %s21, %s28
    %p292 = scmp.eq.s32.totalorder %s291, 0
    %s294 = sadd.s32 %s293, 1
    %s295 = scalar_select %p292, %s293, %s294
    %p298 = pneg %p292
    %p299 = scmp.eq.s32.totalorder %s21, 1
    %p300 = por %p298, %p299
    %p301 = scmp.ne.s32.totalorder %s293, %s296
    %p302 = scmp.eq.s32.totalorder %s21, 0
    %p303 = por %p301, %p302
    %p304 = scmp.ne.s32.totalorder %s293, %s296
    %p305 = scmp.eq.s32.totalorder %s26, 1
    %p306 = por %p304, %p305
    %p307 = scmp.ne.s32.totalorder %s296, %s297
    %p308 = scmp.eq.s32.totalorder %s26, 0
    %p309 = por %p307, %p308
    %p310 = scmp.ne.s32.totalorder %s296, %s297
    %p311 = scmp.eq.s32.totalorder %s27, 1
    %p312 = por %p310, %p311
    %p314 = scmp.ne.s32.totalorder %s297, %s313
    %p315 = scmp.eq.s32.totalorder %s27, 0
    %p316 = por %p314, %p315
    %s317 = ssub.s32 %s21, %s28
    %p318 = scmp.eq.s32.totalorder %s317, 0
    %s320 = sadd.s32 %s319, 1
    %s321 = scalar_select %p318, %s319, %s320
    %p324 = pneg %p318
    %p325 = scmp.eq.s32.totalorder %s21, 1
    %p326 = por %p324, %p325
    %p327 = scmp.ne.s32.totalorder %s319, %s322
    %p328 = scmp.eq.s32.totalorder %s21, 0
    %p329 = por %p327, %p328
    %p330 = scmp.ne.s32.totalorder %s319, %s322
    %p331 = scmp.eq.s32.totalorder %s26, 1
    %p332 = por %p330, %p331
    %p333 = scmp.ne.s32.totalorder %s322, %s323
    %p334 = scmp.eq.s32.totalorder %s26, 0
    %p335 = por %p333, %p334
    %p336 = scmp.ne.s32.totalorder %s322, %s323
    %p337 = scmp.eq.s32.totalorder %s27, 1
    %p338 = por %p336, %p337
    %p340 = scmp.ne.s32.totalorder %s323, %s339
    %p341 = scmp.eq.s32.totalorder %s27, 0
    %p342 = por %p340, %p341
    %s343 = ssub.s32 %s21, %s28
    %p344 = scmp.eq.s32.totalorder %s343, 0
    %s346 = sadd.s32 %s345, 1
    %s347 = scalar_select %p344, %s345, %s346
    %p350 = pneg %p344
    %p351 = scmp.eq.s32.totalorder %s21, 1
    %p352 = por %p350, %p351
    %p353 = scmp.ne.s32.totalorder %s345, %s348
    %p354 = scmp.eq.s32.totalorder %s21, 0
    %p355 = por %p353, %p354
    %p356 = scmp.ne.s32.totalorder %s345, %s348
    %p357 = scmp.eq.s32.totalorder %s26, 1
    %p358 = por %p356, %p357
    %p359 = scmp.ne.s32.totalorder %s348, %s349
    %p360 = scmp.eq.s32.totalorder %s26, 0
    %p361 = por %p359, %p360
    %p362 = scmp.ne.s32.totalorder %s348, %s349
    %p363 = scmp.eq.s32.totalorder %s27, 1
    %p364 = por %p362, %p363
    %p366 = scmp.ne.s32.totalorder %s349, %s365
    %p367 = scmp.eq.s32.totalorder %s27, 0
    %p368 = por %p366, %p367
    %p369 = scmp.le.s32.totalorder 1, %s21
    %p370 = scmp.lt.s32.totalorder %s21, 3
    %p371 = pnand %p369, %p370
    %p372 = pneg %p371
    // Predicated region
    $region9: #{_lambda_.4} parent=5 // pred_check
      _
    $region10: #{_lambda_.4} parent=5 // pred_check_branch
      %374 = sbr.rel (%p371) target = $region12
    $region11: #{_lambda_.4} parent=5 // pred_region
      %s375 = ssub.s32 %s21, 1
      // Predicated region
      $region13: #{_lambda_.4} parent=11 // pred_check
        %p376 = pneg %p68
      $region14: #{_lambda_.4} parent=11 // pred_check_branch
        %378 = sbr.rel (%p376) target = $region16
      $region15: #{_lambda_.4} parent=11 // pred_region
        _
      $region16: #{_lambda_.4} parent=11 // pred_fallthru
        _
      // Predicated region
      $region17: #{_lambda_.4} parent=11 // pred_check
        %p379 = pneg %p89
      $region18: #{_lambda_.4} parent=11 // pred_check_branch
        %381 = sbr.rel (%p379) target = $region20
      $region19: #{_lambda_.4} parent=11 // pred_region
        _
      $region20: #{_lambda_.4} parent=11 // pred_fallthru
        _
      // Predicated region
      $region21: #{_lambda_.4} parent=11 // pred_check
        %p382 = pneg %p110
      $region22: #{_lambda_.4} parent=11 // pred_check_branch
        %384 = sbr.rel (%p382) target = $region24
      $region23: #{_lambda_.4} parent=11 // pred_region
        _
      $region24: #{_lambda_.4} parent=11 // pred_fallthru
        _
      // Predicated region
      $region25: #{_lambda_.4} parent=11 // pred_check
        %p385 = pneg %p131
      $region26: #{_lambda_.4} parent=11 // pred_check_branch
        %387 = sbr.rel (%p385) target = $region28
      $region27: #{_lambda_.4} parent=11 // pred_region
        _
      $region28: #{_lambda_.4} parent=11 // pred_fallthru
        _
      // Predicated region
      $region29: #{_lambda_.4} parent=11 // pred_check
        %p388 = pneg %p152
      $region30: #{_lambda_.4} parent=11 // pred_check_branch
        %390 = sbr.rel (%p388) target = $region32
      $region31: #{_lambda_.4} parent=11 // pred_region
        _
      $region32: #{_lambda_.4} parent=11 // pred_fallthru
        _
      // Predicated region
      $region33: #{_lambda_.4} parent=11 // pred_check
        %p391 = pneg %p173
      $region34: #{_lambda_.4} parent=11 // pred_check_branch
        %393 = sbr.rel (%p391) target = $region36
      $region35: #{_lambda_.4} parent=11 // pred_region
        _
      $region36: #{_lambda_.4} parent=11 // pred_fallthru
        _
      // Predicated region
      $region37: #{_lambda_.4} parent=11 // pred_check
        %p394 = pneg %p194
      $region38: #{_lambda_.4} parent=11 // pred_check_branch
        %396 = sbr.rel (%p394) target = $region40
      $region39: #{_lambda_.4} parent=11 // pred_region
        _
      $region40: #{_lambda_.4} parent=11 // pred_fallthru
        _
      // Predicated region
      $region41: #{_lambda_.4} parent=11 // pred_check
        %p397 = pneg %p215
      $region42: #{_lambda_.4} parent=11 // pred_check_branch
        %399 = sbr.rel (%p397) target = $region44
      $region43: #{_lambda_.4} parent=11 // pred_region
        _
      $region44: #{_lambda_.4} parent=11 // pred_fallthru
        _
      // Predicated region
      $region45: #{_lambda_.4} parent=11 // pred_check
        %p400 = pneg %p236
      $region46: #{_lambda_.4} parent=11 // pred_check_branch
        %402 = sbr.rel (%p400) target = $region48
      $region47: #{_lambda_.4} parent=11 // pred_region
        _
      $region48: #{_lambda_.4} parent=11 // pred_fallthru
        _
      // Predicated region
      $region49: #{_lambda_.4} parent=11 // pred_check
        %p403 = pneg %p257
      $region50: #{_lambda_.4} parent=11 // pred_check_branch
        %405 = sbr.rel (%p403) target = $region52
      $region51: #{_lambda_.4} parent=11 // pred_region
        _
      $region52: #{_lambda_.4} parent=11 // pred_fallthru
        _
    $region12: #{_lambda_.4} parent=5 // pred_fallthru
      _
    %p406 = scmp.lt.s32.totalorder %s21, 2
    // Predicated region
    $region53: #{_lambda_.4} parent=5 // pred_check
      %p407 = pneg %p406
    $region54: #{_lambda_.4} parent=5 // pred_check_branch
      %409 = sbr.rel (%p407) target = $region56
    $region55: #{_lambda_.4} parent=5 // pred_region
      // Predicated region
      $region57: #{_lambda_.4} parent=55 // pred_check
        %p410 = pneg %p41
      $region58: #{_lambda_.4} parent=55 // pred_check_branch
        %412 = sbr.rel (%p410) target = $region60
      $region59: #{_lambda_.4} parent=55 // pred_region
        %p413 = scmp.lt.s32.totalorder %s21, 1
        %s414 = scalar_select %p413, %s21, 1
        %s415 = smul.addr %s414, 3
        %s416 = smul.addr %s415, 8
        %s417 = scalar_lea.vmem %s0, %s416
      $region60: #{_lambda_.4} parent=55 // pred_fallthru
        _
    $region56: #{_lambda_.4} parent=5 // pred_fallthru
      _
    %p418 = scmp.le.s32.totalorder 1, %s21
    %p419 = scmp.lt.s32.totalorder %s21, 3
    %p420 = pnand %p418, %p419
    %p421 = pneg %p420
    // Predicated region
    $region61: #{_lambda_.4} parent=5 // pred_check
      _
    $region62: #{_lambda_.4} parent=5 // pred_check_branch
      %423 = sbr.rel (%p420) target = $region64
    $region63: #{_lambda_.4} parent=5 // pred_region
      %s424 = ssub.s32 %s21, 1
      %p425 = scmp.lt.s32.totalorder %s26, 1
      %s426 = scalar_select %p425, %s26, 1
      %s427 = smul.addr %s426, 3
      %s428 = smul.addr %s427, 8
      %s429 = scalar_lea.vmem %s0, %s428
      %p430 = pneg %p47
      %p431 = pneg %p44
      %p432 = pneg %p68
      %p433 = pneg %p65
      %p434 = pneg %p89
      %p435 = pneg %p86
      %p436 = pneg %p110
      %p437 = pneg %p107
      %p438 = pneg %p131
      %p439 = pneg %p128
      %p440 = pneg %p152
      %p441 = pneg %p149
      %p442 = pneg %p173
      %p443 = pneg %p170
      %p444 = pneg %p194
      %p445 = pneg %p191
      %p446 = pneg %p215
      %p447 = pneg %p212
      %p448 = pneg %p236
      %p449 = pneg %p233
      %p450 = pneg %p257
      %p451 = pneg %p254
      %p452 = pneg %p283
      %p453 = pneg %p280
      %p454 = scmp.lt.s32.totalorder %s26, 1
      %s455 = scalar_select %p454, %s26, 1
      %s456 = smul.addr %s455, 2
      %s457 = smul.addr %s456, 8
      %s458 = scalar_lea.vmem %s11, %s457
      %p459 = pneg %p309
      %p460 = pneg %p306
      %p461 = scmp.lt.s32.totalorder %s26, 1
      %s462 = scalar_select %p461, %s26, 1
      %s463 = smul.addr %s462, 8
      %s464 = scalar_lea.vmem %s12, %s463
      %p465 = pneg %p335
      %p466 = pneg %p332
      %p467 = scmp.lt.s32.totalorder %s26, 1
      %s468 = scalar_select %p467, %s26, 1
      %s469 = scalar_lea.vmem %s13, %s468
      %p470 = pneg %p361
      %p471 = pneg %p358
      %p472 = scmp.lt.s32.totalorder %s26, 1
      %s473 = scalar_select %p472, %s26, 1
      %s474 = scalar_lea.vmem %s14, %s473
      %p475 = scmp.lt.s32.totalorder %s26, 1
      %s476 = scalar_select %p475, %s26, 1
      %s477 = smul.addr %s476, 3
      %s478 = smul.addr %s477, 8
      %s479 = scalar_lea.vmem %s0, %s478
      %p480 = scmp.lt.s32.totalorder %s26, 1
      %s481 = scalar_select %p480, %s26, 1
      %s482 = smul.addr %s481, 2
      %s483 = smul.addr %s482, 8
      %s484 = scalar_lea.vmem %s11, %s483
      %p485 = scmp.lt.s32.totalorder %s26, 1
      %s486 = scalar_select %p485, %s26, 1
      %s487 = smul.addr %s486, 8
      %s488 = scalar_lea.vmem %s12, %s487
      %p489 = scmp.lt.s32.totalorder %s26, 1
      %s490 = scalar_select %p489, %s26, 1
      %s491 = scalar_lea.vmem %s13, %s490
      %p492 = scmp.lt.s32.totalorder %s26, 1
      %s493 = scalar_select %p492, %s26, 1
      %s494 = scalar_lea.vmem %s14, %s493
      %v495 = vld [vmem:[%s479] sm:$0xff]
      %v496 = vld [vmem:[%s479 + $0x8] sm:$0xff]
      %v497 = vld [vmem:[%s479 + $0x10] sm:$0x7]
      %v498 = vld [vmem:[%s1] sm:$0xff]
      %v499 = vld [vmem:[%s1 + $0x8] sm:$0xff]
      %v500 = vld [vmem:[%s2] sm:$0xff]
      %v501 = vld [vmem:[%s2 + $0x8] sm:$0xff]
      %v502 = vld [vmem:[%s2 + $0x10] sm:$0x7]
      %vm503 = vcmask 130048
      %v505 = vsel %vm503, %v495, 0
      %v508 = vsel %vm503, %v496, 0
      %v511 = vsel %vm503, %v497, 0
      %513 = vmatprep.subr.mxu0 0.0
      %514 = vmatpush1.msra.mxu0 %v498
      %515 = vmatprep.subr.mxu0 0.0
      %516 = vmatpush1.msra.mxu0 %v499
      %517 = vmatprep.subr.mxu0 0.0
      %518 = vmatpush1.msra.mxu0 0.0
      %519 = vmatprep.subr.mxu0 0.0
      %520 = vmatpush1.msra.mxu0 0.0
      %521 = vmatprep.subr.mxu0 0.0
      %522 = vmatpush1.msra.mxu0 0.0
      %523 = vmatprep.subr.mxu0 0.0
      %524 = vmatpush1.msra.mxu0 0.0
      %525 = vmatprep.subr.mxu0 0.0
      %526 = vmatpush1.msra.mxu0 0.0
      %527 = vmatprep.subr.mxu0 0.0
      %528 = vmatpush1.msra.mxu0 0.0
      %529 = vmatprep.subr.mxu0 0.0
      %530 = vmatpush1.msra.mxu0 0.0
      %531 = vmatprep.subr.mxu0 0.0
      %532 = vmatpush1.msra.mxu0 0.0
      %533 = vmatprep.subr.mxu0 0.0
      %534 = vmatpush1.msra.mxu0 0.0
      %535 = vmatprep.subr.mxu0 0.0
      %536 = vmatpush1.msra.mxu0 0.0
      %537 = vmatprep.subr.mxu0 0.0
      %538 = vmatpush1.msra.mxu0 0.0
      %539 = vmatprep.subr.mxu0 0.0
      %540 = vmatpush1.msra.mxu0 0.0
      %541 = vmatprep.subr.mxu0 0.0
      %542 = vmatpush1.msra.mxu0 0.0
      %543 = vmatprep.subr.mxu0 0.0
      %544 = vmatpush1.msra.mxu0 0.0
      %545 = vmatprep.subr.mxu0 0.0
      %546 = vmatpush1.msra.mxu0 0.0
      %547 = vmatprep.subr.mxu0 0.0
      %548 = vmatpush1.msra.mxu0 0.0
      %549 = vmatprep.subr.mxu0 0.0
      %550 = vmatpush1.msra.mxu0 0.0
      %551 = vmatprep.subr.mxu0 0.0
      %552 = vmatpush1.msra.mxu0 0.0
      %553 = vmatprep.subr.mxu0 0.0
      %554 = vmatpush1.msra.mxu0 0.0
      %555 = vmatprep.subr.mxu0 0.0
      %556 = vmatpush1.msra.mxu0 0.0
      %557 = vmatprep.subr.mxu0 0.0
      %558 = vmatpush1.msra.mxu0 0.0
      %559 = vmatprep.subr.mxu0 0.0
      %560 = vmatpush1.msra.mxu0 0.0
      %561 = vmatprep.subr.mxu0 0.0
      %562 = vmatpush1.msra.mxu0 0.0
      %563 = vmatprep.subr.mxu0 0.0
      %564 = vmatpush1.msra.mxu0 0.0
      %565 = vmatprep.subr.mxu0 0.0
      %566 = vmatpush1.msra.mxu0 0.0
      %567 = vmatprep.subr.mxu0 0.0
      %568 = vmatpush1.msra.mxu0 0.0
      %569 = vmatprep.subr.mxu0 0.0
      %570 = vmatpush1.msra.mxu0 0.0
      %571 = vmatprep.subr.mxu0 0.0
      %572 = vmatpush1.msra.mxu0 0.0
      %573 = vmatprep.subr.mxu0 0.0
      %574 = vmatpush1.msra.mxu0 0.0
      %575 = vmatprep.subr.mxu0 0.0
      %576 = vmatpush1.msra.mxu0 0.0
      %577 = vmatprep.mubr.f32.mxu0 0.0
      %578 = vmatmul.mubr.f32.gmra.mrb[0].mxu0 %v505
      %v579 = vpop.f32.mrb[0].mxu0
      %v580 = vadd.f32 %v500, %v579
      %v581 = vpop.f32.mrb[0].mxu0
      %582 = vmatprep.mubr.f32.mxu0 0.0
      %583 = vmatmul.mubr.f32.gmra.mrb[0].mxu0 %v508
      %v584 = vpop.f32.mrb[0].mxu0
      %v585 = vadd.f32 %v501, %v584
      %v586 = vpop.f32.mrb[0].mxu0
      %587 = vmatprep.mubr.f32.mxu0 0.0
      %588 = vmatmul.mubr.f32.gmra.mrb[0].mxu0 %v511
      %v589 = vpop.f32.mrb[0].mxu0
      %v590 = vadd.f32 %v502, %v589
      %v591 = vpop.f32.mrb[0].mxu0
      %592 = vdwg.mxu0
      %v593 = vld [vmem:[%s3] sm:$0xff]
      %v594 = vld [vmem:[%s3 + $0x8] sm:$0xff]
      %v595 = vld [vmem:[%s3 + $0x10] sm:$0xff]
      %v596 = vld [vmem:[%s3 + $0x18] sm:$0xff]
      %v597 = vld [vmem:[%s3 + $0x20] sm:$0xff]
      %v598 = vld [vmem:[%s3 + $0x28] sm:$0xff]
      %v599 = vld [vmem:[%s3 + $0x30] sm:$0xff]
      %v600 = vld [vmem:[%s3 + $0x38] sm:$0xff]
      %v601 = vld [vmem:[%s3 + $0x40] sm:$0xff]
      %v602 = vld [vmem:[%s3 + $0x48] sm:$0xff]
      %v603 = vld [vmem:[%s3 + $0x50] sm:$0xff]
      %v604 = vld [vmem:[%s3 + $0x58] sm:$0xff]
      %v605 = vld [vmem:[%s3 + $0x60] sm:$0xff]
      %v606 = vld [vmem:[%s3 + $0x68] sm:$0xff]
      %v607 = vld [vmem:[%s3 + $0x70] sm:$0xff]
      %v608 = vld [vmem:[%s3 + $0x78] sm:$0xff]
      %v609 = vld [vmem:[%s4] sm:$0x1]
      %v611 = vlaneseq
      %v612 = vshrl.u32 %v611, 7
      %v613 = vsub.s32 0, %v612
      %v614 = vrot.slane %v609, %v613
      %616 = vmatprep.subr.mxu0 0.0
      %617 = vmatpush1.msra.mxu0 %v593
      %618 = vmatprep.subr.mxu0 0.0
      %619 = vmatpush1.msra.mxu0 %v594
      %620 = vmatprep.subr.mxu0 0.0
      %621 = vmatpush1.msra.mxu0 %v595
      %622 = vmatprep.subr.mxu0 0.0
      %623 = vmatpush1.msra.mxu0 %v596
      %624 = vmatprep.subr.mxu0 0.0
      %625 = vmatpush1.msra.mxu0 %v597
      %626 = vmatprep.subr.mxu0 0.0
      %627 = vmatpush1.msra.mxu0 %v598
      %628 = vmatprep.subr.mxu0 0.0
      %629 = vmatpush1.msra.mxu0 %v599
      %630 = vmatprep.subr.mxu0 0.0
      %631 = vmatpush1.msra.mxu0 %v600
      %632 = vmatprep.subr.mxu0 0.0
      %633 = vmatpush1.msra.mxu0 %v601
      %634 = vmatprep.subr.mxu0 0.0
      %635 = vmatpush1.msra.mxu0 %v602
      %636 = vmatprep.subr.mxu0 0.0
      %637 = vmatpush1.msra.mxu0 %v603
      %638 = vmatprep.subr.mxu0 0.0
      %639 = vmatpush1.msra.mxu0 %v604
      %640 = vmatprep.subr.mxu0 0.0
      %641 = vmatpush1.msra.mxu0 %v605
      %642 = vmatprep.subr.mxu0 0.0
      %643 = vmatpush1.msra.mxu0 %v606
      %644 = vmatprep.subr.mxu0 0.0
      %645 = vmatpush1.msra.mxu0 %v607
      %646 = vmatprep.subr.mxu0 0.0
      %647 = vmatpush1.msra.mxu0 %v608
      %648 = vmatprep.subr.mxu0 0.0
      %649 = vmatpush1.msra.mxu0 0.0
      %650 = vmatprep.subr.mxu0 0.0
      %651 = vmatpush1.msra.mxu0 0.0
      %652 = vmatprep.subr.mxu0 0.0
      %653 = vmatpush1.msra.mxu0 0.0
      %654 = vmatprep.subr.mxu0 0.0
      %655 = vmatpush1.msra.mxu0 0.0
      %656 = vmatprep.subr.mxu0 0.0
      %657 = vmatpush1.msra.mxu0 0.0
      %658 = vmatprep.subr.mxu0 0.0
      %659 = vmatpush1.msra.mxu0 0.0
      %660 = vmatprep.subr.mxu0 0.0
      %661 = vmatpush1.msra.mxu0 0.0
      %662 = vmatprep.subr.mxu0 0.0
      %663 = vmatpush1.msra.mxu0 0.0
      %664 = vmatprep.subr.mxu0 0.0
      %665 = vmatpush1.msra.mxu0 0.0
      %666 = vmatprep.subr.mxu0 0.0
      %667 = vmatpush1.msra.mxu0 0.0
      %668 = vmatprep.subr.mxu0 0.0
      %669 = vmatpush1.msra.mxu0 0.0
      %670 = vmatprep.subr.mxu0 0.0
      %671 = vmatpush1.msra.mxu0 0.0
      %672 = vmatprep.subr.mxu0 0.0
      %673 = vmatpush1.msra.mxu0 0.0
      %674 = vmatprep.subr.mxu0 0.0
      %675 = vmatpush1.msra.mxu0 0.0
      %676 = vmatprep.subr.mxu0 0.0
      %677 = vmatpush1.msra.mxu0 0.0
      %678 = vmatprep.subr.mxu0 0.0
      %679 = vmatpush1.msra.mxu0 0.0
      %680 = vmatprep.mubr.f32.mxu0 0.0
      %681 = vmatmul.mubr.f32.gmra.mrb[0].mxu0 %v580
      %v682 = vpop.f32.mrb[0].mxu0
      %v683 = vadd.f32 %v614, %v682
      %v684 = vpop.f32.mrb[0].mxu0
      %685 = vmatprep.mubr.f32.mxu0 0.0
      %686 = vmatmul.mubr.f32.gmra.mrb[0].mxu0 %v585
      %v687 = vpop.f32.mrb[0].mxu0
      %v688 = vadd.f32 %v614, %v687
      %v689 = vpop.f32.mrb[0].mxu0
      %690 = vmatprep.mubr.f32.mxu0 0.0
      %691 = vmatmul.mubr.f32.gmra.mrb[0].mxu0 %v590
      %v692 = vpop.f32.mrb[0].mxu0
      %v693 = vadd.f32 %v614, %v692
      %v694 = vpop.f32.mrb[0].mxu0
      %695 = vdwg.mxu0
      %696 = vst [vmem:[#allocation2] sm:$0xff] %v683
      %697 = vst [vmem:[#allocation2 + $0x8] sm:$0xff] %v688
      %698 = vst [vmem:[#allocation2 + $0x10] sm:$0x7] %v693
      %v699 = vld [vmem:[#allocation2] sm:$0xff]
      %v700 = vld [vmem:[#allocation2 + $0x8] sm:$0x1f]
      %701 = vst [vmem:[#allocation3] sm:$0xff] %v699
      %702 = vst [vmem:[#allocation3 + $0x38] sm:$0x1f] %v700
      %v703 = vld [vmem:[#allocation2 + $0x1] sm:$0xff]
      %v704 = vld [vmem:[#allocation2 + $0x9] sm:$0x1f]
      %705 = vst [vmem:[#allocation3 + $0x8] sm:$0xff] %v703
      %706 = vst [vmem:[#allocation3 + $0x40] sm:$0x1f] %v704
      %v707 = vld [vmem:[#allocation2 + $0x2] sm:$0xff]
      %v708 = vld [vmem:[#allocation2 + $0xa] sm:$0x1f]
      %709 = vst [vmem:[#allocation3 + $0x10] sm:$0xff] %v707
      %710 = vst [vmem:[#allocation3 + $0x48] sm:$0x1f] %v708
      %v711 = vld [vmem:[#allocation2 + $0x3] sm:$0xff]
      %v712 = vld [vmem:[#allocation2 + $0xb] sm:$0x1f]
      %713 = vst [vmem:[#allocation3 + $0x18] sm:$0xff] %v711
      %714 = vst [vmem:[#allocation3 + $0x50] sm:$0x1f] %v712
      %v715 = vld [vmem:[#allocation2 + $0x4] sm:$0xff]
      %v716 = vld [vmem:[#allocation2 + $0xc] sm:$0x1f]
      %717 = vst [vmem:[#allocation3 + $0x20] sm:$0xff] %v715
      %718 = vst [vmem:[#allocation3 + $0x58] sm:$0x1f] %v716
      %v719 = vld [vmem:[#allocation2 + $0x5] sm:$0xff]
      %v720 = vld [vmem:[#allocation2 + $0xd] sm:$0x1f]
      %721 = vst [vmem:[#allocation3 + $0x28] sm:$0xff] %v719
      %722 = vst [vmem:[#allocation3 + $0x60] sm:$0x1f] %v720
      %v723 = vld [vmem:[#allocation2 + $0x6] sm:$0xff]
      %v724 = vld [vmem:[#allocation2 + $0xe] sm:$0x1f]
      %725 = vst [vmem:[#allocation3 + $0x30] sm:$0xff] %v723
      %726 = vst [vmem:[#allocation3 + $0x68] sm:$0x1f] %v724
      %v727 = vld [vmem:[#allocation3] sm:$0xff]
      %v728 = vld [vmem:[#allocation3 + $0x8] sm:$0xff]
      %v729 = vld [vmem:[#allocation3 + $0x10] sm:$0xff]
      %v730 = vld [vmem:[#allocation3 + $0x18] sm:$0xff]
      %v731 = vld [vmem:[#allocation3 + $0x20] sm:$0xff]
      %v732 = vld [vmem:[#allocation3 + $0x28] sm:$0xff]
      %v733 = vld [vmem:[#allocation3 + $0x30] sm:$0xff]
      %v734 = vld [vmem:[#allocation3 + $0x38] sm:$0x1f]
      %v735 = vld [vmem:[#allocation3 + $0x40] sm:$0x1f]
      %v736 = vld [vmem:[#allocation3 + $0x48] sm:$0x1f]
      %v737 = vld [vmem:[#allocation3 + $0x50] sm:$0x1f]
      %v738 = vld [vmem:[#allocation3 + $0x58] sm:$0x1f]
      %v739 = vld [vmem:[#allocation3 + $0x60] sm:$0x1f]
      %v740 = vld [vmem:[#allocation3 + $0x68] sm:$0x1f]
      %v741 = vld [vmem:[%s5] sm:$0xff]
      %v742 = vld [vmem:[%s5 + $0x8] sm:$0xff]
      %v743 = vld [vmem:[%s5 + $0x10] sm:$0xff]
      %v744 = vld [vmem:[%s5 + $0x18] sm:$0xff]
      %v745 = vld [vmem:[%s5 + $0x20] sm:$0xff]
      %v746 = vld [vmem:[%s5 + $0x28] sm:$0xff]
      %v747 = vld [vmem:[%s5 + $0x30] sm:$0xff]
      %v748 = vld [vmem:[%s5 + $0x38] sm:$0xff]
      %v749 = vld [vmem:[%s5 + $0x40] sm:$0xff]
      %v750 = vld [vmem:[%s5 + $0x48] sm:$0xff]
      %v751 = vld [vmem:[%s5 + $0x50] sm:$0xff]
      %v752 = vld [vmem:[%s5 + $0x58] sm:$0xff]
      %v753 = vld [vmem:[%s5 + $0x60] sm:$0xff]
      %v754 = vld [vmem:[%s5 + $0x68] sm:$0xff]
      %v755 = vld [vmem:[%s5 + $0x70] sm:$0xff]
      %v756 = vld [vmem:[%s5 + $0x78] sm:$0xff]
      %v757 = vld [vmem:[%s5 + $0x80] sm:$0xff]
      %v758 = vld [vmem:[%s5 + $0x88] sm:$0xff]
      %v759 = vld [vmem:[%s5 + $0x90] sm:$0xff]
      %v760 = vld [vmem:[%s5 + $0x98] sm:$0xff]
      %v761 = vld [vmem:[%s5 + $0xa0] sm:$0xff]
      %v762 = vld [vmem:[%s5 + $0xa8] sm:$0xff]
      %v763 = vld [vmem:[%s5 + $0xb0] sm:$0xff]
      %v764 = vld [vmem:[%s5 + $0xb8] sm:$0xff]
      %v765 = vld [vmem:[%s5 + $0xc0] sm:$0xff]
      %v766 = vld [vmem:[%s5 + $0xc8] sm:$0xff]
      %v767 = vld [vmem:[%s5 + $0xd0] sm:$0xff]
      %v768 = vld [vmem:[%s5 + $0xd8] sm:$0xff]
      %v769 = vld [vmem:[%s5 + $0xe0] sm:$0xff]
      %v770 = vld [vmem:[%s5 + $0xe8] sm:$0xff]
      %v771 = vld [vmem:[%s5 + $0xf0] sm:$0xff]
      %v772 = vld [vmem:[%s5 + $0xf8] sm:$0xff]
      %v773 = vld [vmem:[%s5 + $0x100] sm:$0xff]
      %v774 = vld [vmem:[%s5 + $0x108] sm:$0xff]
      %v775 = vld [vmem:[%s5 + $0x110] sm:$0xff]
      %v776 = vld [vmem:[%s5 + $0x118] sm:$0xff]
      %v777 = vld [vmem:[%s5 + $0x120] sm:$0xff]
      %v778 = vld [vmem:[%s5 + $0x128] sm:$0xff]
      %v779 = vld [vmem:[%s5 + $0x130] sm:$0xff]
      %v780 = vld [vmem:[%s5 + $0x138] sm:$0xff]
      %v781 = vld [vmem:[%s5 + $0x140] sm:$0xff]
      %v782 = vld [vmem:[%s5 + $0x148] sm:$0xff]
      %v783 = vld [vmem:[%s5 + $0x150] sm:$0xff]
      %v784 = vld [vmem:[%s5 + $0x158] sm:$0xff]
      %v785 = vld [vmem:[%s5 + $0x160] sm:$0xff]
      %v786 = vld [vmem:[%s5 + $0x168] sm:$0xff]
      %v787 = vld [vmem:[%s5 + $0x170] sm:$0xff]
      %v788 = vld [vmem:[%s5 + $0x178] sm:$0xff]
      %v789 = vld [vmem:[%s5 + $0x180] sm:$0xff]
      %v790 = vld [vmem:[%s5 + $0x188] sm:$0xff]
      %v791 = vld [vmem:[%s5 + $0x190] sm:$0xff]
      %v792 = vld [vmem:[%s5 + $0x198] sm:$0xff]
      %v793 = vld [vmem:[%s5 + $0x1a0] sm:$0xff]
      %v794 = vld [vmem:[%s5 + $0x1a8] sm:$0xff]
      %v795 = vld [vmem:[%s5 + $0x1b0] sm:$0xff]
      %v796 = vld [vmem:[%s5 + $0x1b8] sm:$0xff]
      %v797 = vld [vmem:[%s5 + $0x1c0] sm:$0xff]
      %v798 = vld [vmem:[%s5 + $0x1c8] sm:$0xff]
      %v799 = vld [vmem:[%s5 + $0x1d0] sm:$0xff]
      %v800 = vld [vmem:[%s5 + $0x1d8] sm:$0xff]
      %v801 = vld [vmem:[%s5 + $0x1e0] sm:$0xff]
      %v802 = vld [vmem:[%s5 + $0x1e8] sm:$0xff]
      %v803 = vld [vmem:[%s5 + $0x1f0] sm:$0xff]
      %v804 = vld [vmem:[%s5 + $0x1f8] sm:$0xff]
      %v805 = vld [vmem:[%s5 + $0x200] sm:$0xff]
      %v806 = vld [vmem:[%s5 + $0x208] sm:$0xff]
      %v807 = vld [vmem:[%s5 + $0x210] sm:$0xff]
      %v808 = vld [vmem:[%s5 + $0x218] sm:$0xff]
      %v809 = vld [vmem:[%s5 + $0x220] sm:$0xff]
      %v810 = vld [vmem:[%s5 + $0x228] sm:$0xff]
      %v811 = vld [vmem:[%s5 + $0x230] sm:$0xff]
      %v812 = vld [vmem:[%s5 + $0x238] sm:$0xff]
      %v813 = vld [vmem:[%s5 + $0x240] sm:$0xff]
      %v814 = vld [vmem:[%s5 + $0x248] sm:$0xff]
      %v815 = vld [vmem:[%s5 + $0x250] sm:$0xff]
      %v816 = vld [vmem:[%s5 + $0x258] sm:$0xff]
      %v817 = vld [vmem:[%s5 + $0x260] sm:$0xff]
      %v818 = vld [vmem:[%s5 + $0x268] sm:$0xff]
      %v819 = vld [vmem:[%s5 + $0x270] sm:$0xff]
      %v820 = vld [vmem:[%s5 + $0x278] sm:$0xff]
      %v821 = vld [vmem:[%s5 + $0x280] sm:$0xff]
      %v822 = vld [vmem:[%s5 + $0x288] sm:$0xff]
      %v823 = vld [vmem:[%s5 + $0x290] sm:$0xff]
      %v824 = vld [vmem:[%s5 + $0x298] sm:$0xff]
      %v825 = vld [vmem:[%s5 + $0x2a0] sm:$0xff]
      %v826 = vld [vmem:[%s5 + $0x2a8] sm:$0xff]
      %v827 = vld [vmem:[%s5 + $0x2b0] sm:$0xff]
      %v828 = vld [vmem:[%s5 + $0x2b8] sm:$0xff]
      %v829 = vld [vmem:[%s5 + $0x2c0] sm:$0xff]
      %v830 = vld [vmem:[%s5 + $0x2c8] sm:$0xff]
      %v831 = vld [vmem:[%s5 + $0x2d0] sm:$0xff]
      %v832 = vld [vmem:[%s5 + $0x2d8] sm:$0xff]
      %v833 = vld [vmem:[%s5 + $0x2e0] sm:$0xff]
      %v834 = vld [vmem:[%s5 + $0x2e8] sm:$0xff]
      %v835 = vld [vmem:[%s5 + $0x2f0] sm:$0xff]
      %v836 = vld [vmem:[%s5 + $0x2f8] sm:$0xff]
      %v837 = vld [vmem:[%s5 + $0x300] sm:$0xff]
      %v838 = vld [vmem:[%s5 + $0x308] sm:$0xff]
      %v839 = vld [vmem:[%s5 + $0x310] sm:$0xff]
      %v840 = vld [vmem:[%s5 + $0x318] sm:$0xff]
      %v841 = vld [vmem:[%s5 + $0x320] sm:$0xff]
      %v842 = vld [vmem:[%s5 + $0x328] sm:$0xff]
      %v843 = vld [vmem:[%s5 + $0x330] sm:$0xff]
      %v844 = vld [vmem:[%s5 + $0x338] sm:$0xff]
      %v845 = vld [vmem:[%s5 + $0x340] sm:$0xff]
      %v846 = vld [vmem:[%s5 + $0x348] sm:$0xff]
      %v847 = vld [vmem:[%s5 + $0x350] sm:$0xff]
      %v848 = vld [vmem:[%s5 + $0x358] sm:$0xff]
      %v849 = vld [vmem:[%s5 + $0x360] sm:$0xff]
      %v850 = vld [vmem:[%s5 + $0x368] sm:$0xff]
      %v851 = vld [vmem:[%s5 + $0x370] sm:$0xff]
      %v852 = vld [vmem:[%s5 + $0x378] sm:$0xff]
      %v853 = vld [vmem:[%s5 + $0x380] sm:$0xff]
      %v854 = vld [vmem:[%s5 + $0x388] sm:$0xff]
      %v855 = vld [vmem:[%s5 + $0x390] sm:$0xff]
      %v856 = vld [vmem:[%s5 + $0x398] sm:$0xff]
      %v857 = vld [vmem:[%s5 + $0x3a0] sm:$0xff]
      %v858 = vld [vmem:[%s5 + $0x3a8] sm:$0xff]
      %v859 = vld [vmem:[%s5 + $0x3b0] sm:$0xff]
      %v860 = vld [vmem:[%s5 + $0x3b8] sm:$0xff]
      %v861 = vld [vmem:[%s5 + $0x3c0] sm:$0xff]
      %v862 = vld [vmem:[%s5 + $0x3c8] sm:$0xff]
      %v863 = vld [vmem:[%s5 + $0x3d0] sm:$0xff]
      %v864 = vld [vmem:[%s5 + $0x3d8] sm:$0xff]
      %v865 = vld [vmem:[%s5 + $0x3e0] sm:$0xff]
      %v866 = vld [vmem:[%s5 + $0x3e8] sm:$0xff]
      %v867 = vld [vmem:[%s5 + $0x3f0] sm:$0xff]
      %v868 = vld [vmem:[%s5 + $0x3f8] sm:$0xff]
      %v869 = vld [vmem:[%s5 + $0x400] sm:$0xff]
      %v870 = vld [vmem:[%s5 + $0x408] sm:$0xff]
      %v871 = vld [vmem:[%s5 + $0x410] sm:$0xff]
      %v872 = vld [vmem:[%s5 + $0x418] sm:$0xff]
      %v873 = vld [vmem:[%s5 + $0x420] sm:$0xff]
      %v874 = vld [vmem:[%s5 + $0x428] sm:$0xff]
      %v875 = vld [vmem:[%s5 + $0x430] sm:$0xff]
      %v876 = vld [vmem:[%s5 + $0x438] sm:$0xff]
      %v877 = vld [vmem:[%s5 + $0x440] sm:$0xff]
      %v878 = vld [vmem:[%s5 + $0x448] sm:$0xff]
      %v879 = vld [vmem:[%s5 + $0x450] sm:$0xff]
      %v880 = vld [vmem:[%s5 + $0x458] sm:$0xff]
      %v881 = vld [vmem:[%s5 + $0x460] sm:$0xff]
      %v882 = vld [vmem:[%s5 + $0x468] sm:$0xff]
      %v883 = vld [vmem:[%s5 + $0x470] sm:$0xff]
      %v884 = vld [vmem:[%s5 + $0x478] sm:$0xff]
      %v885 = vld [vmem:[%s5 + $0x480] sm:$0xff]
      %v886 = vld [vmem:[%s5 + $0x488] sm:$0xff]
      %v887 = vld [vmem:[%s5 + $0x490] sm:$0xff]
      %v888 = vld [vmem:[%s5 + $0x498] sm:$0xff]
      %v889 = vld [vmem:[%s5 + $0x4a0] sm:$0xff]
      %v890 = vld [vmem:[%s5 + $0x4a8] sm:$0xff]
      %v891 = vld [vmem:[%s5 + $0x4b0] sm:$0xff]
      %v892 = vld [vmem:[%s5 + $0x4b8] sm:$0xff]
      %v893 = vld [vmem:[%s5 + $0x4c0] sm:$0xff]
      %v894 = vld [vmem:[%s5 + $0x4c8] sm:$0xff]
      %v895 = vld [vmem:[%s5 + $0x4d0] sm:$0xff]
      %v896 = vld [vmem:[%s5 + $0x4d8] sm:$0xff]
      %v897 = vld [vmem:[%s5 + $0x4e0] sm:$0xff]
      %v898 = vld [vmem:[%s5 + $0x4e8] sm:$0xff]
      %v899 = vld [vmem:[%s5 + $0x4f0] sm:$0xff]
      %v900 = vld [vmem:[%s5 + $0x4f8] sm:$0xff]
      %v901 = vld [vmem:[%s5 + $0x500] sm:$0xff]
      %v902 = vld [vmem:[%s5 + $0x508] sm:$0xff]
      %v903 = vld [vmem:[%s5 + $0x510] sm:$0xff]
      %v904 = vld [vmem:[%s5 + $0x518] sm:$0xff]
      %v905 = vld [vmem:[%s5 + $0x520] sm:$0xff]
      %v906 = vld [vmem:[%s5 + $0x528] sm:$0xff]
      %v907 = vld [vmem:[%s5 + $0x530] sm:$0xff]
      %v908 = vld [vmem:[%s5 + $0x538] sm:$0xff]
      %v909 = vld [vmem:[%s5 + $0x540] sm:$0xff]
      %v910 = vld [vmem:[%s5 + $0x548] sm:$0xff]
      %v911 = vld [vmem:[%s5 + $0x550] sm:$0xff]
      %v912 = vld [vmem:[%s5 + $0x558] sm:$0xff]
      %v913 = vld [vmem:[%s5 + $0x560] sm:$0xff]
      %v914 = vld [vmem:[%s5 + $0x568] sm:$0xff]
      %v915 = vld [vmem:[%s5 + $0x570] sm:$0xff]
      %v916 = vld [vmem:[%s5 + $0x578] sm:$0xff]
      %v917 = vld [vmem:[%s5 + $0x580] sm:$0xff]
      %v918 = vld [vmem:[%s5 + $0x588] sm:$0xff]
      %v919 = vld [vmem:[%s5 + $0x590] sm:$0xff]
      %v920 = vld [vmem:[%s5 + $0x598] sm:$0xff]
      %v921 = vld [vmem:[%s5 + $0x5a0] sm:$0xff]
      %v922 = vld [vmem:[%s5 + $0x5a8] sm:$0xff]
      %v923 = vld [vmem:[%s5 + $0x5b0] sm:$0xff]
      %v924 = vld [vmem:[%s5 + $0x5b8] sm:$0xff]
      %v925 = vld [vmem:[%s5 + $0x5c0] sm:$0xff]
      %v926 = vld [vmem:[%s5 + $0x5c8] sm:$0xff]
      %v927 = vld [vmem:[%s5 + $0x5d0] sm:$0xff]
      %v928 = vld [vmem:[%s5 + $0x5d8] sm:$0xff]
      %v929 = vld [vmem:[%s5 + $0x5e0] sm:$0xff]
      %v930 = vld [vmem:[%s5 + $0x5e8] sm:$0xff]
      %v931 = vld [vmem:[%s5 + $0x5f0] sm:$0xff]
      %v932 = vld [vmem:[%s5 + $0x5f8] sm:$0xff]
      %v933 = vld [vmem:[%s5 + $0x600] sm:$0xff]
      %v934 = vld [vmem:[%s5 + $0x608] sm:$0xff]
      %v935 = vld [vmem:[%s5 + $0x610] sm:$0xff]
      %v936 = vld [vmem:[%s5 + $0x618] sm:$0xff]
      %v937 = vld [vmem:[%s5 + $0x620] sm:$0xff]
      %v938 = vld [vmem:[%s5 + $0x628] sm:$0xff]
      %v939 = vld [vmem:[%s5 + $0x630] sm:$0xff]
      %v940 = vld [vmem:[%s5 + $0x638] sm:$0xff]
      %v941 = vld [vmem:[%s5 + $0x640] sm:$0xff]
      %v942 = vld [vmem:[%s5 + $0x648] sm:$0xff]
      %v943 = vld [vmem:[%s5 + $0x650] sm:$0xff]
      %v944 = vld [vmem:[%s5 + $0x658] sm:$0xff]
      %v945 = vld [vmem:[%s5 + $0x660] sm:$0xff]
      %v946 = vld [vmem:[%s5 + $0x668] sm:$0xff]
      %v947 = vld [vmem:[%s5 + $0x670] sm:$0xff]
      %v948 = vld [vmem:[%s5 + $0x678] sm:$0xff]
      %v949 = vld [vmem:[%s5 + $0x680] sm:$0xff]
      %v950 = vld [vmem:[%s5 + $0x688] sm:$0xff]
      %v951 = vld [vmem:[%s5 + $0x690] sm:$0xff]
      %v952 = vld [vmem:[%s5 + $0x698] sm:$0xff]
      %v953 = vld [vmem:[%s5 + $0x6a0] sm:$0xff]
      %v954 = vld [vmem:[%s5 + $0x6a8] sm:$0xff]
      %v955 = vld [vmem:[%s5 + $0x6b0] sm:$0xff]
      %v956 = vld [vmem:[%s5 + $0x6b8] sm:$0xff]
      %v957 = vld [vmem:[%s5 + $0x6c0] sm:$0xff]
      %v958 = vld [vmem:[%s5 + $0x6c8] sm:$0xff]
      %v959 = vld [vmem:[%s5 + $0x6d0] sm:$0xff]
      %v960 = vld [vmem:[%s5 + $0x6d8] sm:$0xff]
      %v961 = vld [vmem:[%s5 + $0x6e0] sm:$0xff]
      %v962 = vld [vmem:[%s5 + $0x6e8] sm:$0xff]
      %v963 = vld [vmem:[%s5 + $0x6f0] sm:$0xff]
      %v964 = vld [vmem:[%s5 + $0x6f8] sm:$0xff]
      %v965 = vld [vmem:[%s6] sm:$0x3]
      %v967 = vlaneseq
      %v968 = vshrl.u32 %v967, 7
      %v969 = vsub.s32 0, %v968
      %v970 = vrot.slane %v965, %v969
      %v971 = vlaneseq
      %v972 = vshrl.u32 %v971, 7
      %v973 = vsub.s32 1, %v972
      %v974 = vrot.slane %v965, %v973
      %977 = vmatprep.subr.mxu0 %v742
      %978 = vmatpush1.msra.mxu0 %v741
      %979 = vmatprep.subr.mxu0 %v744
      %980 = vmatpush1.msra.mxu0 %v743
      %981 = vmatprep.subr.mxu0 %v746
      %982 = vmatpush1.msra.mxu0 %v745
      %983 = vmatprep.subr.mxu0 %v748
      %984 = vmatpush1.msra.mxu0 %v747
      %985 = vmatprep.subr.mxu0 %v750
      %986 = vmatpush1.msra.mxu0 %v749
      %987 = vmatprep.subr.mxu0 %v752
      %988 = vmatpush1.msra.mxu0 %v751
      %989 = vmatprep.subr.mxu0 %v754
      %990 = vmatpush1.msra.mxu0 %v753
      %991 = vmatprep.subr.mxu0 %v756
      %992 = vmatpush1.msra.mxu0 %v755
      %993 = vmatprep.subr.mxu0 %v758
      %994 = vmatpush1.msra.mxu0 %v757
      %995 = vmatprep.subr.mxu0 %v760
      %996 = vmatpush1.msra.mxu0 %v759
      %997 = vmatprep.subr.mxu0 %v762
      %998 = vmatpush1.msra.mxu0 %v761
      %999 = vmatprep.subr.mxu0 %v764
      %1000 = vmatpush1.msra.mxu0 %v763
      %1001 = vmatprep.subr.mxu0 %v766
      %1002 = vmatpush1.msra.mxu0 %v765
      %1003 = vmatprep.subr.mxu0 %v768
      %1004 = vmatpush1.msra.mxu0 %v767
      %1005 = vmatprep.subr.mxu0 %v770
      %1006 = vmatpush1.msra.mxu0 %v769
      %1007 = vmatprep.subr.mxu0 %v772
      %1008 = vmatpush1.msra.mxu0 %v771
      %1009 = vmatprep.subr.mxu0 %v774
      %1010 = vmatpush1.msra.mxu0 %v773
      %1011 = vmatprep.subr.mxu0 %v776
      %1012 = vmatpush1.msra.mxu0 %v775
      %1013 = vmatprep.subr.mxu0 %v778
      %1014 = vmatpush1.msra.mxu0 %v777
      %1015 = vmatprep.subr.mxu0 %v780
      %1016 = vmatpush1.msra.mxu0 %v779
      %1017 = vmatprep.subr.mxu0 %v782
      %1018 = vmatpush1.msra.mxu0 %v781
      %1019 = vmatprep.subr.mxu0 %v784
      %1020 = vmatpush1.msra.mxu0 %v783
      %1021 = vmatprep.subr.mxu0 %v786
      %1022 = vmatpush1.msra.mxu0 %v785
      %1023 = vmatprep.subr.mxu0 %v788
      %1024 = vmatpush1.msra.mxu0 %v787
      %1025 = vmatprep.subr.mxu0 %v790
      %1026 = vmatpush1.msra.mxu0 %v789
      %1027 = vmatprep.subr.mxu0 %v792
      %1028 = vmatpush1.msra.mxu0 %v791
      %1029 = vmatprep.subr.mxu0 %v794
      %1030 = vmatpush1.msra.mxu0 %v793
      %1031 = vmatprep.subr.mxu0 %v796
      %1032 = vmatpush1.msra.mxu0 %v795
      %1033 = vmatprep.subr.mxu0 %v798
      %1034 = vmatpush1.msra.mxu0 %v797
      %1035 = vmatprep.subr.mxu0 %v800
      %1036 = vmatpush1.msra.mxu0 %v799
      %1037 = vmatprep.subr.mxu0 %v802
      %1038 = vmatpush1.msra.mxu0 %v801
      %1039 = vmatprep.subr.mxu0 %v804
      %1040 = vmatpush1.msra.mxu0 %v803
      %1041 = vmatprep.mubr.f32.mxu0 %v728
      %1042 = vmatmul.mubr.f32.gmra.mrb[0].mxu0 %v727
      %v1043 = vpop.f32.mrb[0].mxu0
      %v1044 = vadd.f32 %v970, %v1043
      %v1045 = vpop.f32.mrb[0].mxu0
      %v1046 = vadd.f32 %v974, %v1045
      %1047 = vmatprep.mubr.f32.mxu0 %v735
      %1048 = vmatmul.mubr.f32.gmra.mrb[0].mxu0 %v734
      %v1049 = vpop.f32.mrb[0].mxu0
      %v1050 = vadd.f32 %v970, %v1049
      %v1051 = vpop.f32.mrb[0].mxu0
      %v1052 = vadd.f32 %v974, %v1051
      %1053 = vdwg.mxu0
      %1054 = vmatprep.subr.mxu0 %v806
      %1055 = vmatpush1.msra.mxu0 %v805
      %1056 = vmatprep.subr.mxu0 %v808
      %1057 = vmatpush1.msra.mxu0 %v807
      %1058 = vmatprep.subr.mxu0 %v810
      %1059 = vmatpush1.msra.mxu0 %v809
      %1060 = vmatprep.subr.mxu0 %v812
      %1061 = vmatpush1.msra.mxu0 %v811
      %1062 = vmatprep.subr.mxu0 %v814
      %1063 = vmatpush1.msra.mxu0 %v813
      %1064 = vmatprep.subr.mxu0 %v816
      %1065 = vmatpush1.msra.mxu0 %v815
      %1066 = vmatprep.subr.mxu0 %v818
      %1067 = vmatpush1.msra.mxu0 %v817
      %1068 = vmatprep.subr.mxu0 %v820
      %1069 = vmatpush1.msra.mxu0 %v819
      %1070 = vmatprep.subr.mxu0 %v822
      %1071 = vmatpush1.msra.mxu0 %v821
      %1072 = vmatprep.subr.mxu0 %v824
      %1073 = vmatpush1.msra.mxu0 %v823
      %1074 = vmatprep.subr.mxu0 %v826
      %1075 = vmatpush1.msra.mxu0 %v825
      %1076 = vmatprep.subr.mxu0 %v828
      %1077 = vmatpush1.msra.mxu0 %v827
      %1078 = vmatprep.subr.mxu0 %v830
      %1079 = vmatpush1.msra.mxu0 %v829
      %1080 = vmatprep.subr.mxu0 %v832
      %1081 = vmatpush1.msra.mxu0 %v831
      %1082 = vmatprep.subr.mxu0 %v834
      %1083 = vmatpush1.msra.mxu0 %v833
      %1084 = vmatprep.subr.mxu0 %v836
      %1085 = vmatpush1.msra.mxu0 %v835
      %1086 = vmatprep.subr.mxu0 %v838
      %1087 = vmatpush1.msra.mxu0 %v837
      %1088 = vmatprep.subr.mxu0 %v840
      %1089 = vmatpush1.msra.mxu0 %v839
      %1090 = vmatprep.subr.mxu0 %v842
      %1091 = vmatpush1.msra.mxu0 %v841
      %1092 = vmatprep.subr.mxu0 %v844
      %1093 = vmatpush1.msra.mxu0 %v843
      %1094 = vmatprep.subr.mxu0 %v846
      %1095 = vmatpush1.msra.mxu0 %v845
      %1096 = vmatprep.subr.mxu0 %v848
      %1097 = vmatpush1.msra.mxu0 %v847
      %1098 = vmatprep.subr.mxu0 %v850
      %1099 = vmatpush1.msra.mxu0 %v849
      %1100 = vmatprep.subr.mxu0 %v852
      %1101 = vmatpush1.msra.mxu0 %v851
      %1102 = vmatprep.subr.mxu0 %v854
      %1103 = vmatpush1.msra.mxu0 %v853
      %1104 = vmatprep.subr.mxu0 %v856
      %1105 = vmatpush1.msra.mxu0 %v855
      %1106 = vmatprep.subr.mxu0 %v858
      %1107 = vmatpush1.msra.mxu0 %v857
      %1108 = vmatprep.subr.mxu0 %v860
      %1109 = vmatpush1.msra.mxu0 %v859
      %1110 = vmatprep.subr.mxu0 %v862
      %1111 = vmatpush1.msra.mxu0 %v861
      %1112 = vmatprep.subr.mxu0 %v864
      %1113 = vmatpush1.msra.mxu0 %v863
      %1114 = vmatprep.subr.mxu0 %v866
      %1115 = vmatpush1.msra.mxu0 %v865
      %1116 = vmatprep.subr.mxu0 %v868
      %1117 = vmatpush1.msra.mxu0 %v867
      %1118 = vmatprep.mubr.f32.mxu0 %v730
      %1119 = vmatmul.mubr.f32.gmra.mrb[0].mxu0 %v729
      %v1120 = vpop.f32.mrb[0].mxu0
      %v1121 = vadd.f32 %v1044, %v1120
      %v1122 = vpop.f32.mrb[0].mxu0
      %v1123 = vadd.f32 %v1046, %v1122
      %1124 = vmatprep.mubr.f32.mxu0 %v737
      %1125 = vmatmul.mubr.f32.gmra.mrb[0].mxu0 %v736
      %v1126 = vpop.f32.mrb[0].mxu0
      %v1127 = vadd.f32 %v1050, %v1126
      %v1128 = vpop.f32.mrb[0].mxu0
      %v1129 = vadd.f32 %v1052, %v1128
      %1130 = vdwg.mxu0
      %1131 = vmatprep.subr.mxu0 %v870
      %1132 = vmatpush1.msra.mxu0 %v869
      %1133 = vmatprep.subr.mxu0 %v872
      %1134 = vmatpush1.msra.mxu0 %v871
      %1135 = vmatprep.subr.mxu0 %v874
      %1136 = vmatpush1.msra.mxu0 %v873
      %1137 = vmatprep.subr.mxu0 %v876
      %1138 = vmatpush1.msra.mxu0 %v875
      %1139 = vmatprep.subr.mxu0 %v878
      %1140 = vmatpush1.msra.mxu0 %v877
      %1141 = vmatprep.subr.mxu0 %v880
      %1142 = vmatpush1.msra.mxu0 %v879
      %1143 = vmatprep.subr.mxu0 %v882
      %1144 = vmatpush1.msra.mxu0 %v881
      %1145 = vmatprep.subr.mxu0 %v884
      %1146 = vmatpush1.msra.mxu0 %v883
      %1147 = vmatprep.subr.mxu0 %v886
      %1148 = vmatpush1.msra.mxu0 %v885
      %1149 = vmatprep.subr.mxu0 %v888
      %1150 = vmatpush1.msra.mxu0 %v887
      %1151 = vmatprep.subr.mxu0 %v890
      %1152 = vmatpush1.msra.mxu0 %v889
      %1153 = vmatprep.subr.mxu0 %v892
      %1154 = vmatpush1.msra.mxu0 %v891
      %1155 = vmatprep.subr.mxu0 %v894
      %1156 = vmatpush1.msra.mxu0 %v893
      %1157 = vmatprep.subr.mxu0 %v896
      %1158 = vmatpush1.msra.mxu0 %v895
      %1159 = vmatprep.subr.mxu0 %v898
      %1160 = vmatpush1.msra.mxu0 %v897
      %1161 = vmatprep.subr.mxu0 %v900
      %1162 = vmatpush1.msra.mxu0 %v899
      %1163 = vmatprep.subr.mxu0 %v902
      %1164 = vmatpush1.msra.mxu0 %v901
      %1165 = vmatprep.subr.mxu0 %v904
      %1166 = vmatpush1.msra.mxu0 %v903
      %1167 = vmatprep.subr.mxu0 %v906
      %1168 = vmatpush1.msra.mxu0 %v905
      %1169 = vmatprep.subr.mxu0 %v908
      %1170 = vmatpush1.msra.mxu0 %v907
      %1171 = vmatprep.subr.mxu0 %v910
      %1172 = vmatpush1.msra.mxu0 %v909
      %1173 = vmatprep.subr.mxu0 %v912
      %1174 = vmatpush1.msra.mxu0 %v911
      %1175 = vmatprep.subr.mxu0 %v914
      %1176 = vmatpush1.msra.mxu0 %v913
      %1177 = vmatprep.subr.mxu0 %v916
      %1178 = vmatpush1.msra.mxu0 %v915
      %1179 = vmatprep.subr.mxu0 %v918
      %1180 = vmatpush1.msra.mxu0 %v917
      %1181 = vmatprep.subr.mxu0 %v920
      %1182 = vmatpush1.msra.mxu0 %v919
      %1183 = vmatprep.subr.mxu0 %v922
      %1184 = vmatpush1.msra.mxu0 %v921
      %1185 = vmatprep.subr.mxu0 %v924
      %1186 = vmatpush1.msra.mxu0 %v923
      %1187 = vmatprep.subr.mxu0 %v926
      %1188 = vmatpush1.msra.mxu0 %v925
      %1189 = vmatprep.subr.mxu0 %v928
      %1190 = vmatpush1.msra.mxu0 %v927
      %1191 = vmatprep.subr.mxu0 %v930
      %1192 = vmatpush1.msra.mxu0 %v929
      %1193 = vmatprep.subr.mxu0 %v932
      %1194 = vmatpush1.msra.mxu0 %v931
      %1195 = vmatprep.mubr.f32.mxu0 %v732
      %1196 = vmatmul.mubr.f32.gmra.mrb[0].mxu0 %v731
      %v1197 = vpop.f32.mrb[0].mxu0
      %v1198 = vadd.f32 %v1121, %v1197
      %v1199 = vpop.f32.mrb[0].mxu0
      %v1200 = vadd.f32 %v1123, %v1199
      %1201 = vmatprep.mubr.f32.mxu0 %v739
      %1202 = vmatmul.mubr.f32.gmra.mrb[0].mxu0 %v738
      %v1203 = vpop.f32.mrb[0].mxu0
      %v1204 = vadd.f32 %v1127, %v1203
      %v1205 = vpop.f32.mrb[0].mxu0
      %v1206 = vadd.f32 %v1129, %v1205
      %1207 = vdwg.mxu0
      %1208 = vmatprep.subr.mxu0 %v934
      %1209 = vmatpush1.msra.mxu0 %v933
      %1210 = vmatprep.subr.mxu0 %v936
      %1211 = vmatpush1.msra.mxu0 %v935
      %1212 = vmatprep.subr.mxu0 %v938
      %1213 = vmatpush1.msra.mxu0 %v937
      %1214 = vmatprep.subr.mxu0 %v940
      %1215 = vmatpush1.msra.mxu0 %v939
      %1216 = vmatprep.subr.mxu0 %v942
      %1217 = vmatpush1.msra.mxu0 %v941
      %1218 = vmatprep.subr.mxu0 %v944
      %1219 = vmatpush1.msra.mxu0 %v943
      %1220 = vmatprep.subr.mxu0 %v946
      %1221 = vmatpush1.msra.mxu0 %v945
      %1222 = vmatprep.subr.mxu0 %v948
      %1223 = vmatpush1.msra.mxu0 %v947
      %1224 = vmatprep.subr.mxu0 %v950
      %1225 = vmatpush1.msra.mxu0 %v949
      %1226 = vmatprep.subr.mxu0 %v952
      %1227 = vmatpush1.msra.mxu0 %v951
      %1228 = vmatprep.subr.mxu0 %v954
      %1229 = vmatpush1.msra.mxu0 %v953
      %1230 = vmatprep.subr.mxu0 %v956
      %1231 = vmatpush1.msra.mxu0 %v955
      %1232 = vmatprep.subr.mxu0 %v958
      %1233 = vmatpush1.msra.mxu0 %v957
      %1234 = vmatprep.subr.mxu0 %v960
      %1235 = vmatpush1.msra.mxu0 %v959
      %1236 = vmatprep.subr.mxu0 %v962
      %1237 = vmatpush1.msra.mxu0 %v961
      %1238 = vmatprep.subr.mxu0 %v964
      %1239 = vmatpush1.msra.mxu0 %v963
      %1240 = vmatprep.subr.mxu0 0.0
      %1241 = vmatpush1.msra.mxu0 0.0
      %1242 = vmatprep.subr.mxu0 0.0
      %1243 = vmatpush1.msra.mxu0 0.0
      %1244 = vmatprep.subr.mxu0 0.0
      %1245 = vmatpush1.msra.mxu0 0.0
      %1246 = vmatprep.subr.mxu0 0.0
      %1247 = vmatpush1.msra.mxu0 0.0
      %1248 = vmatprep.subr.mxu0 0.0
      %1249 = vmatpush1.msra.mxu0 0.0
      %1250 = vmatprep.subr.mxu0 0.0
      %1251 = vmatpush1.msra.mxu0 0.0
      %1252 = vmatprep.subr.mxu0 0.0
      %1253 = vmatpush1.msra.mxu0 0.0
      %1254 = vmatprep.subr.mxu0 0.0
      %1255 = vmatpush1.msra.mxu0 0.0
      %1256 = vmatprep.subr.mxu0 0.0
      %1257 = vmatpush1.msra.mxu0 0.0
      %1258 = vmatprep.subr.mxu0 0.0
      %1259 = vmatpush1.msra.mxu0 0.0
      %1260 = vmatprep.subr.mxu0 0.0
      %1261 = vmatpush1.msra.mxu0 0.0
      %1262 = vmatprep.subr.mxu0 0.0
      %1263 = vmatpush1.msra.mxu0 0.0
      %1264 = vmatprep.subr.mxu0 0.0
      %1265 = vmatpush1.msra.mxu0 0.0
      %1266 = vmatprep.subr.mxu0 0.0
      %1267 = vmatpush1.msra.mxu0 0.0
      %1268 = vmatprep.subr.mxu0 0.0
      %1269 = vmatpush1.msra.mxu0 0.0
      %1270 = vmatprep.subr.mxu0 0.0
      %1271 = vmatpush1.msra.mxu0 0.0
      %1272 = vmatprep.mubr.f32.mxu0 0.0
      %1273 = vmatmul.mubr.f32.gmra.mrb[0].mxu0 %v733
      %v1274 = vpop.f32.mrb[0].mxu0
      %v1275 = vadd.f32 %v1198, %v1274
      %v1276 = vpop.f32.mrb[0].mxu0
      %v1277 = vadd.f32 %v1200, %v1276
      %1278 = vmatprep.mubr.f32.mxu0 0.0
      %1279 = vmatmul.mubr.f32.gmra.mrb[0].mxu0 %v740
      %v1280 = vpop.f32.mrb[0].mxu0
      %v1281 = vadd.f32 %v1204, %v1280
      %v1282 = vpop.f32.mrb[0].mxu0
      %v1283 = vadd.f32 %v1206, %v1282
      %1284 = vdwg.mxu0
      %v1285 = vtanh.pop %v1275
      %v1286 = vtanh.pop %v1281
      %v1287 = vsub.f32 0.0, %v1277
      %v1288 = vsub.f32 0.0, %v1283
      %v1289 = vmul.f32 %v1287, 1.442695
      %v1290 = vpow.pop %v1289
      %v1291 = vmul.f32 %v1288, 1.442695
      %v1292 = vpow.pop %v1291
      %v1293 = vadd.f32 %v1290, 1.0
      %v1294 = vadd.f32 %v1292, 1.0
      %v1295 = vrcp.pop %v1293
      %v1296 = vmul.f32 1.0, %v1295
      %v1297 = vrcp.pop %v1294
      %v1298 = vmul.f32 1.0, %v1297
      %v1299 = vmul.f32 %v1285, %v1296
      %v1300 = vmul.f32 %v1286, %v1298
      %1301 = vst [vmem:[%s484] sm:$0xff] %v1299
      %1302 = vst [vmem:[%s484 + $0x8] sm:$0x1f] %v1300
      %v1303 = vld [vmem:[%s7] sm:$0xff]
      %v1304 = vld [vmem:[%s7 + $0x8] sm:$0xff]
      %v1305 = vld [vmem:[%s7 + $0x10] sm:$0xff]
      %v1306 = vld [vmem:[%s7 + $0x18] sm:$0xff]
      %v1307 = vld [vmem:[%s7 + $0x20] sm:$0xff]
      %v1308 = vld [vmem:[%s7 + $0x28] sm:$0xff]
      %v1309 = vld [vmem:[%s7 + $0x30] sm:$0xff]
      %v1310 = vld [vmem:[%s7 + $0x38] sm:$0xff]
      %v1311 = vld [vmem:[%s7 + $0x40] sm:$0xff]
      %v1312 = vld [vmem:[%s7 + $0x48] sm:$0xff]
      %v1313 = vld [vmem:[%s7 + $0x50] sm:$0xff]
      %v1314 = vld [vmem:[%s7 + $0x58] sm:$0xff]
      %v1315 = vld [vmem:[%s7 + $0x60] sm:$0xff]
      %v1316 = vld [vmem:[%s7 + $0x68] sm:$0xff]
      %v1317 = vld [vmem:[%s7 + $0x70] sm:$0xff]
      %v1318 = vld [vmem:[%s7 + $0x78] sm:$0xff]
      %v1319 = vld [vmem:[%s8] sm:$0x1]
      %v1321 = vlaneseq
      %v1322 = vshrl.u32 %v1321, 7
      %v1323 = vsub.s32 0, %v1322
      %v1324 = vrot.slane %v1319, %v1323
      %1326 = vmatprep.subr.mxu0 0.0
      %1327 = vmatpush1.msra.mxu0 %v1303
      %1328 = vmatprep.subr.mxu0 0.0
      %1329 = vmatpush1.msra.mxu0 %v1304
      %1330 = vmatprep.subr.mxu0 0.0
      %1331 = vmatpush1.msra.mxu0 %v1305
      %1332 = vmatprep.subr.mxu0 0.0
      %1333 = vmatpush1.msra.mxu0 %v1306
      %1334 = vmatprep.subr.mxu0 0.0
      %1335 = vmatpush1.msra.mxu0 %v1307
      %1336 = vmatprep.subr.mxu0 0.0
      %1337 = vmatpush1.msra.mxu0 %v1308
      %1338 = vmatprep.subr.mxu0 0.0
      %1339 = vmatpush1.msra.mxu0 %v1309
      %1340 = vmatprep.subr.mxu0 0.0
      %1341 = vmatpush1.msra.mxu0 %v1310
      %1342 = vmatprep.subr.mxu0 0.0
      %1343 = vmatpush1.msra.mxu0 %v1311
      %1344 = vmatprep.subr.mxu0 0.0
      %1345 = vmatpush1.msra.mxu0 %v1312
      %1346 = vmatprep.subr.mxu0 0.0
      %1347 = vmatpush1.msra.mxu0 %v1313
      %1348 = vmatprep.subr.mxu0 0.0
      %1349 = vmatpush1.msra.mxu0 %v1314
      %1350 = vmatprep.subr.mxu0 0.0
      %1351 = vmatpush1.msra.mxu0 %v1315
      %1352 = vmatprep.subr.mxu0 0.0
      %1353 = vmatpush1.msra.mxu0 %v1316
      %1354 = vmatprep.subr.mxu0 0.0
      %1355 = vmatpush1.msra.mxu0 %v1317
      %1356 = vmatprep.subr.mxu0 0.0
      %1357 = vmatpush1.msra.mxu0 %v1318
      %1358 = vmatprep.subr.mxu0 0.0
      %1359 = vmatpush1.msra.mxu0 0.0
      %1360 = vmatprep.subr.mxu0 0.0
      %1361 = vmatpush1.msra.mxu0 0.0
      %1362 = vmatprep.subr.mxu0 0.0
      %1363 = vmatpush1.msra.mxu0 0.0
      %1364 = vmatprep.subr.mxu0 0.0
      %1365 = vmatpush1.msra.mxu0 0.0
      %1366 = vmatprep.subr.mxu0 0.0
      %1367 = vmatpush1.msra.mxu0 0.0
      %1368 = vmatprep.subr.mxu0 0.0
      %1369 = vmatpush1.msra.mxu0 0.0
      %1370 = vmatprep.subr.mxu0 0.0
      %1371 = vmatpush1.msra.mxu0 0.0
      %1372 = vmatprep.subr.mxu0 0.0
      %1373 = vmatpush1.msra.mxu0 0.0
      %1374 = vmatprep.subr.mxu0 0.0
      %1375 = vmatpush1.msra.mxu0 0.0
      %1376 = vmatprep.subr.mxu0 0.0
      %1377 = vmatpush1.msra.mxu0 0.0
      %1378 = vmatprep.subr.mxu0 0.0
      %1379 = vmatpush1.msra.mxu0 0.0
      %1380 = vmatprep.subr.mxu0 0.0
      %1381 = vmatpush1.msra.mxu0 0.0
      %1382 = vmatprep.subr.mxu0 0.0
      %1383 = vmatpush1.msra.mxu0 0.0
      %1384 = vmatprep.subr.mxu0 0.0
      %1385 = vmatpush1.msra.mxu0 0.0
      %1386 = vmatprep.subr.mxu0 0.0
      %1387 = vmatpush1.msra.mxu0 0.0
      %1388 = vmatprep.subr.mxu0 0.0
      %1389 = vmatpush1.msra.mxu0 0.0
      %1390 = vmatprep.mubr.f32.mxu0 0.0
      %1391 = vmatmul.mubr.f32.gmra.mrb[0].mxu0 %v1299
      %v1392 = vpop.f32.mrb[0].mxu0
      %v1393 = vadd.f32 %v1324, %v1392
      %v1394 = vpop.f32.mrb[0].mxu0
      %1395 = vmatprep.mubr.f32.mxu0 0.0
      %1396 = vmatmul.mubr.f32.gmra.mrb[0].mxu0 %v1300
      %v1397 = vpop.f32.mrb[0].mxu0
      %v1398 = vadd.f32 %v1324, %v1397
      %v1399 = vpop.f32.mrb[0].mxu0
      %1400 = vdwg.mxu0
      %v1401 = vld [vmem:[#allocation2 + $0x6] sm:$0xff]
      %v1402 = vld [vmem:[#allocation2 + $0xe] sm:$0x1f]
      %v1403 = vadd.f32 %v1393, %v1401
      %v1404 = vadd.f32 %v1398, %v1402
      %1405 = vadd.xlane.f32.xlu0 %v1403
      %v1406 = vpop.xlane.xlu0 %1405
      %vm1407 = vcmask 1044480
      %v1408 = vsel %vm1407, %v1404, 0.0
      %1409 = vadd.xlane.f32.xlu0 %v1408
      %v1410 = vpop.xlane.xlu0 %1409
      %v1411 = vsel %vm1407, %v1410, 0.0
      %v1412 = vadd.f32 %v1406, %v1411
      %v1413 = vrot.slane %v1412, 4
      %v1414 = vadd.f32 %v1412, %v1413
      %v1415 = vrot.slane %v1414, 2
      %v1416 = vadd.f32 %v1414, %v1415
      %v1417 = vrot.slane %v1416, 1
      %v1418 = vadd.f32 %v1416, %v1417
      %v1419 = vmul.f32 %v1418, 0.00060096156
      %v1420 = vsub.f32 %v1403, %v1419
      %v1421 = vsub.f32 %v1404, %v1419
      %v1422 = vmul.f32 %v1420, %v1420
      %v1423 = vmul.f32 %v1421, %v1421
      %1424 = vadd.xlane.f32.xlu0 %v1422
      %v1425 = vpop.xlane.xlu0 %1424
      %v1426 = vsel %vm1407, %v1423, 0.0
      %1427 = vadd.xlane.f32.xlu0 %v1426
      %v1428 = vpop.xlane.xlu0 %1427
      %v1429 = vsel %vm1407, %v1428, 0.0
      %v1430 = vadd.f32 %v1425, %v1429
      %v1431 = vrot.slane %v1430, 4
      %v1432 = vadd.f32 %v1430, %v1431
      %v1433 = vrot.slane %v1432, 2
      %v1434 = vadd.f32 %v1432, %v1433
      %v1435 = vrot.slane %v1434, 1
      %v1436 = vadd.f32 %v1434, %v1435
      %v1437 = vmul.f32 %v1436, 0.00060096156
      %v1438 = vadd.f32 %v1437, 1e-05
      %v1439 = vrsqrt.pop %v1438
      %v1440 = vmul.f32 %v1420, %v1439
      %v1441 = vmul.f32 %v1421, %v1439
      %v1442 = vld [vmem:[%s9] sm:$0xff]
      %v1443 = vld [vmem:[%s9 + $0x8] sm:$0x1f]
      %v1444 = vmul.f32 %v1440, %v1442
      %v1445 = vmul.f32 %v1441, %v1443
      %v1446 = vld [vmem:[%s10] sm:$0xff]
      %v1447 = vld [vmem:[%s10 + $0x8] sm:$0x1f]
      %v1448 = vadd.f32 %v1444, %v1446
      %v1449 = vadd.f32 %v1445, %v1447
      %1450 = vst [vmem:[#allocation2] sm:$0xff] %v1448
      %1451 = vst [vmem:[#allocation2 + $0x8] sm:$0x1f] %v1449
      %v1452 = vld [vmem:[#allocation2] sm:$0x7f]
      %1453 = vst [vmem:[#allocation3] sm:$0x7f] %v1452
      %v1454 = vld [vmem:[#allocation2 + $0x1] sm:$0x7f]
      %1455 = vst [vmem:[#allocation3 + $0x8] sm:$0x7f] %v1454
      %v1456 = vld [vmem:[#allocation2 + $0x2] sm:$0x7f]
      %1457 = vst [vmem:[#allocation3 + $0x10] sm:$0x7f] %v1456
      %v1458 = vld [vmem:[#allocation2 + $0x3] sm:$0x7f]
      %1459 = vst [vmem:[#allocation3 + $0x18] sm:$0x7f] %v1458
      %v1460 = vld [vmem:[#allocation2 + $0x4] sm:$0x7f]
      %1461 = vst [vmem:[#allocation3 + $0x20] sm:$0x7f] %v1460
      %v1462 = vld [vmem:[#allocation2 + $0x5] sm:$0x7f]
      %1463 = vst [vmem:[#allocation3 + $0x28] sm:$0x7f] %v1462
      %v1464 = vld [vmem:[#allocation2 + $0x6] sm:$0x7f]
      %1465 = vst [vmem:[#allocation3 + $0x30] sm:$0x7f] %v1464
      %v1466 = vld [vmem:[#allocation3] sm:$0x7f]
      %v1467 = vld [vmem:[#allocation3 + $0x8] sm:$0x7f]
      %v1468 = vld [vmem:[#allocation3 + $0x10] sm:$0x7f]
      %v1469 = vld [vmem:[#allocation3 + $0x18] sm:$0x7f]
      %v1470 = vld [vmem:[#allocation3 + $0x20] sm:$0x7f]
      %v1471 = vld [vmem:[#allocation3 + $0x28] sm:$0x7f]
      %v1472 = vld [vmem:[#allocation3 + $0x30] sm:$0x7f]
      %s1473 = scalar_lea.vmem %s5, 1792
      %v1474 = vld [vmem:[%s1473] sm:$0xff]
      %v1475 = vld [vmem:[%s1473 + $0x8] sm:$0xff]
      %v1476 = vld [vmem:[%s1473 + $0x10] sm:$0xff]
      %v1477 = vld [vmem:[%s1473 + $0x18] sm:$0xff]
      %v1478 = vld [vmem:[%s1473 + $0x20] sm:$0xff]
      %v1479 = vld [vmem:[%s1473 + $0x28] sm:$0xff]
      %v1480 = vld [vmem:[%s1473 + $0x30] sm:$0xff]
      %v1481 = vld [vmem:[%s1473 + $0x38] sm:$0xff]
      %v1482 = vld [vmem:[%s1473 + $0x40] sm:$0xff]
      %v1483 = vld [vmem:[%s1473 + $0x48] sm:$0xff]
      %v1484 = vld [vmem:[%s1473 + $0x50] sm:$0xff]
      %v1485 = vld [vmem:[%s1473 + $0x58] sm:$0xff]
      %v1486 = vld [vmem:[%s1473 + $0x60] sm:$0xff]
      %v1487 = vld [vmem:[%s1473 + $0x68] sm:$0xff]
      %v1488 = vld [vmem:[%s1473 + $0x70] sm:$0xff]
      %v1489 = vld [vmem:[%s1473 + $0x78] sm:$0xff]
      %v1490 = vld [vmem:[%s1473 + $0x80] sm:$0xff]
      %v1491 = vld [vmem:[%s1473 + $0x88] sm:$0xff]
      %v1492 = vld [vmem:[%s1473 + $0x90] sm:$0xff]
      %v1493 = vld [vmem:[%s1473 + $0x98] sm:$0xff]
      %v1494 = vld [vmem:[%s1473 + $0xa0] sm:$0xff]
      %v1495 = vld [vmem:[%s1473 + $0xa8] sm:$0xff]
      %v1496 = vld [vmem:[%s1473 + $0xb0] sm:$0xff]
      %v1497 = vld [vmem:[%s1473 + $0xb8] sm:$0xff]
      %v1498 = vld [vmem:[%s1473 + $0xc0] sm:$0xff]
      %v1499 = vld [vmem:[%s1473 + $0xc8] sm:$0xff]
      %v1500 = vld [vmem:[%s1473 + $0xd0] sm:$0xff]
      %v1501 = vld [vmem:[%s1473 + $0xd8] sm:$0xff]
      %v1502 = vld [vmem:[%s1473 + $0xe0] sm:$0xff]
      %v1503 = vld [vmem:[%s1473 + $0xe8] sm:$0xff]
      %v1504 = vld [vmem:[%s1473 + $0xf0] sm:$0xff]
      %v1505 = vld [vmem:[%s1473 + $0xf8] sm:$0xff]
      %v1506 = vld [vmem:[%s1473 + $0x100] sm:$0xff]
      %v1507 = vld [vmem:[%s1473 + $0x108] sm:$0xff]
      %v1508 = vld [vmem:[%s1473 + $0x110] sm:$0xff]
      %v1509 = vld [vmem:[%s1473 + $0x118] sm:$0xff]
      %v1510 = vld [vmem:[%s1473 + $0x120] sm:$0xff]
      %v1511 = vld [vmem:[%s1473 + $0x128] sm:$0xff]
      %v1512 = vld [vmem:[%s1473 + $0x130] sm:$0xff]
      %v1513 = vld [vmem:[%s1473 + $0x138] sm:$0xff]
      %v1514 = vld [vmem:[%s1473 + $0x140] sm:$0xff]
      %v1515 = vld [vmem:[%s1473 + $0x148] sm:$0xff]
      %v1516 = vld [vmem:[%s1473 + $0x150] sm:$0xff]
      %v1517 = vld [vmem:[%s1473 + $0x158] sm:$0xff]
      %v1518 = vld [vmem:[%s1473 + $0x160] sm:$0xff]
      %v1519 = vld [vmem:[%s1473 + $0x168] sm:$0xff]
      %v1520 = vld [vmem:[%s1473 + $0x170] sm:$0xff]
      %v1521 = vld [vmem:[%s1473 + $0x178] sm:$0xff]
      %v1522 = vld [vmem:[%s1473 + $0x180] sm:$0xff]
      %v1523 = vld [vmem:[%s1473 + $0x188] sm:$0xff]
      %v1524 = vld [vmem:[%s1473 + $0x190] sm:$0xff]
      %v1525 = vld [vmem:[%s1473 + $0x198] sm:$0xff]
      %v1526 = vld [vmem:[%s1473 + $0x1a0] sm:$0xff]
      %v1527 = vld [vmem:[%s1473 + $0x1a8] sm:$0xff]
      %v1528 = vld [vmem:[%s1473 + $0x1b0] sm:$0xff]
      %v1529 = vld [vmem:[%s1473 + $0x1b8] sm:$0xff]
      %v1530 = vld [vmem:[%s1473 + $0x1c0] sm:$0xff]
      %v1531 = vld [vmem:[%s1473 + $0x1c8] sm:$0xff]
      %v1532 = vld [vmem:[%s1473 + $0x1d0] sm:$0xff]
      %v1533 = vld [vmem:[%s1473 + $0x1d8] sm:$0xff]
      %v1534 = vld [vmem:[%s1473 + $0x1e0] sm:$0xff]
      %v1535 = vld [vmem:[%s1473 + $0x1e8] sm:$0xff]
      %v1536 = vld [vmem:[%s1473 + $0x1f0] sm:$0xff]
      %v1537 = vld [vmem:[%s1473 + $0x1f8] sm:$0xff]
      %v1538 = vld [vmem:[%s1473 + $0x200] sm:$0xff]
      %v1539 = vld [vmem:[%s1473 + $0x208] sm:$0xff]
      %v1540 = vld [vmem:[%s1473 + $0x210] sm:$0xff]
      %v1541 = vld [vmem:[%s1473 + $0x218] sm:$0xff]
      %v1542 = vld [vmem:[%s1473 + $0x220] sm:$0xff]
      %v1543 = vld [vmem:[%s1473 + $0x228] sm:$0xff]
      %v1544 = vld [vmem:[%s1473 + $0x230] sm:$0xff]
      %v1545 = vld [vmem:[%s1473 + $0x238] sm:$0xff]
      %v1546 = vld [vmem:[%s1473 + $0x240] sm:$0xff]
      %v1547 = vld [vmem:[%s1473 + $0x248] sm:$0xff]
      %v1548 = vld [vmem:[%s1473 + $0x250] sm:$0xff]
      %v1549 = vld [vmem:[%s1473 + $0x258] sm:$0xff]
      %v1550 = vld [vmem:[%s1473 + $0x260] sm:$0xff]
      %v1551 = vld [vmem:[%s1473 + $0x268] sm:$0xff]
      %v1552 = vld [vmem:[%s1473 + $0x270] sm:$0xff]
      %v1553 = vld [vmem:[%s1473 + $0x278] sm:$0xff]
      %v1554 = vld [vmem:[%s1473 + $0x280] sm:$0xff]
      %v1555 = vld [vmem:[%s1473 + $0x288] sm:$0xff]
      %v1556 = vld [vmem:[%s1473 + $0x290] sm:$0xff]
      %v1557 = vld [vmem:[%s1473 + $0x298] sm:$0xff]
      %v1558 = vld [vmem:[%s1473 + $0x2a0] sm:$0xff]
      %v1559 = vld [vmem:[%s1473 + $0x2a8] sm:$0xff]
      %v1560 = vld [vmem:[%s1473 + $0x2b0] sm:$0xff]
      %v1561 = vld [vmem:[%s1473 + $0x2b8] sm:$0xff]
      %v1562 = vld [vmem:[%s1473 + $0x2c0] sm:$0xff]
      %v1563 = vld [vmem:[%s1473 + $0x2c8] sm:$0xff]
      %v1564 = vld [vmem:[%s1473 + $0x2d0] sm:$0xff]
      %v1565 = vld [vmem:[%s1473 + $0x2d8] sm:$0xff]
      %v1566 = vld [vmem:[%s1473 + $0x2e0] sm:$0xff]
      %v1567 = vld [vmem:[%s1473 + $0x2e8] sm:$0xff]
      %v1568 = vld [vmem:[%s1473 + $0x2f0] sm:$0xff]
      %v1569 = vld [vmem:[%s1473 + $0x2f8] sm:$0xff]
      %v1570 = vld [vmem:[%s1473 + $0x300] sm:$0xff]
      %v1571 = vld [vmem:[%s1473 + $0x308] sm:$0xff]
      %v1572 = vld [vmem:[%s1473 + $0x310] sm:$0xff]
      %v1573 = vld [vmem:[%s1473 + $0x318] sm:$0xff]
      %v1574 = vld [vmem:[%s1473 + $0x320] sm:$0xff]
      %v1575 = vld [vmem:[%s1473 + $0x328] sm:$0xff]
      %v1576 = vld [vmem:[%s1473 + $0x330] sm:$0xff]
      %v1577 = vld [vmem:[%s1473 + $0x338] sm:$0xff]
      %v1578 = vld [vmem:[%s1473 + $0x340] sm:$0xff]
      %v1579 = vld [vmem:[%s1473 + $0x348] sm:$0xff]
      %v1580 = vld [vmem:[%s1473 + $0x350] sm:$0xff]
      %v1581 = vld [vmem:[%s1473 + $0x358] sm:$0xff]
      %v1582 = vld [vmem:[%s1473 + $0x360] sm:$0xff]
      %v1583 = vld [vmem:[%s1473 + $0x368] sm:$0xff]
      %v1584 = vld [vmem:[%s1473 + $0x370] sm:$0xff]
      %v1585 = vld [vmem:[%s1473 + $0x378] sm:$0xff]
      %v1586 = vld [vmem:[%s1473 + $0x380] sm:$0xff]
      %v1587 = vld [vmem:[%s1473 + $0x388] sm:$0xff]
      %v1588 = vld [vmem:[%s1473 + $0x390] sm:$0xff]
      %v1589 = vld [vmem:[%s1473 + $0x398] sm:$0xff]
      %v1590 = vld [vmem:[%s1473 + $0x3a0] sm:$0xff]
      %v1591 = vld [vmem:[%s1473 + $0x3a8] sm:$0xff]
      %v1592 = vld [vmem:[%s1473 + $0x3b0] sm:$0xff]
      %v1593 = vld [vmem:[%s1473 + $0x3b8] sm:$0xff]
      %v1594 = vld [vmem:[%s1473 + $0x3c0] sm:$0xff]
      %v1595 = vld [vmem:[%s1473 + $0x3c8] sm:$0xff]
      %v1596 = vld [vmem:[%s1473 + $0x3d0] sm:$0xff]
      %v1597 = vld [vmem:[%s1473 + $0x3d8] sm:$0xff]
      %v1598 = vld [vmem:[%s1473 + $0x3e0] sm:$0xff]
      %v1599 = vld [vmem:[%s1473 + $0x3e8] sm:$0xff]
      %v1600 = vld [vmem:[%s1473 + $0x3f0] sm:$0xff]
      %v1601 = vld [vmem:[%s1473 + $0x3f8] sm:$0xff]
      %v1602 = vld [vmem:[%s1473 + $0x400] sm:$0xff]
      %v1603 = vld [vmem:[%s1473 + $0x408] sm:$0xff]
      %v1604 = vld [vmem:[%s1473 + $0x410] sm:$0xff]
      %v1605 = vld [vmem:[%s1473 + $0x418] sm:$0xff]
      %v1606 = vld [vmem:[%s1473 + $0x420] sm:$0xff]
      %v1607 = vld [vmem:[%s1473 + $0x428] sm:$0xff]
      %v1608 = vld [vmem:[%s1473 + $0x430] sm:$0xff]
      %v1609 = vld [vmem:[%s1473 + $0x438] sm:$0xff]
      %v1610 = vld [vmem:[%s1473 + $0x440] sm:$0xff]
      %v1611 = vld [vmem:[%s1473 + $0x448] sm:$0xff]
      %v1612 = vld [vmem:[%s1473 + $0x450] sm:$0xff]
      %v1613 = vld [vmem:[%s1473 + $0x458] sm:$0xff]
      %v1614 = vld [vmem:[%s1473 + $0x460] sm:$0xff]
      %v1615 = vld [vmem:[%s1473 + $0x468] sm:$0xff]
      %v1616 = vld [vmem:[%s1473 + $0x470] sm:$0xff]
      %v1617 = vld [vmem:[%s1473 + $0x478] sm:$0xff]
      %v1618 = vld [vmem:[%s1473 + $0x480] sm:$0xff]
      %v1619 = vld [vmem:[%s1473 + $0x488] sm:$0xff]
      %v1620 = vld [vmem:[%s1473 + $0x490] sm:$0xff]
      %v1621 = vld [vmem:[%s1473 + $0x498] sm:$0xff]
      %v1622 = vld [vmem:[%s1473 + $0x4a0] sm:$0xff]
      %v1623 = vld [vmem:[%s1473 + $0x4a8] sm:$0xff]
      %v1624 = vld [vmem:[%s1473 + $0x4b0] sm:$0xff]
      %v1625 = vld [vmem:[%s1473 + $0x4b8] sm:$0xff]
      %v1626 = vld [vmem:[%s1473 + $0x4c0] sm:$0xff]
      %v1627 = vld [vmem:[%s1473 + $0x4c8] sm:$0xff]
      %v1628 = vld [vmem:[%s1473 + $0x4d0] sm:$0xff]
      %v1629 = vld [vmem:[%s1473 + $0x4d8] sm:$0xff]
      %v1630 = vld [vmem:[%s1473 + $0x4e0] sm:$0xff]
      %v1631 = vld [vmem:[%s1473 + $0x4e8] sm:$0xff]
      %v1632 = vld [vmem:[%s1473 + $0x4f0] sm:$0xff]
      %v1633 = vld [vmem:[%s1473 + $0x4f8] sm:$0xff]
      %v1634 = vld [vmem:[%s1473 + $0x500] sm:$0xff]
      %v1635 = vld [vmem:[%s1473 + $0x508] sm:$0xff]
      %v1636 = vld [vmem:[%s1473 + $0x510] sm:$0xff]
      %v1637 = vld [vmem:[%s1473 + $0x518] sm:$0xff]
      %v1638 = vld [vmem:[%s1473 + $0x520] sm:$0xff]
      %v1639 = vld [vmem:[%s1473 + $0x528] sm:$0xff]
      %v1640 = vld [vmem:[%s1473 + $0x530] sm:$0xff]
      %v1641 = vld [vmem:[%s1473 + $0x538] sm:$0xff]
      %v1642 = vld [vmem:[%s1473 + $0x540] sm:$0xff]
      %v1643 = vld [vmem:[%s1473 + $0x548] sm:$0xff]
      %v1644 = vld [vmem:[%s1473 + $0x550] sm:$0xff]
      %v1645 = vld [vmem:[%s1473 + $0x558] sm:$0xff]
      %v1646 = vld [vmem:[%s1473 + $0x560] sm:$0xff]
      %v1647 = vld [vmem:[%s1473 + $0x568] sm:$0xff]
      %v1648 = vld [vmem:[%s1473 + $0x570] sm:$0xff]
      %v1649 = vld [vmem:[%s1473 + $0x578] sm:$0xff]
      %v1650 = vld [vmem:[%s1473 + $0x580] sm:$0xff]
      %v1651 = vld [vmem:[%s1473 + $0x588] sm:$0xff]
      %v1652 = vld [vmem:[%s1473 + $0x590] sm:$0xff]
      %v1653 = vld [vmem:[%s1473 + $0x598] sm:$0xff]
      %v1654 = vld [vmem:[%s1473 + $0x5a0] sm:$0xff]
      %v1655 = vld [vmem:[%s1473 + $0x5a8] sm:$0xff]
      %v1656 = vld [vmem:[%s1473 + $0x5b0] sm:$0xff]
      %v1657 = vld [vmem:[%s1473 + $0x5b8] sm:$0xff]
      %v1658 = vld [vmem:[%s1473 + $0x5c0] sm:$0xff]
      %v1659 = vld [vmem:[%s1473 + $0x5c8] sm:$0xff]
      %v1660 = vld [vmem:[%s1473 + $0x5d0] sm:$0xff]
      %v1661 = vld [vmem:[%s1473 + $0x5d8] sm:$0xff]
      %v1662 = vld [vmem:[%s1473 + $0x5e0] sm:$0xff]
      %v1663 = vld [vmem:[%s1473 + $0x5e8] sm:$0xff]
      %v1664 = vld [vmem:[%s1473 + $0x5f0] sm:$0xff]
      %v1665 = vld [vmem:[%s1473 + $0x5f8] sm:$0xff]
      %v1666 = vld [vmem:[%s1473 + $0x600] sm:$0xff]
      %v1667 = vld [vmem:[%s1473 + $0x608] sm:$0xff]
      %v1668 = vld [vmem:[%s1473 + $0x610] sm:$0xff]
      %v1669 = vld [vmem:[%s1473 + $0x618] sm:$0xff]
      %v1670 = vld [vmem:[%s1473 + $0x620] sm:$0xff]
      %v1671 = vld [vmem:[%s1473 + $0x628] sm:$0xff]
      %v1672 = vld [vmem:[%s1473 + $0x630] sm:$0xff]
      %v1673 = vld [vmem:[%s1473 + $0x638] sm:$0xff]
      %v1674 = vld [vmem:[%s1473 + $0x640] sm:$0xff]
      %v1675 = vld [vmem:[%s1473 + $0x648] sm:$0xff]
      %v1676 = vld [vmem:[%s1473 + $0x650] sm:$0xff]
      %v1677 = vld [vmem:[%s1473 + $0x658] sm:$0xff]
      %v1678 = vld [vmem:[%s1473 + $0x660] sm:$0xff]
      %v1679 = vld [vmem:[%s1473 + $0x668] sm:$0xff]
      %v1680 = vld [vmem:[%s1473 + $0x670] sm:$0xff]
      %v1681 = vld [vmem:[%s1473 + $0x678] sm:$0xff]
      %v1682 = vld [vmem:[%s1473 + $0x680] sm:$0xff]
      %v1683 = vld [vmem:[%s1473 + $0x688] sm:$0xff]
      %v1684 = vld [vmem:[%s1473 + $0x690] sm:$0xff]
      %v1685 = vld [vmem:[%s1473 + $0x698] sm:$0xff]
      %v1686 = vld [vmem:[%s1473 + $0x6a0] sm:$0xff]
      %v1687 = vld [vmem:[%s1473 + $0x6a8] sm:$0xff]
      %v1688 = vld [vmem:[%s1473 + $0x6b0] sm:$0xff]
      %v1689 = vld [vmem:[%s1473 + $0x6b8] sm:$0xff]
      %v1690 = vld [vmem:[%s1473 + $0x6c0] sm:$0xff]
      %v1691 = vld [vmem:[%s1473 + $0x6c8] sm:$0xff]
      %v1692 = vld [vmem:[%s1473 + $0x6d0] sm:$0xff]
      %v1693 = vld [vmem:[%s1473 + $0x6d8] sm:$0xff]
      %v1694 = vld [vmem:[%s1473 + $0x6e0] sm:$0xff]
      %v1695 = vld [vmem:[%s1473 + $0x6e8] sm:$0xff]
      %v1696 = vld [vmem:[%s1473 + $0x6f0] sm:$0xff]
      %v1697 = vld [vmem:[%s1473 + $0x6f8] sm:$0xff]
      %s1698 = scalar_lea.vmem %s6, 2
      %v1699 = vld [vmem:[%s1698] sm:$0x3]
      %v1701 = vlaneseq
      %v1702 = vshrl.u32 %v1701, 7
      %v1703 = vsub.s32 0, %v1702
      %v1704 = vrot.slane %v1699, %v1703
      %v1705 = vlaneseq
      %v1706 = vshrl.u32 %v1705, 7
      %v1707 = vsub.s32 1, %v1706
      %v1708 = vrot.slane %v1699, %v1707
      %1711 = vmatprep.subr.mxu0 %v1475
      %1712 = vmatpush1.msra.mxu0 %v1474
      %1713 = vmatprep.subr.mxu0 %v1477
      %1714 = vmatpush1.msra.mxu0 %v1476
      %1715 = vmatprep.subr.mxu0 %v1479
      %1716 = vmatpush1.msra.mxu0 %v1478
      %1717 = vmatprep.subr.mxu0 %v1481
      %1718 = vmatpush1.msra.mxu0 %v1480
      %1719 = vmatprep.subr.mxu0 %v1483
      %1720 = vmatpush1.msra.mxu0 %v1482
      %1721 = vmatprep.subr.mxu0 %v1485
      %1722 = vmatpush1.msra.mxu0 %v1484
      %1723 = vmatprep.subr.mxu0 %v1487
      %1724 = vmatpush1.msra.mxu0 %v1486
      %1725 = vmatprep.subr.mxu0 %v1489
      %1726 = vmatpush1.msra.mxu0 %v1488
      %1727 = vmatprep.subr.mxu0 %v1491
      %1728 = vmatpush1.msra.mxu0 %v1490
      %1729 = vmatprep.subr.mxu0 %v1493
      %1730 = vmatpush1.msra.mxu0 %v1492
      %1731 = vmatprep.subr.mxu0 %v1495
      %1732 = vmatpush1.msra.mxu0 %v1494
      %1733 = vmatprep.subr.mxu0 %v1497
      %1734 = vmatpush1.msra.mxu0 %v1496
      %1735 = vmatprep.subr.mxu0 %v1499
      %1736 = vmatpush1.msra.mxu0 %v1498
      %1737 = vmatprep.subr.mxu0 %v1501
      %1738 = vmatpush1.msra.mxu0 %v1500
      %1739 = vmatprep.subr.mxu0 %v1503
      %1740 = vmatpush1.msra.mxu0 %v1502
      %1741 = vmatprep.subr.mxu0 %v1505
      %1742 = vmatpush1.msra.mxu0 %v1504
      %1743 = vmatprep.subr.mxu0 %v1507
      %1744 = vmatpush1.msra.mxu0 %v1506
      %1745 = vmatprep.subr.mxu0 %v1509
      %1746 = vmatpush1.msra.mxu0 %v1508
      %1747 = vmatprep.subr.mxu0 %v1511
      %1748 = vmatpush1.msra.mxu0 %v1510
      %1749 = vmatprep.subr.mxu0 %v1513
      %1750 = vmatpush1.msra.mxu0 %v1512
      %1751 = vmatprep.subr.mxu0 %v1515
      %1752 = vmatpush1.msra.mxu0 %v1514
      %1753 = vmatprep.subr.mxu0 %v1517
      %1754 = vmatpush1.msra.mxu0 %v1516
      %1755 = vmatprep.subr.mxu0 %v1519
      %1756 = vmatpush1.msra.mxu0 %v1518
      %1757 = vmatprep.subr.mxu0 %v1521
      %1758 = vmatpush1.msra.mxu0 %v1520
      %1759 = vmatprep.subr.mxu0 %v1523
      %1760 = vmatpush1.msra.mxu0 %v1522
      %1761 = vmatprep.subr.mxu0 %v1525
      %1762 = vmatpush1.msra.mxu0 %v1524
      %1763 = vmatprep.subr.mxu0 %v1527
      %1764 = vmatpush1.msra.mxu0 %v1526
      %1765 = vmatprep.subr.mxu0 %v1529
      %1766 = vmatpush1.msra.mxu0 %v1528
      %1767 = vmatprep.subr.mxu0 %v1531
      %1768 = vmatpush1.msra.mxu0 %v1530
      %1769 = vmatprep.subr.mxu0 %v1533
      %1770 = vmatpush1.msra.mxu0 %v1532
      %1771 = vmatprep.subr.mxu0 %v1535
      %1772 = vmatpush1.msra.mxu0 %v1534
      %1773 = vmatprep.subr.mxu0 %v1537
      %1774 = vmatpush1.msra.mxu0 %v1536
      %1775 = vmatprep.mubr.f32.mxu0 %v1467
      %1776 = vmatmul.mubr.f32.gmra.mrb[0].mxu0 %v1466
      %v1777 = vpop.f32.mrb[0].mxu0
      %v1778 = vadd.f32 %v1704, %v1777
      %v1779 = vpop.f32.mrb[0].mxu0
      %v1780 = vadd.f32 %v1708, %v1779
      %1781 = vdwg.mxu0
      %1782 = vmatprep.subr.mxu0 %v1539
      %1783 = vmatpush1.msra.mxu0 %v1538
      %1784 = vmatprep.subr.mxu0 %v1541
      %1785 = vmatpush1.msra.mxu0 %v1540
      %1786 = vmatprep.subr.mxu0 %v1543
      %1787 = vmatpush1.msra.mxu0 %v1542
      %1788 = vmatprep.subr.mxu0 %v1545
      %1789 = vmatpush1.msra.mxu0 %v1544
      %1790 = vmatprep.subr.mxu0 %v1547
      %1791 = vmatpush1.msra.mxu0 %v1546
      %1792 = vmatprep.subr.mxu0 %v1549
      %1793 = vmatpush1.msra.mxu0 %v1548
      %1794 = vmatprep.subr.mxu0 %v1551
      %1795 = vmatpush1.msra.mxu0 %v1550
      %1796 = vmatprep.subr.mxu0 %v1553
      %1797 = vmatpush1.msra.mxu0 %v1552
      %1798 = vmatprep.subr.mxu0 %v1555
      %1799 = vmatpush1.msra.mxu0 %v1554
      %1800 = vmatprep.subr.mxu0 %v1557
      %1801 = vmatpush1.msra.mxu0 %v1556
      %1802 = vmatprep.subr.mxu0 %v1559
      %1803 = vmatpush1.msra.mxu0 %v1558
      %1804 = vmatprep.subr.mxu0 %v1561
      %1805 = vmatpush1.msra.mxu0 %v1560
      %1806 = vmatprep.subr.mxu0 %v1563
      %1807 = vmatpush1.msra.mxu0 %v1562
      %1808 = vmatprep.subr.mxu0 %v1565
      %1809 = vmatpush1.msra.mxu0 %v1564
      %1810 = vmatprep.subr.mxu0 %v1567
      %1811 = vmatpush1.msra.mxu0 %v1566
      %1812 = vmatprep.subr.mxu0 %v1569
      %1813 = vmatpush1.msra.mxu0 %v1568
      %1814 = vmatprep.subr.mxu0 %v1571
      %1815 = vmatpush1.msra.mxu0 %v1570
      %1816 = vmatprep.subr.mxu0 %v1573
      %1817 = vmatpush1.msra.mxu0 %v1572
      %1818 = vmatprep.subr.mxu0 %v1575
      %1819 = vmatpush1.msra.mxu0 %v1574
      %1820 = vmatprep.subr.mxu0 %v1577
      %1821 = vmatpush1.msra.mxu0 %v1576
      %1822 = vmatprep.subr.mxu0 %v1579
      %1823 = vmatpush1.msra.mxu0 %v1578
      %1824 = vmatprep.subr.mxu0 %v1581
      %1825 = vmatpush1.msra.mxu0 %v1580
      %1826 = vmatprep.subr.mxu0 %v1583
      %1827 = vmatpush1.msra.mxu0 %v1582
      %1828 = vmatprep.subr.mxu0 %v1585
      %1829 = vmatpush1.msra.mxu0 %v1584
      %1830 = vmatprep.subr.mxu0 %v1587
      %1831 = vmatpush1.msra.mxu0 %v1586
      %1832 = vmatprep.subr.mxu0 %v1589
      %1833 = vmatpush1.msra.mxu0 %v1588
      %1834 = vmatprep.subr.mxu0 %v1591
      %1835 = vmatpush1.msra.mxu0 %v1590
      %1836 = vmatprep.subr.mxu0 %v1593
      %1837 = vmatpush1.msra.mxu0 %v1592
      %1838 = vmatprep.subr.mxu0 %v1595
      %1839 = vmatpush1.msra.mxu0 %v1594
      %1840 = vmatprep.subr.mxu0 %v1597
      %1841 = vmatpush1.msra.mxu0 %v1596
      %1842 = vmatprep.subr.mxu0 %v1599
      %1843 = vmatpush1.msra.mxu0 %v1598
      %1844 = vmatprep.subr.mxu0 %v1601
      %1845 = vmatpush1.msra.mxu0 %v1600
      %1846 = vmatprep.mubr.f32.mxu0 %v1469
      %1847 = vmatmul.mubr.f32.gmra.mrb[0].mxu0 %v1468
      %v1848 = vpop.f32.mrb[0].mxu0
      %v1849 = vadd.f32 %v1778, %v1848
      %v1850 = vpop.f32.mrb[0].mxu0
      %v1851 = vadd.f32 %v1780, %v1850
      %1852 = vdwg.mxu0
      %1853 = vmatprep.subr.mxu0 %v1603
      %1854 = vmatpush1.msra.mxu0 %v1602
      %1855 = vmatprep.subr.mxu0 %v1605
      %1856 = vmatpush1.msra.mxu0 %v1604
      %1857 = vmatprep.subr.mxu0 %v1607
      %1858 = vmatpush1.msra.mxu0 %v1606
      %1859 = vmatprep.subr.mxu0 %v1609
      %1860 = vmatpush1.msra.mxu0 %v1608
      %1861 = vmatprep.subr.mxu0 %v1611
      %1862 = vmatpush1.msra.mxu0 %v1610
      %1863 = vmatprep.subr.mxu0 %v1613
      %1864 = vmatpush1.msra.mxu0 %v1612
      %1865 = vmatprep.subr.mxu0 %v1615
      %1866 = vmatpush1.msra.mxu0 %v1614
      %1867 = vmatprep.subr.mxu0 %v1617
      %1868 = vmatpush1.msra.mxu0 %v1616
      %1869 = vmatprep.subr.mxu0 %v1619
      %1870 = vmatpush1.msra.mxu0 %v1618
      %1871 = vmatprep.subr.mxu0 %v1621
      %1872 = vmatpush1.msra.mxu0 %v1620
      %1873 = vmatprep.subr.mxu0 %v1623
      %1874 = vmatpush1.msra.mxu0 %v1622
      %1875 = vmatprep.subr.mxu0 %v1625
      %1876 = vmatpush1.msra.mxu0 %v1624
      %1877 = vmatprep.subr.mxu0 %v1627
      %1878 = vmatpush1.msra.mxu0 %v1626
      %1879 = vmatprep.subr.mxu0 %v1629
      %1880 = vmatpush1.msra.mxu0 %v1628
      %1881 = vmatprep.subr.mxu0 %v1631
      %1882 = vmatpush1.msra.mxu0 %v1630
      %1883 = vmatprep.subr.mxu0 %v1633
      %1884 = vmatpush1.msra.mxu0 %v1632
      %1885 = vmatprep.subr.mxu0 %v1635
      %1886 = vmatpush1.msra.mxu0 %v1634
      %1887 = vmatprep.subr.mxu0 %v1637
      %1888 = vmatpush1.msra.mxu0 %v1636
      %1889 = vmatprep.subr.mxu0 %v1639
      %1890 = vmatpush1.msra.mxu0 %v1638
      %1891 = vmatprep.subr.mxu0 %v1641
      %1892 = vmatpush1.msra.mxu0 %v1640
      %1893 = vmatprep.subr.mxu0 %v1643
      %1894 = vmatpush1.msra.mxu0 %v1642
      %1895 = vmatprep.subr.mxu0 %v1645
      %1896 = vmatpush1.msra.mxu0 %v1644
      %1897 = vmatprep.subr.mxu0 %v1647
      %1898 = vmatpush1.msra.mxu0 %v1646
      %1899 = vmatprep.subr.mxu0 %v1649
      %1900 = vmatpush1.msra.mxu0 %v1648
      %1901 = vmatprep.subr.mxu0 %v1651
      %1902 = vmatpush1.msra.mxu0 %v1650
      %1903 = vmatprep.subr.mxu0 %v1653
      %1904 = vmatpush1.msra.mxu0 %v1652
      %1905 = vmatprep.subr.mxu0 %v1655
      %1906 = vmatpush1.msra.mxu0 %v1654
      %1907 = vmatprep.subr.mxu0 %v1657
      %1908 = vmatpush1.msra.mxu0 %v1656
      %1909 = vmatprep.subr.mxu0 %v1659
      %1910 = vmatpush1.msra.mxu0 %v1658
      %1911 = vmatprep.subr.mxu0 %v1661
      %1912 = vmatpush1.msra.mxu0 %v1660
      %1913 = vmatprep.subr.mxu0 %v1663
      %1914 = vmatpush1.msra.mxu0 %v1662
      %1915 = vmatprep.subr.mxu0 %v1665
      %1916 = vmatpush1.msra.mxu0 %v1664
      %1917 = vmatprep.mubr.f32.mxu0 %v1471
      %1918 = vmatmul.mubr.f32.gmra.mrb[0].mxu0 %v1470
      %v1919 = vpop.f32.mrb[0].mxu0
      %v1920 = vadd.f32 %v1849, %v1919
      %v1921 = vpop.f32.mrb[0].mxu0
      %v1922 = vadd.f32 %v1851, %v1921
      %1923 = vdwg.mxu0
      %1924 = vmatprep.subr.mxu0 %v1667
      %1925 = vmatpush1.msra.mxu0 %v1666
      %1926 = vmatprep.subr.mxu0 %v1669
      %1927 = vmatpush1.msra.mxu0 %v1668
      %1928 = vmatprep.subr.mxu0 %v1671
      %1929 = vmatpush1.msra.mxu0 %v1670
      %1930 = vmatprep.subr.mxu0 %v1673
      %1931 = vmatpush1.msra.mxu0 %v1672
      %1932 = vmatprep.subr.mxu0 %v1675
      %1933 = vmatpush1.msra.mxu0 %v1674
      %1934 = vmatprep.subr.mxu0 %v1677
      %1935 = vmatpush1.msra.mxu0 %v1676
      %1936 = vmatprep.subr.mxu0 %v1679
      %1937 = vmatpush1.msra.mxu0 %v1678
      %1938 = vmatprep.subr.mxu0 %v1681
      %1939 = vmatpush1.msra.mxu0 %v1680
      %1940 = vmatprep.subr.mxu0 %v1683
      %1941 = vmatpush1.msra.mxu0 %v1682
      %1942 = vmatprep.subr.mxu0 %v1685
      %1943 = vmatpush1.msra.mxu0 %v1684
      %1944 = vmatprep.subr.mxu0 %v1687
      %1945 = vmatpush1.msra.mxu0 %v1686
      %1946 = vmatprep.subr.mxu0 %v1689
      %1947 = vmatpush1.msra.mxu0 %v1688
      %1948 = vmatprep.subr.mxu0 %v1691
      %1949 = vmatpush1.msra.mxu0 %v1690
      %1950 = vmatprep.subr.mxu0 %v1693
      %1951 = vmatpush1.msra.mxu0 %v1692
      %1952 = vmatprep.subr.mxu0 %v1695
      %1953 = vmatpush1.msra.mxu0 %v1694
      %1954 = vmatprep.subr.mxu0 %v1697
      %1955 = vmatpush1.msra.mxu0 %v1696
      %1956 = vmatprep.subr.mxu0 0.0
      %1957 = vmatpush1.msra.mxu0 0.0
      %1958 = vmatprep.subr.mxu0 0.0
      %1959 = vmatpush1.msra.mxu0 0.0
      %1960 = vmatprep.subr.mxu0 0.0
      %1961 = vmatpush1.msra.mxu0 0.0
      %1962 = vmatprep.subr.mxu0 0.0
      %1963 = vmatpush1.msra.mxu0 0.0
      %1964 = vmatprep.subr.mxu0 0.0
      %1965 = vmatpush1.msra.mxu0 0.0
      %1966 = vmatprep.subr.mxu0 0.0
      %1967 = vmatpush1.msra.mxu0 0.0
      %1968 = vmatprep.subr.mxu0 0.0
      %1969 = vmatpush1.msra.mxu0 0.0
      %1970 = vmatprep.subr.mxu0 0.0
      %1971 = vmatpush1.msra.mxu0 0.0
      %1972 = vmatprep.subr.mxu0 0.0
      %1973 = vmatpush1.msra.mxu0 0.0
      %1974 = vmatprep.subr.mxu0 0.0
      %1975 = vmatpush1.msra.mxu0 0.0
      %1976 = vmatprep.subr.mxu0 0.0
      %1977 = vmatpush1.msra.mxu0 0.0
      %1978 = vmatprep.subr.mxu0 0.0
      %1979 = vmatpush1.msra.mxu0 0.0
      %1980 = vmatprep.subr.mxu0 0.0
      %1981 = vmatpush1.msra.mxu0 0.0
      %1982 = vmatprep.subr.mxu0 0.0
      %1983 = vmatpush1.msra.mxu0 0.0
      %1984 = vmatprep.subr.mxu0 0.0
      %1985 = vmatpush1.msra.mxu0 0.0
      %1986 = vmatprep.subr.mxu0 0.0
      %1987 = vmatpush1.msra.mxu0 0.0
      %1988 = vmatprep.mubr.f32.mxu0 0.0
      %1989 = vmatmul.mubr.f32.gmra.mrb[0].mxu0 %v1472
      %v1990 = vpop.f32.mrb[0].mxu0
      %v1991 = vadd.f32 %v1920, %v1990
      %v1992 = vpop.f32.mrb[0].mxu0
      %v1993 = vadd.f32 %v1922, %v1992
      %1994 = vdwg.mxu0
      %v1995 = vtanh.pop %v1991
      %v1996 = vsub.f32 0.0, %v1993
      %v1997 = vmul.f32 %v1996, 1.442695
      %v1998 = vpow.pop %v1997
      %v1999 = vadd.f32 %v1998, 1.0
      %v2000 = vrcp.pop %v1999
      %v2001 = vmul.f32 1.0, %v2000
      %v2002 = vmul.f32 %v1995, %v2001
      %2003 = vst [vmem:[%s488] sm:$0x7f] %v2002
      %s2004 = scalar_lea.vmem %s7, 128
      %v2005 = vld [vmem:[%s2004] sm:$0xff]
      %v2006 = vld [vmem:[%s2004 + $0x8] sm:$0xff]
      %v2007 = vld [vmem:[%s2004 + $0x10] sm:$0xff]
      %v2008 = vld [vmem:[%s2004 + $0x18] sm:$0xff]
      %v2009 = vld [vmem:[%s2004 + $0x20] sm:$0xff]
      %v2010 = vld [vmem:[%s2004 + $0x28] sm:$0xff]
      %v2011 = vld [vmem:[%s2004 + $0x30] sm:$0xff]
      %v2012 = vld [vmem:[%s2004 + $0x38] sm:$0xff]
      %v2013 = vld [vmem:[%s2004 + $0x40] sm:$0xff]
      %v2014 = vld [vmem:[%s2004 + $0x48] sm:$0xff]
      %v2015 = vld [vmem:[%s2004 + $0x50] sm:$0xff]
      %v2016 = vld [vmem:[%s2004 + $0x58] sm:$0xff]
      %v2017 = vld [vmem:[%s2004 + $0x60] sm:$0xff]
      %v2018 = vld [vmem:[%s2004 + $0x68] sm:$0xff]
      %v2019 = vld [vmem:[%s2004 + $0x70] sm:$0xff]
      %v2020 = vld [vmem:[%s2004 + $0x78] sm:$0xff]
      %s2021 = scalar_lea.vmem %s8, 1
      %v2022 = vld [vmem:[%s2021] sm:$0x1]
      %v2024 = vlaneseq
      %v2025 = vshrl.u32 %v2024, 7
      %v2026 = vsub.s32 0, %v2025
      %v2027 = vrot.slane %v2022, %v2026
      %2029 = vmatprep.subr.mxu0 0.0
      %2030 = vmatpush1.msra.mxu0 %v2005
      %2031 = vmatprep.subr.mxu0 0.0
      %2032 = vmatpush1.msra.mxu0 %v2006
      %2033 = vmatprep.subr.mxu0 0.0
      %2034 = vmatpush1.msra.mxu0 %v2007
      %2035 = vmatprep.subr.mxu0 0.0
      %2036 = vmatpush1.msra.mxu0 %v2008
      %2037 = vmatprep.subr.mxu0 0.0
      %2038 = vmatpush1.msra.mxu0 %v2009
      %2039 = vmatprep.subr.mxu0 0.0
      %2040 = vmatpush1.msra.mxu0 %v2010
      %2041 = vmatprep.subr.mxu0 0.0
      %2042 = vmatpush1.msra.mxu0 %v2011
      %2043 = vmatprep.subr.mxu0 0.0
      %2044 = vmatpush1.msra.mxu0 %v2012
      %2045 = vmatprep.subr.mxu0 0.0
      %2046 = vmatpush1.msra.mxu0 %v2013
      %2047 = vmatprep.subr.mxu0 0.0
      %2048 = vmatpush1.msra.mxu0 %v2014
      %2049 = vmatprep.subr.mxu0 0.0
      %2050 = vmatpush1.msra.mxu0 %v2015
      %2051 = vmatprep.subr.mxu0 0.0
      %2052 = vmatpush1.msra.mxu0 %v2016
      %2053 = vmatprep.subr.mxu0 0.0
      %2054 = vmatpush1.msra.mxu0 %v2017
      %2055 = vmatprep.subr.mxu0 0.0
      %2056 = vmatpush1.msra.mxu0 %v2018
      %2057 = vmatprep.subr.mxu0 0.0
      %2058 = vmatpush1.msra.mxu0 %v2019
      %2059 = vmatprep.subr.mxu0 0.0
      %2060 = vmatpush1.msra.mxu0 %v2020
      %2061 = vmatprep.subr.mxu0 0.0
      %2062 = vmatpush1.msra.mxu0 0.0
      %2063 = vmatprep.subr.mxu0 0.0
      %2064 = vmatpush1.msra.mxu0 0.0
      %2065 = vmatprep.subr.mxu0 0.0
      %2066 = vmatpush1.msra.mxu0 0.0
      %2067 = vmatprep.subr.mxu0 0.0
      %2068 = vmatpush1.msra.mxu0 0.0
      %2069 = vmatprep.subr.mxu0 0.0
      %2070 = vmatpush1.msra.mxu0 0.0
      %2071 = vmatprep.subr.mxu0 0.0
      %2072 = vmatpush1.msra.mxu0 0.0
      %2073 = vmatprep.subr.mxu0 0.0
      %2074 = vmatpush1.msra.mxu0 0.0
      %2075 = vmatprep.subr.mxu0 0.0
      %2076 = vmatpush1.msra.mxu0 0.0
      %2077 = vmatprep.subr.mxu0 0.0
      %2078 = vmatpush1.msra.mxu0 0.0
      %2079 = vmatprep.subr.mxu0 0.0
      %2080 = vmatpush1.msra.mxu0 0.0
      %2081 = vmatprep.subr.mxu0 0.0
      %2082 = vmatpush1.msra.mxu0 0.0
      %2083 = vmatprep.subr.mxu0 0.0
      %2084 = vmatpush1.msra.mxu0 0.0
      %2085 = vmatprep.subr.mxu0 0.0
      %2086 = vmatpush1.msra.mxu0 0.0
      %2087 = vmatprep.subr.mxu0 0.0
      %2088 = vmatpush1.msra.mxu0 0.0
      %2089 = vmatprep.subr.mxu0 0.0
      %2090 = vmatpush1.msra.mxu0 0.0
      %2091 = vmatprep.subr.mxu0 0.0
      %2092 = vmatpush1.msra.mxu0 0.0
      %2093 = vmatprep.mubr.f32.mxu0 0.0
      %2094 = vmatmul.mubr.f32.gmra.mrb[0].mxu0 %v2002
      %v2095 = vpop.f32.mrb[0].mxu0
      %v2096 = vadd.f32 %v2027, %v2095
      %v2097 = vpop.f32.mrb[0].mxu0
      %2098 = vdwg.mxu0
      %v2099 = vld [vmem:[#allocation2 + $0x6] sm:$0x7f]
      %v2100 = vadd.f32 %v2096, %v2099
      %vm2101 = vcmask 1046528
      %v2102 = vsel %vm2101, %v2100, 0.0
      %2103 = vadd.xlane.f32.xlu0 %v2102
      %v2104 = vpop.xlane.xlu0 %2103
      %v2105 = vsel %vm2101, %v2104, 0.0
      %v2106 = vrot.slane %v2105, 4
      %v2107 = vadd.f32 %v2105, %v2106
      %v2108 = vrot.slane %v2107, 2
      %v2109 = vadd.f32 %v2107, %v2108
      %v2110 = vrot.slane %v2109, 1
      %v2111 = vadd.f32 %v2109, %v2110
      %v2112 = vmul.f32 %v2111, 0.0011160715
      %v2113 = vsub.f32 %v2100, %v2112
      %v2114 = vmul.f32 %v2113, %v2113
      %v2115 = vsel %vm2101, %v2114, 0.0
      %2116 = vadd.xlane.f32.xlu0 %v2115
      %v2117 = vpop.xlane.xlu0 %2116
      %v2118 = vsel %vm2101, %v2117, 0.0
      %v2119 = vrot.slane %v2118, 4
      %v2120 = vadd.f32 %v2118, %v2119
      %v2121 = vrot.slane %v2120, 2
      %v2122 = vadd.f32 %v2120, %v2121
      %v2123 = vrot.slane %v2122, 1
      %v2124 = vadd.f32 %v2122, %v2123
      %v2125 = vmul.f32 %v2124, 0.0011160715
      %v2126 = vadd.f32 %v2125, 1e-05
      %v2127 = vrsqrt.pop %v2126
      %v2128 = vmul.f32 %v2113, %v2127
      %s2129 = scalar_lea.vmem %s9, 16
      %v2130 = vld [vmem:[%s2129] sm:$0xff]
      %v2131 = vmul.f32 %v2128, %v2130
      %s2132 = scalar_lea.vmem %s10, 16
      %v2133 = vld [vmem:[%s2132] sm:$0xff]
      %v2134 = vadd.f32 %v2131, %v2133
      %2135 = vst [vmem:[#allocation2] sm:$0x7f] %v2134
      %v2136 = vld [vmem:[#allocation2] sm:$0x1]
      %2137 = vst [vmem:[#allocation3] sm:$0x1] %v2136
      %v2138 = vld [vmem:[#allocation2 + $0x1] sm:$0x1]
      %2139 = vst [vmem:[#allocation3 + $0x8] sm:$0x1] %v2138
      %v2140 = vld [vmem:[#allocation2 + $0x2] sm:$0x1]
      %2141 = vst [vmem:[#allocation3 + $0x10] sm:$0x1] %v2140
      %v2142 = vld [vmem:[#allocation2 + $0x3] sm:$0x1]
      %2143 = vst [vmem:[#allocation3 + $0x18] sm:$0x1] %v2142
      %v2144 = vld [vmem:[#allocation2 + $0x4] sm:$0x1]
      %2145 = vst [vmem:[#allocation3 + $0x20] sm:$0x1] %v2144
      %v2146 = vld [vmem:[#allocation2 + $0x5] sm:$0x1]
      %2147 = vst [vmem:[#allocation3 + $0x28] sm:$0x1] %v2146
      %v2148 = vld [vmem:[#allocation2 + $0x6] sm:$0x1]
      %2149 = vst [vmem:[#allocation3 + $0x30] sm:$0x1] %v2148
      %v2150 = vld [vmem:[#allocation3] ss:$8 sm:$0xf]
      %v2151 = vld [vmem:[#allocation3] ss:$8 sm:$0xf0]
      %v2152 = vor.u32 %v2150, %v2151
      %s2153 = scalar_lea.vmem %s5, 3584
      %v2154 = vld [vmem:[%s2153] sm:$0xff]
      %v2155 = vld [vmem:[%s2153 + $0x8] sm:$0xff]
      %v2156 = vld [vmem:[%s2153 + $0x10] sm:$0xff]
      %v2157 = vld [vmem:[%s2153 + $0x18] sm:$0xff]
      %v2158 = vld [vmem:[%s2153 + $0x20] sm:$0xff]
      %v2159 = vld [vmem:[%s2153 + $0x28] sm:$0xff]
      %v2160 = vld [vmem:[%s2153 + $0x30] sm:$0xff]
      %v2161 = vld [vmem:[%s2153 + $0x38] sm:$0xff]
      %v2162 = vld [vmem:[%s2153 + $0x40] sm:$0xff]
      %v2163 = vld [vmem:[%s2153 + $0x48] sm:$0xff]
      %v2164 = vld [vmem:[%s2153 + $0x50] sm:$0xff]
      %v2165 = vld [vmem:[%s2153 + $0x58] sm:$0xff]
      %v2166 = vld [vmem:[%s2153 + $0x60] sm:$0xff]
      %v2167 = vld [vmem:[%s2153 + $0x68] sm:$0xff]
      %v2168 = vld [vmem:[%s2153 + $0x70] sm:$0xff]
      %v2169 = vld [vmem:[%s2153 + $0x78] sm:$0xff]
      %v2170 = vld [vmem:[%s2153 + $0x80] sm:$0xff]
      %v2171 = vld [vmem:[%s2153 + $0x88] sm:$0xff]
      %v2172 = vld [vmem:[%s2153 + $0x90] sm:$0xff]
      %v2173 = vld [vmem:[%s2153 + $0x98] sm:$0xff]
      %v2174 = vld [vmem:[%s2153 + $0xa0] sm:$0xff]
      %v2175 = vld [vmem:[%s2153 + $0xa8] sm:$0xff]
      %v2176 = vld [vmem:[%s2153 + $0xb0] sm:$0xff]
      %v2177 = vld [vmem:[%s2153 + $0xb8] sm:$0xff]
      %v2178 = vld [vmem:[%s2153 + $0xc0] sm:$0xff]
      %v2179 = vld [vmem:[%s2153 + $0xc8] sm:$0xff]
      %v2180 = vld [vmem:[%s2153 + $0xd0] sm:$0xff]
      %v2181 = vld [vmem:[%s2153 + $0xd8] sm:$0xff]
      %v2182 = vld [vmem:[%s2153 + $0xe0] sm:$0xff]
      %v2183 = vld [vmem:[%s2153 + $0xe8] sm:$0xff]
      %v2184 = vld [vmem:[%s2153 + $0xf0] sm:$0xff]
      %v2185 = vld [vmem:[%s2153 + $0xf8] sm:$0xff]
      %v2186 = vld [vmem:[%s2153 + $0x100] sm:$0xff]
      %v2187 = vld [vmem:[%s2153 + $0x108] sm:$0xff]
      %v2188 = vld [vmem:[%s2153 + $0x110] sm:$0xff]
      %v2189 = vld [vmem:[%s2153 + $0x118] sm:$0xff]
      %v2190 = vld [vmem:[%s2153 + $0x120] sm:$0xff]
      %v2191 = vld [vmem:[%s2153 + $0x128] sm:$0xff]
      %v2192 = vld [vmem:[%s2153 + $0x130] sm:$0xff]
      %v2193 = vld [vmem:[%s2153 + $0x138] sm:$0xff]
      %v2194 = vld [vmem:[%s2153 + $0x140] sm:$0xff]
      %v2195 = vld [vmem:[%s2153 + $0x148] sm:$0xff]
      %v2196 = vld [vmem:[%s2153 + $0x150] sm:$0xff]
      %v2197 = vld [vmem:[%s2153 + $0x158] sm:$0xff]
      %v2198 = vld [vmem:[%s2153 + $0x160] sm:$0xff]
      %v2199 = vld [vmem:[%s2153 + $0x168] sm:$0xff]
      %v2200 = vld [vmem:[%s2153 + $0x170] sm:$0xff]
      %v2201 = vld [vmem:[%s2153 + $0x178] sm:$0xff]
      %v2202 = vld [vmem:[%s2153 + $0x180] sm:$0xff]
      %v2203 = vld [vmem:[%s2153 + $0x188] sm:$0xff]
      %v2204 = vld [vmem:[%s2153 + $0x190] sm:$0xff]
      %v2205 = vld [vmem:[%s2153 + $0x198] sm:$0xff]
      %v2206 = vld [vmem:[%s2153 + $0x1a0] sm:$0xff]
      %v2207 = vld [vmem:[%s2153 + $0x1a8] sm:$0xff]
      %v2208 = vld [vmem:[%s2153 + $0x1b0] sm:$0xff]
      %v2209 = vld [vmem:[%s2153 + $0x1b8] sm:$0xff]
      %v2210 = vld [vmem:[%s2153 + $0x1c0] sm:$0xff]
      %v2211 = vld [vmem:[%s2153 + $0x1c8] sm:$0xff]
      %v2212 = vld [vmem:[%s2153 + $0x1d0] sm:$0xff]
      %v2213 = vld [vmem:[%s2153 + $0x1d8] sm:$0xff]
      %v2214 = vld [vmem:[%s2153 + $0x1e0] sm:$0xff]
      %v2215 = vld [vmem:[%s2153 + $0x1e8] sm:$0xff]
      %v2216 = vld [vmem:[%s2153 + $0x1f0] sm:$0xff]
      %v2217 = vld [vmem:[%s2153 + $0x1f8] sm:$0xff]
      %v2218 = vld [vmem:[%s2153 + $0x200] sm:$0xff]
      %v2219 = vld [vmem:[%s2153 + $0x208] sm:$0xff]
      %v2220 = vld [vmem:[%s2153 + $0x210] sm:$0xff]
      %v2221 = vld [vmem:[%s2153 + $0x218] sm:$0xff]
      %v2222 = vld [vmem:[%s2153 + $0x220] sm:$0xff]
      %v2223 = vld [vmem:[%s2153 + $0x228] sm:$0xff]
      %v2224 = vld [vmem:[%s2153 + $0x230] sm:$0xff]
      %v2225 = vld [vmem:[%s2153 + $0x238] sm:$0xff]
      %v2226 = vld [vmem:[%s2153 + $0x240] sm:$0xff]
      %v2227 = vld [vmem:[%s2153 + $0x248] sm:$0xff]
      %v2228 = vld [vmem:[%s2153 + $0x250] sm:$0xff]
      %v2229 = vld [vmem:[%s2153 + $0x258] sm:$0xff]
      %v2230 = vld [vmem:[%s2153 + $0x260] sm:$0xff]
      %v2231 = vld [vmem:[%s2153 + $0x268] sm:$0xff]
      %v2232 = vld [vmem:[%s2153 + $0x270] sm:$0xff]
      %v2233 = vld [vmem:[%s2153 + $0x278] sm:$0xff]
      %v2234 = vld [vmem:[%s2153 + $0x280] sm:$0xff]
      %v2235 = vld [vmem:[%s2153 + $0x288] sm:$0xff]
      %v2236 = vld [vmem:[%s2153 + $0x290] sm:$0xff]
      %v2237 = vld [vmem:[%s2153 + $0x298] sm:$0xff]
      %v2238 = vld [vmem:[%s2153 + $0x2a0] sm:$0xff]
      %v2239 = vld [vmem:[%s2153 + $0x2a8] sm:$0xff]
      %v2240 = vld [vmem:[%s2153 + $0x2b0] sm:$0xff]
      %v2241 = vld [vmem:[%s2153 + $0x2b8] sm:$0xff]
      %v2242 = vld [vmem:[%s2153 + $0x2c0] sm:$0xff]
      %v2243 = vld [vmem:[%s2153 + $0x2c8] sm:$0xff]
      %v2244 = vld [vmem:[%s2153 + $0x2d0] sm:$0xff]
      %v2245 = vld [vmem:[%s2153 + $0x2d8] sm:$0xff]
      %v2246 = vld [vmem:[%s2153 + $0x2e0] sm:$0xff]
      %v2247 = vld [vmem:[%s2153 + $0x2e8] sm:$0xff]
      %v2248 = vld [vmem:[%s2153 + $0x2f0] sm:$0xff]
      %v2249 = vld [vmem:[%s2153 + $0x2f8] sm:$0xff]
      %v2250 = vld [vmem:[%s2153 + $0x300] sm:$0xff]
      %v2251 = vld [vmem:[%s2153 + $0x308] sm:$0xff]
      %v2252 = vld [vmem:[%s2153 + $0x310] sm:$0xff]
      %v2253 = vld [vmem:[%s2153 + $0x318] sm:$0xff]
      %v2254 = vld [vmem:[%s2153 + $0x320] sm:$0xff]
      %v2255 = vld [vmem:[%s2153 + $0x328] sm:$0xff]
      %v2256 = vld [vmem:[%s2153 + $0x330] sm:$0xff]
      %v2257 = vld [vmem:[%s2153 + $0x338] sm:$0xff]
      %v2258 = vld [vmem:[%s2153 + $0x340] sm:$0xff]
      %v2259 = vld [vmem:[%s2153 + $0x348] sm:$0xff]
      %v2260 = vld [vmem:[%s2153 + $0x350] sm:$0xff]
      %v2261 = vld [vmem:[%s2153 + $0x358] sm:$0xff]
      %v2262 = vld [vmem:[%s2153 + $0x360] sm:$0xff]
      %v2263 = vld [vmem:[%s2153 + $0x368] sm:$0xff]
      %v2264 = vld [vmem:[%s2153 + $0x370] sm:$0xff]
      %v2265 = vld [vmem:[%s2153 + $0x378] sm:$0xff]
      %v2266 = vld [vmem:[%s2153 + $0x380] sm:$0xff]
      %v2267 = vld [vmem:[%s2153 + $0x388] sm:$0xff]
      %v2268 = vld [vmem:[%s2153 + $0x390] sm:$0xff]
      %v2269 = vld [vmem:[%s2153 + $0x398] sm:$0xff]
      %v2270 = vld [vmem:[%s2153 + $0x3a0] sm:$0xff]
      %v2271 = vld [vmem:[%s2153 + $0x3a8] sm:$0xff]
      %v2272 = vld [vmem:[%s2153 + $0x3b0] sm:$0xff]
      %v2273 = vld [vmem:[%s2153 + $0x3b8] sm:$0xff]
      %v2274 = vld [vmem:[%s2153 + $0x3c0] sm:$0xff]
      %v2275 = vld [vmem:[%s2153 + $0x3c8] sm:$0xff]
      %v2276 = vld [vmem:[%s2153 + $0x3d0] sm:$0xff]
      %v2277 = vld [vmem:[%s2153 + $0x3d8] sm:$0xff]
      %v2278 = vld [vmem:[%s2153 + $0x3e0] sm:$0xff]
      %v2279 = vld [vmem:[%s2153 + $0x3e8] sm:$0xff]
      %v2280 = vld [vmem:[%s2153 + $0x3f0] sm:$0xff]
      %v2281 = vld [vmem:[%s2153 + $0x3f8] sm:$0xff]
      %v2282 = vld [vmem:[%s2153 + $0x400] sm:$0xff]
      %v2283 = vld [vmem:[%s2153 + $0x408] sm:$0xff]
      %v2284 = vld [vmem:[%s2153 + $0x410] sm:$0xff]
      %v2285 = vld [vmem:[%s2153 + $0x418] sm:$0xff]
      %v2286 = vld [vmem:[%s2153 + $0x420] sm:$0xff]
      %v2287 = vld [vmem:[%s2153 + $0x428] sm:$0xff]
      %v2288 = vld [vmem:[%s2153 + $0x430] sm:$0xff]
      %v2289 = vld [vmem:[%s2153 + $0x438] sm:$0xff]
      %v2290 = vld [vmem:[%s2153 + $0x440] sm:$0xff]
      %v2291 = vld [vmem:[%s2153 + $0x448] sm:$0xff]
      %v2292 = vld [vmem:[%s2153 + $0x450] sm:$0xff]
      %v2293 = vld [vmem:[%s2153 + $0x458] sm:$0xff]
      %v2294 = vld [vmem:[%s2153 + $0x460] sm:$0xff]
      %v2295 = vld [vmem:[%s2153 + $0x468] sm:$0xff]
      %v2296 = vld [vmem:[%s2153 + $0x470] sm:$0xff]
      %v2297 = vld [vmem:[%s2153 + $0x478] sm:$0xff]
      %v2298 = vld [vmem:[%s2153 + $0x480] sm:$0xff]
      %v2299 = vld [vmem:[%s2153 + $0x488] sm:$0xff]
      %v2300 = vld [vmem:[%s2153 + $0x490] sm:$0xff]
      %v2301 = vld [vmem:[%s2153 + $0x498] sm:$0xff]
      %v2302 = vld [vmem:[%s2153 + $0x4a0] sm:$0xff]
      %v2303 = vld [vmem:[%s2153 + $0x4a8] sm:$0xff]
      %v2304 = vld [vmem:[%s2153 + $0x4b0] sm:$0xff]
      %v2305 = vld [vmem:[%s2153 + $0x4b8] sm:$0xff]
      %v2306 = vld [vmem:[%s2153 + $0x4c0] sm:$0xff]
      %v2307 = vld [vmem:[%s2153 + $0x4c8] sm:$0xff]
      %v2308 = vld [vmem:[%s2153 + $0x4d0] sm:$0xff]
      %v2309 = vld [vmem:[%s2153 + $0x4d8] sm:$0xff]
      %v2310 = vld [vmem:[%s2153 + $0x4e0] sm:$0xff]
      %v2311 = vld [vmem:[%s2153 + $0x4e8] sm:$0xff]
      %v2312 = vld [vmem:[%s2153 + $0x4f0] sm:$0xff]
      %v2313 = vld [vmem:[%s2153 + $0x4f8] sm:$0xff]
      %v2314 = vld [vmem:[%s2153 + $0x500] sm:$0xff]
      %v2315 = vld [vmem:[%s2153 + $0x508] sm:$0xff]
      %v2316 = vld [vmem:[%s2153 + $0x510] sm:$0xff]
      %v2317 = vld [vmem:[%s2153 + $0x518] sm:$0xff]
      %v2318 = vld [vmem:[%s2153 + $0x520] sm:$0xff]
      %v2319 = vld [vmem:[%s2153 + $0x528] sm:$0xff]
      %v2320 = vld [vmem:[%s2153 + $0x530] sm:$0xff]
      %v2321 = vld [vmem:[%s2153 + $0x538] sm:$0xff]
      %v2322 = vld [vmem:[%s2153 + $0x540] sm:$0xff]
      %v2323 = vld [vmem:[%s2153 + $0x548] sm:$0xff]
      %v2324 = vld [vmem:[%s2153 + $0x550] sm:$0xff]
      %v2325 = vld [vmem:[%s2153 + $0x558] sm:$0xff]
      %v2326 = vld [vmem:[%s2153 + $0x560] sm:$0xff]
      %v2327 = vld [vmem:[%s2153 + $0x568] sm:$0xff]
      %v2328 = vld [vmem:[%s2153 + $0x570] sm:$0xff]
      %v2329 = vld [vmem:[%s2153 + $0x578] sm:$0xff]
      %v2330 = vld [vmem:[%s2153 + $0x580] sm:$0xff]
      %v2331 = vld [vmem:[%s2153 + $0x588] sm:$0xff]
      %v2332 = vld [vmem:[%s2153 + $0x590] sm:$0xff]
      %v2333 = vld [vmem:[%s2153 + $0x598] sm:$0xff]
      %v2334 = vld [vmem:[%s2153 + $0x5a0] sm:$0xff]
      %v2335 = vld [vmem:[%s2153 + $0x5a8] sm:$0xff]
      %v2336 = vld [vmem:[%s2153 + $0x5b0] sm:$0xff]
      %v2337 = vld [vmem:[%s2153 + $0x5b8] sm:$0xff]
      %v2338 = vld [vmem:[%s2153 + $0x5c0] sm:$0xff]
      %v2339 = vld [vmem:[%s2153 + $0x5c8] sm:$0xff]
      %v2340 = vld [vmem:[%s2153 + $0x5d0] sm:$0xff]
      %v2341 = vld [vmem:[%s2153 + $0x5d8] sm:$0xff]
      %v2342 = vld [vmem:[%s2153 + $0x5e0] sm:$0xff]
      %v2343 = vld [vmem:[%s2153 + $0x5e8] sm:$0xff]
      %v2344 = vld [vmem:[%s2153 + $0x5f0] sm:$0xff]
      %v2345 = vld [vmem:[%s2153 + $0x5f8] sm:$0xff]
      %v2346 = vld [vmem:[%s2153 + $0x600] sm:$0xff]
      %v2347 = vld [vmem:[%s2153 + $0x608] sm:$0xff]
      %v2348 = vld [vmem:[%s2153 + $0x610] sm:$0xff]
      %v2349 = vld [vmem:[%s2153 + $0x618] sm:$0xff]
      %v2350 = vld [vmem:[%s2153 + $0x620] sm:$0xff]
      %v2351 = vld [vmem:[%s2153 + $0x628] sm:$0xff]
      %v2352 = vld [vmem:[%s2153 + $0x630] sm:$0xff]
      %v2353 = vld [vmem:[%s2153 + $0x638] sm:$0xff]
      %v2354 = vld [vmem:[%s2153 + $0x640] sm:$0xff]
      %v2355 = vld [vmem:[%s2153 + $0x648] sm:$0xff]
      %v2356 = vld [vmem:[%s2153 + $0x650] sm:$0xff]
      %v2357 = vld [vmem:[%s2153 + $0x658] sm:$0xff]
      %v2358 = vld [vmem:[%s2153 + $0x660] sm:$0xff]
      %v2359 = vld [vmem:[%s2153 + $0x668] sm:$0xff]
      %v2360 = vld [vmem:[%s2153 + $0x670] sm:$0xff]
      %v2361 = vld [vmem:[%s2153 + $0x678] sm:$0xff]
      %v2362 = vld [vmem:[%s2153 + $0x680] sm:$0xff]
      %v2363 = vld [vmem:[%s2153 + $0x688] sm:$0xff]
      %v2364 = vld [vmem:[%s2153 + $0x690] sm:$0xff]
      %v2365 = vld [vmem:[%s2153 + $0x698] sm:$0xff]
      %v2366 = vld [vmem:[%s2153 + $0x6a0] sm:$0xff]
      %v2367 = vld [vmem:[%s2153 + $0x6a8] sm:$0xff]
      %v2368 = vld [vmem:[%s2153 + $0x6b0] sm:$0xff]
      %v2369 = vld [vmem:[%s2153 + $0x6b8] sm:$0xff]
      %v2370 = vld [vmem:[%s2153 + $0x6c0] sm:$0xff]
      %v2371 = vld [vmem:[%s2153 + $0x6c8] sm:$0xff]
      %v2372 = vld [vmem:[%s2153 + $0x6d0] sm:$0xff]
      %v2373 = vld [vmem:[%s2153 + $0x6d8] sm:$0xff]
      %v2374 = vld [vmem:[%s2153 + $0x6e0] sm:$0xff]
      %v2375 = vld [vmem:[%s2153 + $0x6e8] sm:$0xff]
      %v2376 = vld [vmem:[%s2153 + $0x6f0] sm:$0xff]
      %v2377 = vld [vmem:[%s2153 + $0x6f8] sm:$0xff]
      %s2378 = scalar_lea.vmem %s6, 4
      %v2379 = vld [vmem:[%s2378] sm:$0x3]
      %v2381 = vlaneseq
      %v2382 = vshrl.u32 %v2381, 7
      %v2383 = vsub.s32 0, %v2382
      %v2384 = vrot.slane %v2152, %v2383
      %v2385 = vlaneseq
      %v2386 = vshrl.u32 %v2385, 7
      %v2387 = vsub.s32 1, %v2386
      %v2388 = vrot.slane %v2152, %v2387
      %v2389 = vlaneseq
      %v2390 = vshrl.u32 %v2389, 7
      %v2391 = vsub.s32 2, %v2390
      %v2392 = vrot.slane %v2152, %v2391
      %v2393 = vlaneseq
      %v2394 = vshrl.u32 %v2393, 7
      %v2395 = vsub.s32 3, %v2394
      %v2396 = vrot.slane %v2152, %v2395
      %v2397 = vlaneseq
      %v2398 = vshrl.u32 %v2397, 7
      %v2399 = vsub.s32 4, %v2398
      %v2400 = vrot.slane %v2152, %v2399
      %v2401 = vlaneseq
      %v2402 = vshrl.u32 %v2401, 7
      %v2403 = vsub.s32 5, %v2402
      %v2404 = vrot.slane %v2152, %v2403
      %v2405 = vlaneseq
      %v2406 = vshrl.u32 %v2405, 7
      %v2407 = vsub.s32 6, %v2406
      %v2408 = vrot.slane %v2152, %v2407
      %v2417 = vlaneseq
      %v2418 = vshrl.u32 %v2417, 7
      %v2419 = vsub.s32 0, %v2418
      %v2420 = vrot.slane %v2379, %v2419
      %v2421 = vlaneseq
      %v2422 = vshrl.u32 %v2421, 7
      %v2423 = vsub.s32 1, %v2422
      %v2424 = vrot.slane %v2379, %v2423
      %2427 = vmatprep.subr.mxu0 %v2155
      %2428 = vmatpush1.msra.mxu0 %v2154
      %2429 = vmatprep.subr.mxu0 %v2157
      %2430 = vmatpush1.msra.mxu0 %v2156
      %2431 = vmatprep.subr.mxu0 %v2159
      %2432 = vmatpush1.msra.mxu0 %v2158
      %2433 = vmatprep.subr.mxu0 %v2161
      %2434 = vmatpush1.msra.mxu0 %v2160
      %2435 = vmatprep.subr.mxu0 %v2163
      %2436 = vmatpush1.msra.mxu0 %v2162
      %2437 = vmatprep.subr.mxu0 %v2165
      %2438 = vmatpush1.msra.mxu0 %v2164
      %2439 = vmatprep.subr.mxu0 %v2167
      %2440 = vmatpush1.msra.mxu0 %v2166
      %2441 = vmatprep.subr.mxu0 %v2169
      %2442 = vmatpush1.msra.mxu0 %v2168
      %2443 = vmatprep.subr.mxu0 %v2171
      %2444 = vmatpush1.msra.mxu0 %v2170
      %2445 = vmatprep.subr.mxu0 %v2173
      %2446 = vmatpush1.msra.mxu0 %v2172
      %2447 = vmatprep.subr.mxu0 %v2175
      %2448 = vmatpush1.msra.mxu0 %v2174
      %2449 = vmatprep.subr.mxu0 %v2177
      %2450 = vmatpush1.msra.mxu0 %v2176
      %2451 = vmatprep.subr.mxu0 %v2179
      %2452 = vmatpush1.msra.mxu0 %v2178
      %2453 = vmatprep.subr.mxu0 %v2181
      %2454 = vmatpush1.msra.mxu0 %v2180
      %2455 = vmatprep.subr.mxu0 %v2183
      %2456 = vmatpush1.msra.mxu0 %v2182
      %2457 = vmatprep.subr.mxu0 %v2185
      %2458 = vmatpush1.msra.mxu0 %v2184
      %2459 = vmatprep.subr.mxu0 %v2187
      %2460 = vmatpush1.msra.mxu0 %v2186
      %2461 = vmatprep.subr.mxu0 %v2189
      %2462 = vmatpush1.msra.mxu0 %v2188
      %2463 = vmatprep.subr.mxu0 %v2191
      %2464 = vmatpush1.msra.mxu0 %v2190
      %2465 = vmatprep.subr.mxu0 %v2193
      %2466 = vmatpush1.msra.mxu0 %v2192
      %2467 = vmatprep.subr.mxu0 %v2195
      %2468 = vmatpush1.msra.mxu0 %v2194
      %2469 = vmatprep.subr.mxu0 %v2197
      %2470 = vmatpush1.msra.mxu0 %v2196
      %2471 = vmatprep.subr.mxu0 %v2199
      %2472 = vmatpush1.msra.mxu0 %v2198
      %2473 = vmatprep.subr.mxu0 %v2201
      %2474 = vmatpush1.msra.mxu0 %v2200
      %2475 = vmatprep.subr.mxu0 %v2203
      %2476 = vmatpush1.msra.mxu0 %v2202
      %2477 = vmatprep.subr.mxu0 %v2205
      %2478 = vmatpush1.msra.mxu0 %v2204
      %2479 = vmatprep.subr.mxu0 %v2207
      %2480 = vmatpush1.msra.mxu0 %v2206
      %2481 = vmatprep.subr.mxu0 %v2209
      %2482 = vmatpush1.msra.mxu0 %v2208
      %2483 = vmatprep.subr.mxu0 %v2211
      %2484 = vmatpush1.msra.mxu0 %v2210
      %2485 = vmatprep.subr.mxu0 %v2213
      %2486 = vmatpush1.msra.mxu0 %v2212
      %2487 = vmatprep.subr.mxu0 %v2215
      %2488 = vmatpush1.msra.mxu0 %v2214
      %2489 = vmatprep.subr.mxu0 %v2217
      %2490 = vmatpush1.msra.mxu0 %v2216
      %2491 = vmatprep.mubr.f32.mxu0 %v2388
      %2492 = vmatmul.mubr.f32.gmra.mrb[0].mxu0 %v2384
      %v2493 = vpop.f32.mrb[0].mxu0
      %v2494 = vadd.f32 %v2420, %v2493
      %v2495 = vpop.f32.mrb[0].mxu0
      %v2496 = vadd.f32 %v2424, %v2495
      %2497 = vdwg.mxu0
      %2498 = vmatprep.subr.mxu0 %v2219
      %2499 = vmatpush1.msra.mxu0 %v2218
      %2500 = vmatprep.subr.mxu0 %v2221
      %2501 = vmatpush1.msra.mxu0 %v2220
      %2502 = vmatprep.subr.mxu0 %v2223
      %2503 = vmatpush1.msra.mxu0 %v2222
      %2504 = vmatprep.subr.mxu0 %v2225
      %2505 = vmatpush1.msra.mxu0 %v2224
      %2506 = vmatprep.subr.mxu0 %v2227
      %2507 = vmatpush1.msra.mxu0 %v2226
      %2508 = vmatprep.subr.mxu0 %v2229
      %2509 = vmatpush1.msra.mxu0 %v2228
      %2510 = vmatprep.subr.mxu0 %v2231
      %2511 = vmatpush1.msra.mxu0 %v2230
      %2512 = vmatprep.subr.mxu0 %v2233
      %2513 = vmatpush1.msra.mxu0 %v2232
      %2514 = vmatprep.subr.mxu0 %v2235
      %2515 = vmatpush1.msra.mxu0 %v2234
      %2516 = vmatprep.subr.mxu0 %v2237
      %2517 = vmatpush1.msra.mxu0 %v2236
      %2518 = vmatprep.subr.mxu0 %v2239
      %2519 = vmatpush1.msra.mxu0 %v2238
      %2520 = vmatprep.subr.mxu0 %v2241
      %2521 = vmatpush1.msra.mxu0 %v2240
      %2522 = vmatprep.subr.mxu0 %v2243
      %2523 = vmatpush1.msra.mxu0 %v2242
      %2524 = vmatprep.subr.mxu0 %v2245
      %2525 = vmatpush1.msra.mxu0 %v2244
      %2526 = vmatprep.subr.mxu0 %v2247
      %2527 = vmatpush1.msra.mxu0 %v2246
      %2528 = vmatprep.subr.mxu0 %v2249
      %2529 = vmatpush1.msra.mxu0 %v2248
      %2530 = vmatprep.subr.mxu0 %v2251
      %2531 = vmatpush1.msra.mxu0 %v2250
      %2532 = vmatprep.subr.mxu0 %v2253
      %2533 = vmatpush1.msra.mxu0 %v2252
      %2534 = vmatprep.subr.mxu0 %v2255
      %2535 = vmatpush1.msra.mxu0 %v2254
      %2536 = vmatprep.subr.mxu0 %v2257
      %2537 = vmatpush1.msra.mxu0 %v2256
      %2538 = vmatprep.subr.mxu0 %v2259
      %2539 = vmatpush1.msra.mxu0 %v2258
      %2540 = vmatprep.subr.mxu0 %v2261
      %2541 = vmatpush1.msra.mxu0 %v2260
      %2542 = vmatprep.subr.mxu0 %v2263
      %2543 = vmatpush1.msra.mxu0 %v2262
      %2544 = vmatprep.subr.mxu0 %v2265
      %2545 = vmatpush1.msra.mxu0 %v2264
      %2546 = vmatprep.subr.mxu0 %v2267
      %2547 = vmatpush1.msra.mxu0 %v2266
      %2548 = vmatprep.subr.mxu0 %v2269
      %2549 = vmatpush1.msra.mxu0 %v2268
      %2550 = vmatprep.subr.mxu0 %v2271
      %2551 = vmatpush1.msra.mxu0 %v2270
      %2552 = vmatprep.subr.mxu0 %v2273
      %2553 = vmatpush1.msra.mxu0 %v2272
      %2554 = vmatprep.subr.mxu0 %v2275
      %2555 = vmatpush1.msra.mxu0 %v2274
      %2556 = vmatprep.subr.mxu0 %v2277
      %2557 = vmatpush1.msra.mxu0 %v2276
      %2558 = vmatprep.subr.mxu0 %v2279
      %2559 = vmatpush1.msra.mxu0 %v2278
      %2560 = vmatprep.subr.mxu0 %v2281
      %2561 = vmatpush1.msra.mxu0 %v2280
      %2562 = vmatprep.mubr.f32.mxu0 %v2396
      %2563 = vmatmul.mubr.f32.gmra.mrb[0].mxu0 %v2392
      %v2564 = vpop.f32.mrb[0].mxu0
      %v2565 = vadd.f32 %v2494, %v2564
      %v2566 = vpop.f32.mrb[0].mxu0
      %v2567 = vadd.f32 %v2496, %v2566
      %2568 = vdwg.mxu0
      %2569 = vmatprep.subr.mxu0 %v2283
      %2570 = vmatpush1.msra.mxu0 %v2282
      %2571 = vmatprep.subr.mxu0 %v2285
      %2572 = vmatpush1.msra.mxu0 %v2284
      %2573 = vmatprep.subr.mxu0 %v2287
      %2574 = vmatpush1.msra.mxu0 %v2286
      %2575 = vmatprep.subr.mxu0 %v2289
      %2576 = vmatpush1.msra.mxu0 %v2288
      %2577 = vmatprep.subr.mxu0 %v2291
      %2578 = vmatpush1.msra.mxu0 %v2290
      %2579 = vmatprep.subr.mxu0 %v2293
      %2580 = vmatpush1.msra.mxu0 %v2292
      %2581 = vmatprep.subr.mxu0 %v2295
      %2582 = vmatpush1.msra.mxu0 %v2294
      %2583 = vmatprep.subr.mxu0 %v2297
      %2584 = vmatpush1.msra.mxu0 %v2296
      %2585 = vmatprep.subr.mxu0 %v2299
      %2586 = vmatpush1.msra.mxu0 %v2298
      %2587 = vmatprep.subr.mxu0 %v2301
      %2588 = vmatpush1.msra.mxu0 %v2300
      %2589 = vmatprep.subr.mxu0 %v2303
      %2590 = vmatpush1.msra.mxu0 %v2302
      %2591 = vmatprep.subr.mxu0 %v2305
      %2592 = vmatpush1.msra.mxu0 %v2304
      %2593 = vmatprep.subr.mxu0 %v2307
      %2594 = vmatpush1.msra.mxu0 %v2306
      %2595 = vmatprep.subr.mxu0 %v2309
      %2596 = vmatpush1.msra.mxu0 %v2308
      %2597 = vmatprep.subr.mxu0 %v2311
      %2598 = vmatpush1.msra.mxu0 %v2310
      %2599 = vmatprep.subr.mxu0 %v2313
      %2600 = vmatpush1.msra.mxu0 %v2312
      %2601 = vmatprep.subr.mxu0 %v2315
      %2602 = vmatpush1.msra.mxu0 %v2314
      %2603 = vmatprep.subr.mxu0 %v2317
      %2604 = vmatpush1.msra.mxu0 %v2316
      %2605 = vmatprep.subr.mxu0 %v2319
      %2606 = vmatpush1.msra.mxu0 %v2318
      %2607 = vmatprep.subr.mxu0 %v2321
      %2608 = vmatpush1.msra.mxu0 %v2320
      %2609 = vmatprep.subr.mxu0 %v2323
      %2610 = vmatpush1.msra.mxu0 %v2322
      %2611 = vmatprep.subr.mxu0 %v2325
      %2612 = vmatpush1.msra.mxu0 %v2324
      %2613 = vmatprep.subr.mxu0 %v2327
      %2614 = vmatpush1.msra.mxu0 %v2326
      %2615 = vmatprep.subr.mxu0 %v2329
      %2616 = vmatpush1.msra.mxu0 %v2328
      %2617 = vmatprep.subr.mxu0 %v2331
      %2618 = vmatpush1.msra.mxu0 %v2330
      %2619 = vmatprep.subr.mxu0 %v2333
      %2620 = vmatpush1.msra.mxu0 %v2332
      %2621 = vmatprep.subr.mxu0 %v2335
      %2622 = vmatpush1.msra.mxu0 %v2334
      %2623 = vmatprep.subr.mxu0 %v2337
      %2624 = vmatpush1.msra.mxu0 %v2336
      %2625 = vmatprep.subr.mxu0 %v2339
      %2626 = vmatpush1.msra.mxu0 %v2338
      %2627 = vmatprep.subr.mxu0 %v2341
      %2628 = vmatpush1.msra.mxu0 %v2340
      %2629 = vmatprep.subr.mxu0 %v2343
      %2630 = vmatpush1.msra.mxu0 %v2342
      %2631 = vmatprep.subr.mxu0 %v2345
      %2632 = vmatpush1.msra.mxu0 %v2344
      %2633 = vmatprep.mubr.f32.mxu0 %v2404
      %2634 = vmatmul.mubr.f32.gmra.mrb[0].mxu0 %v2400
      %v2635 = vpop.f32.mrb[0].mxu0
      %v2636 = vadd.f32 %v2565, %v2635
      %v2637 = vpop.f32.mrb[0].mxu0
      %v2638 = vadd.f32 %v2567, %v2637
      %2639 = vdwg.mxu0
      %2640 = vmatprep.subr.mxu0 %v2347
      %2641 = vmatpush1.msra.mxu0 %v2346
      %2642 = vmatprep.subr.mxu0 %v2349
      %2643 = vmatpush1.msra.mxu0 %v2348
      %2644 = vmatprep.subr.mxu0 %v2351
      %2645 = vmatpush1.msra.mxu0 %v2350
      %2646 = vmatprep.subr.mxu0 %v2353
      %2647 = vmatpush1.msra.mxu0 %v2352
      %2648 = vmatprep.subr.mxu0 %v2355
      %2649 = vmatpush1.msra.mxu0 %v2354
      %2650 = vmatprep.subr.mxu0 %v2357
      %2651 = vmatpush1.msra.mxu0 %v2356
      %2652 = vmatprep.subr.mxu0 %v2359
      %2653 = vmatpush1.msra.mxu0 %v2358
      %2654 = vmatprep.subr.mxu0 %v2361
      %2655 = vmatpush1.msra.mxu0 %v2360
      %2656 = vmatprep.subr.mxu0 %v2363
      %2657 = vmatpush1.msra.mxu0 %v2362
      %2658 = vmatprep.subr.mxu0 %v2365
      %2659 = vmatpush1.msra.mxu0 %v2364
      %2660 = vmatprep.subr.mxu0 %v2367
      %2661 = vmatpush1.msra.mxu0 %v2366
      %2662 = vmatprep.subr.mxu0 %v2369
      %2663 = vmatpush1.msra.mxu0 %v2368
      %2664 = vmatprep.subr.mxu0 %v2371
      %2665 = vmatpush1.msra.mxu0 %v2370
      %2666 = vmatprep.subr.mxu0 %v2373
      %2667 = vmatpush1.msra.mxu0 %v2372
      %2668 = vmatprep.subr.mxu0 %v2375
      %2669 = vmatpush1.msra.mxu0 %v2374
      %2670 = vmatprep.subr.mxu0 %v2377
      %2671 = vmatpush1.msra.mxu0 %v2376
      %2672 = vmatprep.subr.mxu0 0.0
      %2673 = vmatpush1.msra.mxu0 0.0
      %2674 = vmatprep.subr.mxu0 0.0
      %2675 = vmatpush1.msra.mxu0 0.0
      %2676 = vmatprep.subr.mxu0 0.0
      %2677 = vmatpush1.msra.mxu0 0.0
      %2678 = vmatprep.subr.mxu0 0.0
      %2679 = vmatpush1.msra.mxu0 0.0
      %2680 = vmatprep.subr.mxu0 0.0
      %2681 = vmatpush1.msra.mxu0 0.0
      %2682 = vmatprep.subr.mxu0 0.0
      %2683 = vmatpush1.msra.mxu0 0.0
      %2684 = vmatprep.subr.mxu0 0.0
      %2685 = vmatpush1.msra.mxu0 0.0
      %2686 = vmatprep.subr.mxu0 0.0
      %2687 = vmatpush1.msra.mxu0 0.0
      %2688 = vmatprep.subr.mxu0 0.0
      %2689 = vmatpush1.msra.mxu0 0.0
      %2690 = vmatprep.subr.mxu0 0.0
      %2691 = vmatpush1.msra.mxu0 0.0
      %2692 = vmatprep.subr.mxu0 0.0
      %2693 = vmatpush1.msra.mxu0 0.0
      %2694 = vmatprep.subr.mxu0 0.0
      %2695 = vmatpush1.msra.mxu0 0.0
      %2696 = vmatprep.subr.mxu0 0.0
      %2697 = vmatpush1.msra.mxu0 0.0
      %2698 = vmatprep.subr.mxu0 0.0
      %2699 = vmatpush1.msra.mxu0 0.0
      %2700 = vmatprep.subr.mxu0 0.0
      %2701 = vmatpush1.msra.mxu0 0.0
      %2702 = vmatprep.subr.mxu0 0.0
      %2703 = vmatpush1.msra.mxu0 0.0
      %2704 = vmatprep.mubr.f32.mxu0 0.0
      %2705 = vmatmul.mubr.f32.gmra.mrb[0].mxu0 %v2408
      %v2706 = vpop.f32.mrb[0].mxu0
      %v2707 = vadd.f32 %v2636, %v2706
      %v2708 = vpop.f32.mrb[0].mxu0
      %v2709 = vadd.f32 %v2638, %v2708
      %2710 = vdwg.mxu0
      %v2711 = vtanh.pop %v2707
      %v2712 = vsub.f32 0.0, %v2709
      %v2713 = vmul.f32 %v2712, 1.442695
      %v2714 = vpow.pop %v2713
      %v2715 = vadd.f32 %v2714, 1.0
      %v2716 = vrcp.pop %v2715
      %v2717 = vmul.f32 1.0, %v2716
      %v2718 = vmul.f32 %v2711, %v2717
      %2719 = vst [vmem:[%s491] sm:$0x1] %v2718
      %s2720 = scalar_lea.vmem %s7, 256
      %v2721 = vld [vmem:[%s2720] sm:$0xff]
      %v2722 = vld [vmem:[%s2720 + $0x8] sm:$0xff]
      %v2723 = vld [vmem:[%s2720 + $0x10] sm:$0xff]
      %v2724 = vld [vmem:[%s2720 + $0x18] sm:$0xff]
      %v2725 = vld [vmem:[%s2720 + $0x20] sm:$0xff]
      %v2726 = vld [vmem:[%s2720 + $0x28] sm:$0xff]
      %v2727 = vld [vmem:[%s2720 + $0x30] sm:$0xff]
      %v2728 = vld [vmem:[%s2720 + $0x38] sm:$0xff]
      %v2729 = vld [vmem:[%s2720 + $0x40] sm:$0xff]
      %v2730 = vld [vmem:[%s2720 + $0x48] sm:$0xff]
      %v2731 = vld [vmem:[%s2720 + $0x50] sm:$0xff]
      %v2732 = vld [vmem:[%s2720 + $0x58] sm:$0xff]
      %v2733 = vld [vmem:[%s2720 + $0x60] sm:$0xff]
      %v2734 = vld [vmem:[%s2720 + $0x68] sm:$0xff]
      %v2735 = vld [vmem:[%s2720 + $0x70] sm:$0xff]
      %v2736 = vld [vmem:[%s2720 + $0x78] sm:$0xff]
      %s2737 = scalar_lea.vmem %s8, 2
      %v2738 = vld [vmem:[%s2737] sm:$0x1]
      %2739 = vmatprep.subr.mxu0 0.0
      %2740 = vmatpush1.msra.mxu0 %v2721
      %2741 = vmatprep.subr.mxu0 0.0
      %2742 = vmatpush1.msra.mxu0 %v2722
      %2743 = vmatprep.subr.mxu0 0.0
      %2744 = vmatpush1.msra.mxu0 %v2723
      %2745 = vmatprep.subr.mxu0 0.0
      %2746 = vmatpush1.msra.mxu0 %v2724
      %2747 = vmatprep.subr.mxu0 0.0
      %2748 = vmatpush1.msra.mxu0 %v2725
      %2749 = vmatprep.subr.mxu0 0.0
      %2750 = vmatpush1.msra.mxu0 %v2726
      %2751 = vmatprep.subr.mxu0 0.0
      %2752 = vmatpush1.msra.mxu0 %v2727
      %2753 = vmatprep.subr.mxu0 0.0
      %2754 = vmatpush1.msra.mxu0 %v2728
      %2755 = vmatprep.subr.mxu0 0.0
      %2756 = vmatpush1.msra.mxu0 %v2729
      %2757 = vmatprep.subr.mxu0 0.0
      %2758 = vmatpush1.msra.mxu0 %v2730
      %2759 = vmatprep.subr.mxu0 0.0
      %2760 = vmatpush1.msra.mxu0 %v2731
      %2761 = vmatprep.subr.mxu0 0.0
      %2762 = vmatpush1.msra.mxu0 %v2732
      %2763 = vmatprep.subr.mxu0 0.0
      %2764 = vmatpush1.msra.mxu0 %v2733
      %2765 = vmatprep.subr.mxu0 0.0
      %2766 = vmatpush1.msra.mxu0 %v2734
      %2767 = vmatprep.subr.mxu0 0.0
      %2768 = vmatpush1.msra.mxu0 %v2735
      %2769 = vmatprep.subr.mxu0 0.0
      %2770 = vmatpush1.msra.mxu0 %v2736
      %2771 = vmatprep.subr.mxu0 0.0
      %2772 = vmatpush1.msra.mxu0 0.0
      %2773 = vmatprep.subr.mxu0 0.0
      %2774 = vmatpush1.msra.mxu0 0.0
      %2775 = vmatprep.subr.mxu0 0.0
      %2776 = vmatpush1.msra.mxu0 0.0
      %2777 = vmatprep.subr.mxu0 0.0
      %2778 = vmatpush1.msra.mxu0 0.0
      %2779 = vmatprep.subr.mxu0 0.0
      %2780 = vmatpush1.msra.mxu0 0.0
      %2781 = vmatprep.subr.mxu0 0.0
      %2782 = vmatpush1.msra.mxu0 0.0
      %2783 = vmatprep.subr.mxu0 0.0
      %2784 = vmatpush1.msra.mxu0 0.0
      %2785 = vmatprep.subr.mxu0 0.0
      %2786 = vmatpush1.msra.mxu0 0.0
      %2787 = vmatprep.subr.mxu0 0.0
      %2788 = vmatpush1.msra.mxu0 0.0
      %2789 = vmatprep.subr.mxu0 0.0
      %2790 = vmatpush1.msra.mxu0 0.0
      %2791 = vmatprep.subr.mxu0 0.0
      %2792 = vmatpush1.msra.mxu0 0.0
      %2793 = vmatprep.subr.mxu0 0.0
      %2794 = vmatpush1.msra.mxu0 0.0
      %2795 = vmatprep.subr.mxu0 0.0
      %2796 = vmatpush1.msra.mxu0 0.0
      %2797 = vmatprep.subr.mxu0 0.0
      %2798 = vmatpush1.msra.mxu0 0.0
      %2799 = vmatprep.subr.mxu0 0.0
      %2800 = vmatpush1.msra.mxu0 0.0
      %2801 = vmatprep.subr.mxu0 0.0
      %2802 = vmatpush1.msra.mxu0 0.0
      %2803 = vmatprep.mubr.f32.mxu0 0.0
      %2804 = vmatmul.mubr.f32.gmra.mrb[0].mxu0 %v2718
      %v2805 = vpop.f32.mrb[0].mxu0
      %v2806 = vadd.f32 %v2738, %v2805
      %v2807 = vpop.f32.mrb[0].mxu0
      %2808 = vdwg.mxu0
      %v2809 = vld [vmem:[#allocation2 + $0x6] sm:$0x1]
      %v2810 = vadd.f32 %v2806, %v2809
      %vm2811 = vcmask 1040384
      %v2812 = vsel %vm2811, %v2810, 0.0
      %2813 = vadd.xlane.f32.xlu0 %v2812
      %v2814 = vpop.xlane.xlu0 %2813
      %v2815 = vadd.f32 %v2814, 0.0
      %v2816 = vmul.f32 %v2815, 0.0078125
      %v2817 = vsub.f32 %v2810, %v2816
      %v2818 = vmul.f32 %v2817, %v2817
      %v2819 = vsel %vm2811, %v2818, 0.0
      %2820 = vadd.xlane.f32.xlu0 %v2819
      %v2821 = vpop.xlane.xlu0 %2820
      %v2822 = vadd.f32 %v2821, 0.0
      %v2823 = vmul.f32 %v2822, 0.0078125
      %v2824 = vadd.f32 %v2823, 1e-05
      %v2825 = vrsqrt.pop %v2824
      %v2826 = vmul.f32 %v2817, %v2825
      %s2827 = scalar_lea.vmem %s9, 32
      %v2828 = vld [vmem:[%s2827] sm:$0xff]
      %v2829 = vmul.f32 %v2826, %v2828
      %s2830 = scalar_lea.vmem %s10, 32
      %v2831 = vld [vmem:[%s2830] sm:$0xff]
      %v2832 = vadd.f32 %v2829, %v2831
      %2833 = vst [vmem:[#allocation2] sm:$0x1] %v2832
      %2834 = vst [vmem:[%s494] sm:$0x1] %v2832
      %p2835 = scmp.lt.s32.totalorder %s26, 1
      %s2836 = scalar_select %p2835, %s26, 1
      %s2837 = smul.addr %s2836, 2
      %s2838 = smul.addr %s2837, 8
      %s2839 = scalar_lea.vmem %s11, %s2838
      %p2840 = scmp.lt.s32.totalorder %s26, 1
      %s2841 = scalar_select %p2840, %s26, 1
      %s2842 = smul.addr %s2841, 8
      %s2843 = scalar_lea.vmem %s12, %s2842
      %p2844 = scmp.lt.s32.totalorder %s26, 1
      %s2845 = scalar_select %p2844, %s26, 1
      %s2846 = scalar_lea.vmem %s13, %s2845
      %p2847 = scmp.lt.s32.totalorder %s26, 1
      %s2848 = scalar_select %p2847, %s26, 1
      %s2849 = scalar_lea.vmem %s14, %s2848
      // Predicated region
      $region65: #{_lambda_.4} parent=63 // pred_check
        %p2850 = pneg %p280
      $region66: #{_lambda_.4} parent=63 // pred_check_branch
        %2852 = sbr.rel (%p2850) target = $region68
      $region67: #{_lambda_.4} parent=63 // pred_region
        _
      $region68: #{_lambda_.4} parent=63 // pred_fallthru
        _
      // Predicated region
      $region69: #{_lambda_.4} parent=63 // pred_check
        %p2853 = pneg %p306
      $region70: #{_lambda_.4} parent=63 // pred_check_branch
        %2855 = sbr.rel (%p2853) target = $region72
      $region71: #{_lambda_.4} parent=63 // pred_region
        _
      $region72: #{_lambda_.4} parent=63 // pred_fallthru
        _
      // Predicated region
      $region73: #{_lambda_.4} parent=63 // pred_check
        %p2856 = pneg %p332
      $region74: #{_lambda_.4} parent=63 // pred_check_branch
        %2858 = sbr.rel (%p2856) target = $region76
      $region75: #{_lambda_.4} parent=63 // pred_region
        _
      $region76: #{_lambda_.4} parent=63 // pred_fallthru
        _
      // Predicated region
      $region77: #{_lambda_.4} parent=63 // pred_check
        %p2859 = pneg %p358
      $region78: #{_lambda_.4} parent=63 // pred_check_branch
        %2861 = sbr.rel (%p2859) target = $region80
      $region79: #{_lambda_.4} parent=63 // pred_region
        _
      $region80: #{_lambda_.4} parent=63 // pred_fallthru
        _
    $region64: #{_lambda_.4} parent=5 // pred_fallthru
      _
    %p2862 = scmp.le.s32.totalorder 2, %s21
    // Predicated region
    $region81: #{_lambda_.4} parent=5 // pred_check
      %p2863 = pneg %p2862
    $region82: #{_lambda_.4} parent=5 // pred_check_branch
      %2865 = sbr.rel (%p2863) target = $region84
    $region83: #{_lambda_.4} parent=5 // pred_region
      %s2866 = ssub.s32 %s21, 2
      // Predicated region
      $region85: #{_lambda_.4} parent=83 // pred_check
        %p2867 = pneg %p286
      $region86: #{_lambda_.4} parent=83 // pred_check_branch
        %2869 = sbr.rel (%p2867) target = $region88
      $region87: #{_lambda_.4} parent=83 // pred_region
        %p2870 = scmp.lt.s32.totalorder %s27, 1
        %s2871 = scalar_select %p2870, %s27, 1
        %s2872 = smul.addr %s2871, 2
        %s2873 = smul.addr %s2872, 8
        %s2874 = scalar_lea.vmem %s11, %s2873
      $region88: #{_lambda_.4} parent=83 // pred_fallthru
        _
      // Predicated region
      $region89: #{_lambda_.4} parent=83 // pred_check
        %p2875 = pneg %p312
      $region90: #{_lambda_.4} parent=83 // pred_check_branch
        %2877 = sbr.rel (%p2875) target = $region92
      $region91: #{_lambda_.4} parent=83 // pred_region
        %p2878 = scmp.lt.s32.totalorder %s27, 1
        %s2879 = scalar_select %p2878, %s27, 1
        %s2880 = smul.addr %s2879, 8
        %s2881 = scalar_lea.vmem %s12, %s2880
      $region92: #{_lambda_.4} parent=83 // pred_fallthru
        _
      // Predicated region
      $region93: #{_lambda_.4} parent=83 // pred_check
        %p2882 = pneg %p338
      $region94: #{_lambda_.4} parent=83 // pred_check_branch
        %2884 = sbr.rel (%p2882) target = $region96
      $region95: #{_lambda_.4} parent=83 // pred_region
        %p2885 = scmp.lt.s32.totalorder %s27, 1
        %s2886 = scalar_select %p2885, %s27, 1
        %s2887 = scalar_lea.vmem %s13, %s2886
      $region96: #{_lambda_.4} parent=83 // pred_fallthru
        _
      // Predicated region
      $region97: #{_lambda_.4} parent=83 // pred_check
        %p2888 = pneg %p364
      $region98: #{_lambda_.4} parent=83 // pred_check_branch
        %2890 = sbr.rel (%p2888) target = $region100
      $region99: #{_lambda_.4} parent=83 // pred_region
        %p2891 = scmp.lt.s32.totalorder %s27, 1
        %s2892 = scalar_select %p2891, %s27, 1
        %s2893 = scalar_lea.vmem %s14, %s2892
      $region100: #{_lambda_.4} parent=83 // pred_fallthru
        _
    $region84: #{_lambda_.4} parent=5 // pred_fallthru
      _
  $region6: #{_lambda_.4} parent=0 // loop_footer
    %s25 = sadd.s32 1, %s21
  $region7: #{_lambda_.4} parent=0 // loop_footer_branch
    %20 = sbr.rel target = $region3
  $region8: #{_lambda_.4} parent=0 // loop_exit
    _

</llo_original>
